<compile_context>
chip_gen: v7x
topology: tpu7x:2x2x1
jax: 0.10.0
libtpu: 0.0.40
codegen_flags: <defaults>
</compile_context>

<pallas_src>
import functools

import jax
import jax.numpy as jnp
from jax.experimental import pallas as pl
from jax.experimental.pallas import tpu as pltpu

Z_SIZE = 64
AGE_DIM = 100
GEN_DIM = 2
HID = 8 * Z_SIZE  # 512

SELU_ALPHA = 1.6732632423543772
SELU_SCALE = 1.0507009873554805


def _selu(x):
    # exp only on the non-positive branch (the positive branch is discarded).
    return SELU_SCALE * jnp.where(
        x > 0.0, x, SELU_ALPHA * (jnp.exp(jnp.minimum(x, 0.0)) - 1.0))


def _round_up(n, m):
    return ((n + m - 1) // m) * m


def modifier_kernel(x_ref, age_ref, gender_ref,
                    w1x_ref, w1a_ref, w1g_ref, b1_ref,
                    w2_ref, b2_ref, w3_ref, b3_ref,
                    w4_ref, b4_ref, w5_ref, b5_ref,
                    out_ref):
    """Fused 5-layer MLP on one batch tile; bf16 weights, f32 accumulation."""
    f32 = jnp.float32
    bf16 = jnp.bfloat16

    # ---- layer 1: concat([x, age, gender]) @ W1 as split contractions ----
    h = jnp.dot(x_ref[...].astype(bf16), w1x_ref[...], preferred_element_type=f32)
    h = h + jnp.dot(age_ref[...].astype(bf16), w1a_ref[...],
                    preferred_element_type=f32)
    g = gender_ref[...]                          # (TILE_B, 2) f32
    w1g = w1g_ref[...].astype(f32)               # (2, 512)
    h = h + g[:, 0:1] * w1g[0:1, :]              # rank-1 updates on the VPU
    h = h + g[:, 1:2] * w1g[1:2, :]
    h = _selu(h + b1_ref[...])

    # ---- layers 2-4: Linear(512,512) + SELU ----
    h = _selu(jnp.dot(h.astype(bf16), w2_ref[...],
                      preferred_element_type=f32) + b2_ref[...])
    h = _selu(jnp.dot(h.astype(bf16), w3_ref[...],
                      preferred_element_type=f32) + b3_ref[...])
    h = _selu(jnp.dot(h.astype(bf16), w4_ref[...],
                      preferred_element_type=f32) + b4_ref[...])

    # ---- layer 5: Linear(512,64) + Tanh (tanh goes to the EUP) ----
    h = jnp.dot(h.astype(bf16), w5_ref[...],
                preferred_element_type=f32) + b5_ref[...]
    out_ref[...] = jnp.tanh(h).astype(out_ref.dtype)


def init_params(key, z_size=Z_SIZE):
    """PyTorch-style init U(-1/sqrt(fan_in), 1/sqrt(fan_in)); weights cast to
    bf16, pre-transposed to [in, out], W1 split into x/age/gender slices."""
    dims = [(z_size + AGE_DIM + GEN_DIM, 8 * z_size),
            (8 * z_size, 8 * z_size),
            (8 * z_size, 8 * z_size),
            (8 * z_size, 8 * z_size),
            (8 * z_size, z_size)]
    ws, bs = [], []
    for fan_in, fan_out in dims:
        key, kw, kb = jax.random.split(key, 3)
        bound = 1.0 / jnp.sqrt(fan_in)
        ws.append(jax.random.uniform(kw, (fan_in, fan_out), jnp.float32, -bound, bound))
        bs.append(jax.random.uniform(kb, (1, fan_out), jnp.float32, -bound, bound))
    w1, w2, w3, w4, w5 = ws
    b1, b2, b3, b4, b5 = bs
    bf = jnp.bfloat16
    w1x = w1[:z_size].astype(bf)
    w1a = w1[z_size:z_size + AGE_DIM].astype(bf)
    w1g = w1[z_size + AGE_DIM:].astype(bf)
    return (w1x, w1a, w1g, b1,
            w2.astype(bf), b2, w3.astype(bf), b3,
            w4.astype(bf), b4, w5.astype(bf), b5)


@functools.partial(jax.jit, static_argnames=("tile_b",))
def modifier_forward(x, age, gender, params, tile_b=512):
    B = x.shape[0]
    tb = min(tile_b, _round_up(B, 8))      # sublane-aligned batch tile
    b_pad = _round_up(B, tb)
    if b_pad != B:
        padfn = lambda a: jnp.pad(a, ((0, b_pad - B), (0, 0)))
        x, age, gender = padfn(x), padfn(age), padfn(gender)

    grid = (b_pad // tb,)

    def batch_spec(d):
        return pl.BlockSpec((tb, d), lambda i: (i, 0))

    def const_spec(shape):
        return pl.BlockSpec(shape, lambda i: (0, 0))   # VMEM-resident across grid

    weight_specs = [const_spec(p.shape) for p in params]

    out = pl.pallas_call(
        modifier_kernel,
        out_shape=jax.ShapeDtypeStruct((b_pad, Z_SIZE), jnp.float32),
        grid=grid,
        in_specs=[batch_spec(Z_SIZE), batch_spec(AGE_DIM), batch_spec(GEN_DIM)]
                 + weight_specs,
        out_specs=batch_spec(Z_SIZE),
        compiler_params=pltpu.CompilerParams(
            dimension_semantics=("parallel",)),
    )(x, age, gender, *params)
    return out[:B]


def modifier_ref(x, age, gender, params):
    """Pure-JAX reference mirroring the kernel math (bf16 inputs, f32 accum)."""
    (w1x, w1a, w1g, b1, w2, b2, w3, b3, w4, b4, w5, b5) = params
    bf, f32 = jnp.bfloat16, jnp.float32
    h = (jnp.dot(x.astype(bf), w1x, preferred_element_type=f32)
         + jnp.dot(age.astype(bf), w1a, preferred_element_type=f32)
         + gender[:, 0:1] * w1g[0:1, :].astype(f32)
         + gender[:, 1:2] * w1g[1:2, :].astype(f32)
         + b1)
    h = _selu(h)
    for w, b in ((w2, b2), (w3, b3), (w4, b4)):
        h = _selu(jnp.dot(h.astype(bf), w, preferred_element_type=f32) + b)
    return jnp.tanh(jnp.dot(h.astype(bf), w5, preferred_element_type=f32) + b5)


if __name__ == "__main__":
    key = jax.random.PRNGKey(0)
    kp, kx, ka, kg = jax.random.split(key, 4)

    params = init_params(kp)

    def make_inputs(k0, k1, k2, B):
        x = jax.random.normal(k0, (B, Z_SIZE), jnp.float32)
        age = jax.nn.one_hot(jax.random.randint(k1, (B,), 0, AGE_DIM),
                             AGE_DIM, dtype=jnp.float32)
        gender = jax.nn.one_hot(jax.random.randint(k2, (B,), 0, GEN_DIM),
                                GEN_DIM, dtype=jnp.float32)
        return x, age, gender

    # Small batch: single grid step.
    x, age, gender = make_inputs(kx, ka, kg, 8)
    out = jax.block_until_ready(modifier_forward(x, age, gender, params))
    ref = modifier_ref(x, age, gender, params)
    assert out.shape == (8, Z_SIZE)
    assert jnp.allclose(out, ref, atol=2e-3, rtol=2e-3), "mismatch vs ref (B=8)"

    # Ragged batch: exercises the multi-step grid and host-side batch padding.
    x, age, gender = make_inputs(kg, kx, ka, 37)
    out = jax.block_until_ready(modifier_forward(x, age, gender, params, tile_b=16))
    ref = modifier_ref(x, age, gender, params)
    assert out.shape == (37, Z_SIZE)
    assert jnp.allclose(out, ref, atol=2e-3, rtol=2e-3), "mismatch vs ref (B=37)"

    print("KERNEL_OK")
</pallas_src>

<mosaic_0001>
module attributes {stable_mosaic.version = 11 : i64} {
  func.func @modifier_kernel(%arg0: i32, %arg1: memref<8x64xf32, #tpu.memory_space<vmem>>, %arg2: memref<8x100xf32, #tpu.memory_space<vmem>>, %arg3: memref<8x2xf32, #tpu.memory_space<vmem>>, %arg4: memref<64x512xbf16, #tpu.memory_space<vmem>>, %arg5: memref<100x512xbf16, #tpu.memory_space<vmem>>, %arg6: memref<2x512xbf16, #tpu.memory_space<vmem>>, %arg7: memref<1x512xf32, #tpu.memory_space<vmem>>, %arg8: memref<512x512xbf16, #tpu.memory_space<vmem>>, %arg9: memref<1x512xf32, #tpu.memory_space<vmem>>, %arg10: memref<512x512xbf16, #tpu.memory_space<vmem>>, %arg11: memref<1x512xf32, #tpu.memory_space<vmem>>, %arg12: memref<512x512xbf16, #tpu.memory_space<vmem>>, %arg13: memref<1x512xf32, #tpu.memory_space<vmem>>, %arg14: memref<512x64xbf16, #tpu.memory_space<vmem>>, %arg15: memref<1x64xf32, #tpu.memory_space<vmem>>, %arg16: memref<8x64xf32, #tpu.memory_space<vmem>>) attributes {dimension_semantics = [#tpu.dimension_semantics<parallel>], iteration_bounds = array<i64: 1>, scalar_prefetch = 0 : i64, scratch_operands = 0 : i64, tpu.core_type = #tpu.core_type<tc>, window_params = [{transform_indices = @transform_0, window_bounds = array<i64: 8, 64>}, {transform_indices = @transform_1, window_bounds = array<i64: 8, 100>}, {transform_indices = @transform_2, window_bounds = array<i64: 8, 2>}, {pipeline_mode = #tpu.pipeline_mode<synchronous>, transform_indices = @transform_3, window_bounds = array<i64: 64, 512>}, {pipeline_mode = #tpu.pipeline_mode<synchronous>, transform_indices = @transform_4, window_bounds = array<i64: 100, 512>}, {pipeline_mode = #tpu.pipeline_mode<synchronous>, transform_indices = @transform_5, window_bounds = array<i64: 2, 512>}, {pipeline_mode = #tpu.pipeline_mode<synchronous>, transform_indices = @transform_6, window_bounds = array<i64: 1, 512>}, {pipeline_mode = #tpu.pipeline_mode<synchronous>, transform_indices = @transform_7, window_bounds = array<i64: 512, 512>}, {pipeline_mode = #tpu.pipeline_mode<synchronous>, transform_indices = @transform_8, window_bounds = array<i64: 1, 512>}, {pipeline_mode = #tpu.pipeline_mode<synchronous>, transform_indices = @transform_9, window_bounds = array<i64: 512, 512>}, {pipeline_mode = #tpu.pipeline_mode<synchronous>, transform_indices = @transform_10, window_bounds = array<i64: 1, 512>}, {pipeline_mode = #tpu.pipeline_mode<synchronous>, transform_indices = @transform_11, window_bounds = array<i64: 512, 512>}, {pipeline_mode = #tpu.pipeline_mode<synchronous>, transform_indices = @transform_12, window_bounds = array<i64: 1, 512>}, {pipeline_mode = #tpu.pipeline_mode<synchronous>, transform_indices = @transform_13, window_bounds = array<i64: 512, 64>}, {pipeline_mode = #tpu.pipeline_mode<synchronous>, transform_indices = @transform_14, window_bounds = array<i64: 1, 64>}, {transform_indices = @transform_15, window_bounds = array<i64: 8, 64>}]} {
    %c0 = arith.constant 0 : index
    %c0_0 = arith.constant 0 : index
    %0 = vector.load %arg1[%c0, %c0_0] : memref<8x64xf32, #tpu.memory_space<vmem>>, vector<8x64xf32>
    %1 = arith.truncf %0 : vector<8x64xf32> to vector<8x64xbf16>
    %c0_1 = arith.constant 0 : index
    %c0_2 = arith.constant 0 : index
    %2 = vector.load %arg4[%c0_1, %c0_2] : memref<64x512xbf16, #tpu.memory_space<vmem>>, vector<64x512xbf16>
    %cst = arith.constant dense<0.000000e+00> : vector<8x512xf32>
    %3 = tpu.matmul %1, %2, %cst {dimension_numbers = #tpu.dot_dimension_numbers<[1], [0], [0], [1], [0, 0, 1, 1], [], []>} : vector<8x64xbf16>, vector<64x512xbf16>, vector<8x512xf32> -> vector<8x512xf32>
    %c0_3 = arith.constant 0 : index
    %c0_4 = arith.constant 0 : index
    %4 = vector.load %arg2[%c0_3, %c0_4] : memref<8x100xf32, #tpu.memory_space<vmem>>, vector<8x100xf32>
    %5 = arith.truncf %4 : vector<8x100xf32> to vector<8x100xbf16>
    %c0_5 = arith.constant 0 : index
    %c0_6 = arith.constant 0 : index
    %6 = vector.load %arg5[%c0_5, %c0_6] : memref<100x512xbf16, #tpu.memory_space<vmem>>, vector<100x512xbf16>
    %cst_7 = arith.constant dense<0.000000e+00> : vector<8x512xf32>
    %7 = tpu.matmul %5, %6, %cst_7 {dimension_numbers = #tpu.dot_dimension_numbers<[1], [0], [0], [1], [0, 0, 1, 1], [], []>} : vector<8x100xbf16>, vector<100x512xbf16>, vector<8x512xf32> -> vector<8x512xf32>
    %8 = arith.addf %3, %7 : vector<8x512xf32>
    %c0_8 = arith.constant 0 : index
    %c0_9 = arith.constant 0 : index
    %9 = vector.load %arg3[%c0_8, %c0_9] : memref<8x2xf32, #tpu.memory_space<vmem>>, vector<8x2xf32>
    %c0_10 = arith.constant 0 : index
    %c0_11 = arith.constant 0 : index
    %10 = vector.load %arg6[%c0_10, %c0_11] : memref<2x512xbf16, #tpu.memory_space<vmem>>, vector<2x512xbf16>
    %11 = arith.extf %10 : vector<2x512xbf16> to vector<2x512xf32>
    %12 = vector.extract_strided_slice %9 {offsets = [0, 0], sizes = [8, 1], strides = [1, 1]} : vector<8x2xf32> to vector<8x1xf32>
    %13 = vector.extract_strided_slice %11 {offsets = [0, 0], sizes = [1, 512], strides = [1, 1]} : vector<2x512xf32> to vector<1x512xf32>
    %14 = vector.broadcast %12 : vector<8x1xf32> to vector<8x512xf32>
    %15 = vector.broadcast %13 : vector<1x512xf32> to vector<8x512xf32>
    %16 = arith.mulf %14, %15 : vector<8x512xf32>
    %17 = arith.addf %8, %16 : vector<8x512xf32>
    %18 = vector.extract_strided_slice %9 {offsets = [0, 1], sizes = [8, 1], strides = [1, 1]} : vector<8x2xf32> to vector<8x1xf32>
    %19 = vector.extract_strided_slice %11 {offsets = [1, 0], sizes = [1, 512], strides = [1, 1]} : vector<2x512xf32> to vector<1x512xf32>
    %20 = vector.broadcast %18 : vector<8x1xf32> to vector<8x512xf32>
    %21 = vector.broadcast %19 : vector<1x512xf32> to vector<8x512xf32>
    %22 = arith.mulf %20, %21 : vector<8x512xf32>
    %23 = arith.addf %17, %22 : vector<8x512xf32>
    %c0_12 = arith.constant 0 : index
    %c0_13 = arith.constant 0 : index
    %24 = vector.load %arg7[%c0_12, %c0_13] : memref<1x512xf32, #tpu.memory_space<vmem>>, vector<1x512xf32>
    %25 = vector.broadcast %24 : vector<1x512xf32> to vector<8x512xf32>
    %26 = arith.addf %23, %25 : vector<8x512xf32>
    %cst_14 = arith.constant 0.000000e+00 : f32
    %27 = vector.broadcast %cst_14 : f32 to vector<8x512xf32>
    %28 = arith.cmpf ogt, %26, %27 : vector<8x512xf32>
    %cst_15 = arith.constant 0.000000e+00 : f32
    %29 = vector.broadcast %cst_15 : f32 to vector<8x512xf32>
    %30 = arith.minimumf %26, %29 : vector<8x512xf32>
    %31 = math.exp %30 : vector<8x512xf32>
    %cst_16 = arith.constant 1.000000e+00 : f32
    %32 = vector.broadcast %cst_16 : f32 to vector<8x512xf32>
    %33 = arith.subf %31, %32 : vector<8x512xf32>
    %cst_17 = arith.constant 1.67326319 : f32
    %34 = vector.broadcast %cst_17 : f32 to vector<8x512xf32>
    %35 = arith.mulf %34, %33 : vector<8x512xf32>
    %36 = arith.select %28, %26, %35 : vector<8x512xi1>, vector<8x512xf32>
    %cst_18 = arith.constant 1.05070102 : f32
    %37 = vector.broadcast %cst_18 : f32 to vector<8x512xf32>
    %38 = arith.mulf %37, %36 : vector<8x512xf32>
    %39 = arith.truncf %38 : vector<8x512xf32> to vector<8x512xbf16>
    %c0_19 = arith.constant 0 : index
    %c0_20 = arith.constant 0 : index
    %40 = vector.load %arg8[%c0_19, %c0_20] : memref<512x512xbf16, #tpu.memory_space<vmem>>, vector<512x512xbf16>
    %cst_21 = arith.constant dense<0.000000e+00> : vector<8x512xf32>
    %41 = tpu.matmul %39, %40, %cst_21 {dimension_numbers = #tpu.dot_dimension_numbers<[1], [0], [0], [1], [0, 0, 1, 1], [], []>} : vector<8x512xbf16>, vector<512x512xbf16>, vector<8x512xf32> -> vector<8x512xf32>
    %c0_22 = arith.constant 0 : index
    %c0_23 = arith.constant 0 : index
    %42 = vector.load %arg9[%c0_22, %c0_23] : memref<1x512xf32, #tpu.memory_space<vmem>>, vector<1x512xf32>
    %43 = vector.broadcast %42 : vector<1x512xf32> to vector<8x512xf32>
    %44 = arith.addf %41, %43 : vector<8x512xf32>
    %cst_24 = arith.constant 0.000000e+00 : f32
    %45 = vector.broadcast %cst_24 : f32 to vector<8x512xf32>
    %46 = arith.cmpf ogt, %44, %45 : vector<8x512xf32>
    %cst_25 = arith.constant 0.000000e+00 : f32
    %47 = vector.broadcast %cst_25 : f32 to vector<8x512xf32>
    %48 = arith.minimumf %44, %47 : vector<8x512xf32>
    %49 = math.exp %48 : vector<8x512xf32>
    %cst_26 = arith.constant 1.000000e+00 : f32
    %50 = vector.broadcast %cst_26 : f32 to vector<8x512xf32>
    %51 = arith.subf %49, %50 : vector<8x512xf32>
    %cst_27 = arith.constant 1.67326319 : f32
    %52 = vector.broadcast %cst_27 : f32 to vector<8x512xf32>
    %53 = arith.mulf %52, %51 : vector<8x512xf32>
    %54 = arith.select %46, %44, %53 : vector<8x512xi1>, vector<8x512xf32>
    %cst_28 = arith.constant 1.05070102 : f32
    %55 = vector.broadcast %cst_28 : f32 to vector<8x512xf32>
    %56 = arith.mulf %55, %54 : vector<8x512xf32>
    %57 = arith.truncf %56 : vector<8x512xf32> to vector<8x512xbf16>
    %c0_29 = arith.constant 0 : index
    %c0_30 = arith.constant 0 : index
    %58 = vector.load %arg10[%c0_29, %c0_30] : memref<512x512xbf16, #tpu.memory_space<vmem>>, vector<512x512xbf16>
    %cst_31 = arith.constant dense<0.000000e+00> : vector<8x512xf32>
    %59 = tpu.matmul %57, %58, %cst_31 {dimension_numbers = #tpu.dot_dimension_numbers<[1], [0], [0], [1], [0, 0, 1, 1], [], []>} : vector<8x512xbf16>, vector<512x512xbf16>, vector<8x512xf32> -> vector<8x512xf32>
    %c0_32 = arith.constant 0 : index
    %c0_33 = arith.constant 0 : index
    %60 = vector.load %arg11[%c0_32, %c0_33] : memref<1x512xf32, #tpu.memory_space<vmem>>, vector<1x512xf32>
    %61 = vector.broadcast %60 : vector<1x512xf32> to vector<8x512xf32>
    %62 = arith.addf %59, %61 : vector<8x512xf32>
    %cst_34 = arith.constant 0.000000e+00 : f32
    %63 = vector.broadcast %cst_34 : f32 to vector<8x512xf32>
    %64 = arith.cmpf ogt, %62, %63 : vector<8x512xf32>
    %cst_35 = arith.constant 0.000000e+00 : f32
    %65 = vector.broadcast %cst_35 : f32 to vector<8x512xf32>
    %66 = arith.minimumf %62, %65 : vector<8x512xf32>
    %67 = math.exp %66 : vector<8x512xf32>
    %cst_36 = arith.constant 1.000000e+00 : f32
    %68 = vector.broadcast %cst_36 : f32 to vector<8x512xf32>
    %69 = arith.subf %67, %68 : vector<8x512xf32>
    %cst_37 = arith.constant 1.67326319 : f32
    %70 = vector.broadcast %cst_37 : f32 to vector<8x512xf32>
    %71 = arith.mulf %70, %69 : vector<8x512xf32>
    %72 = arith.select %64, %62, %71 : vector<8x512xi1>, vector<8x512xf32>
    %cst_38 = arith.constant 1.05070102 : f32
    %73 = vector.broadcast %cst_38 : f32 to vector<8x512xf32>
    %74 = arith.mulf %73, %72 : vector<8x512xf32>
    %75 = arith.truncf %74 : vector<8x512xf32> to vector<8x512xbf16>
    %c0_39 = arith.constant 0 : index
    %c0_40 = arith.constant 0 : index
    %76 = vector.load %arg12[%c0_39, %c0_40] : memref<512x512xbf16, #tpu.memory_space<vmem>>, vector<512x512xbf16>
    %cst_41 = arith.constant dense<0.000000e+00> : vector<8x512xf32>
    %77 = tpu.matmul %75, %76, %cst_41 {dimension_numbers = #tpu.dot_dimension_numbers<[1], [0], [0], [1], [0, 0, 1, 1], [], []>} : vector<8x512xbf16>, vector<512x512xbf16>, vector<8x512xf32> -> vector<8x512xf32>
    %c0_42 = arith.constant 0 : index
    %c0_43 = arith.constant 0 : index
    %78 = vector.load %arg13[%c0_42, %c0_43] : memref<1x512xf32, #tpu.memory_space<vmem>>, vector<1x512xf32>
    %79 = vector.broadcast %78 : vector<1x512xf32> to vector<8x512xf32>
    %80 = arith.addf %77, %79 : vector<8x512xf32>
    %cst_44 = arith.constant 0.000000e+00 : f32
    %81 = vector.broadcast %cst_44 : f32 to vector<8x512xf32>
    %82 = arith.cmpf ogt, %80, %81 : vector<8x512xf32>
    %cst_45 = arith.constant 0.000000e+00 : f32
    %83 = vector.broadcast %cst_45 : f32 to vector<8x512xf32>
    %84 = arith.minimumf %80, %83 : vector<8x512xf32>
    %85 = math.exp %84 : vector<8x512xf32>
    %cst_46 = arith.constant 1.000000e+00 : f32
    %86 = vector.broadcast %cst_46 : f32 to vector<8x512xf32>
    %87 = arith.subf %85, %86 : vector<8x512xf32>
    %cst_47 = arith.constant 1.67326319 : f32
    %88 = vector.broadcast %cst_47 : f32 to vector<8x512xf32>
    %89 = arith.mulf %88, %87 : vector<8x512xf32>
    %90 = arith.select %82, %80, %89 : vector<8x512xi1>, vector<8x512xf32>
    %cst_48 = arith.constant 1.05070102 : f32
    %91 = vector.broadcast %cst_48 : f32 to vector<8x512xf32>
    %92 = arith.mulf %91, %90 : vector<8x512xf32>
    %93 = arith.truncf %92 : vector<8x512xf32> to vector<8x512xbf16>
    %c0_49 = arith.constant 0 : index
    %c0_50 = arith.constant 0 : index
    %94 = vector.load %arg14[%c0_49, %c0_50] : memref<512x64xbf16, #tpu.memory_space<vmem>>, vector<512x64xbf16>
    %cst_51 = arith.constant dense<0.000000e+00> : vector<8x64xf32>
    %95 = tpu.matmul %93, %94, %cst_51 {dimension_numbers = #tpu.dot_dimension_numbers<[1], [0], [0], [1], [0, 0, 1, 1], [], []>} : vector<8x512xbf16>, vector<512x64xbf16>, vector<8x64xf32> -> vector<8x64xf32>
    %c0_52 = arith.constant 0 : index
    %c0_53 = arith.constant 0 : index
    %96 = vector.load %arg15[%c0_52, %c0_53] : memref<1x64xf32, #tpu.memory_space<vmem>>, vector<1x64xf32>
    %97 = vector.broadcast %96 : vector<1x64xf32> to vector<8x64xf32>
    %98 = arith.addf %95, %97 : vector<8x64xf32>
    %99 = math.tanh %98 : vector<8x64xf32>
    %c0_54 = arith.constant 0 : index
    %c0_55 = arith.constant 0 : index
    %100 = vector.load %arg16[%c0_54, %c0_55] : memref<8x64xf32, #tpu.memory_space<vmem>>, vector<8x64xf32>
    tpu.vector_store %arg16[%c0_54, %c0_55], %99 {strides = array<i32>} : memref<8x64xf32, #tpu.memory_space<vmem>>, vector<8x64xf32>,
    return
  }
  func.func @transform_0(%arg0: i32) -> (i32, i32) {
    %c0_i32 = arith.constant 0 : i32
    %c0_i32_0 = arith.constant 0 : i32
    return %arg0, %c0_i32 : i32, i32
  }
  func.func @transform_1(%arg0: i32) -> (i32, i32) {
    %c0_i32 = arith.constant 0 : i32
    %c0_i32_0 = arith.constant 0 : i32
    return %arg0, %c0_i32 : i32, i32
  }
  func.func @transform_2(%arg0: i32) -> (i32, i32) {
    %c0_i32 = arith.constant 0 : i32
    %c0_i32_0 = arith.constant 0 : i32
    return %arg0, %c0_i32 : i32, i32
  }
  func.func @transform_3(%arg0: i32) -> (i32, i32) {
    %c0_i32 = arith.constant 0 : i32
    %c0_i32_0 = arith.constant 0 : i32
    %c0_i32_1 = arith.constant 0 : i32
    return %c0_i32, %c0_i32_0 : i32, i32
  }
  func.func @transform_4(%arg0: i32) -> (i32, i32) {
    %c0_i32 = arith.constant 0 : i32
    %c0_i32_0 = arith.constant 0 : i32
    %c0_i32_1 = arith.constant 0 : i32
    return %c0_i32, %c0_i32_0 : i32, i32
  }
  func.func @transform_5(%arg0: i32) -> (i32, i32) {
    %c0_i32 = arith.constant 0 : i32
    %c0_i32_0 = arith.constant 0 : i32
    %c0_i32_1 = arith.constant 0 : i32
    return %c0_i32, %c0_i32_0 : i32, i32
  }
  func.func @transform_6(%arg0: i32) -> (i32, i32) {
    %c0_i32 = arith.constant 0 : i32
    %c0_i32_0 = arith.constant 0 : i32
    %c0_i32_1 = arith.constant 0 : i32
    return %c0_i32, %c0_i32_0 : i32, i32
  }
  func.func @transform_7(%arg0: i32) -> (i32, i32) {
    %c0_i32 = arith.constant 0 : i32
    %c0_i32_0 = arith.constant 0 : i32
    %c0_i32_1 = arith.constant 0 : i32
    return %c0_i32, %c0_i32_0 : i32, i32
  }
  func.func @transform_8(%arg0: i32) -> (i32, i32) {
    %c0_i32 = arith.constant 0 : i32
    %c0_i32_0 = arith.constant 0 : i32
    %c0_i32_1 = arith.constant 0 : i32
    return %c0_i32, %c0_i32_0 : i32, i32
  }
  func.func @transform_9(%arg0: i32) -> (i32, i32) {
    %c0_i32 = arith.constant 0 : i32
    %c0_i32_0 = arith.constant 0 : i32
    %c0_i32_1 = arith.constant 0 : i32
    return %c0_i32, %c0_i32_0 : i32, i32
  }
  func.func @transform_10(%arg0: i32) -> (i32, i32) {
    %c0_i32 = arith.constant 0 : i32
    %c0_i32_0 = arith.constant 0 : i32
    %c0_i32_1 = arith.constant 0 : i32
    return %c0_i32, %c0_i32_0 : i32, i32
  }
  func.func @transform_11(%arg0: i32) -> (i32, i32) {
    %c0_i32 = arith.constant 0 : i32
    %c0_i32_0 = arith.constant 0 : i32
    %c0_i32_1 = arith.constant 0 : i32
    return %c0_i32, %c0_i32_0 : i32, i32
  }
  func.func @transform_12(%arg0: i32) -> (i32, i32) {
    %c0_i32 = arith.constant 0 : i32
    %c0_i32_0 = arith.constant 0 : i32
    %c0_i32_1 = arith.constant 0 : i32
    return %c0_i32, %c0_i32_0 : i32, i32
  }
  func.func @transform_13(%arg0: i32) -> (i32, i32) {
    %c0_i32 = arith.constant 0 : i32
    %c0_i32_0 = arith.constant 0 : i32
    %c0_i32_1 = arith.constant 0 : i32
    return %c0_i32, %c0_i32_0 : i32, i32
  }
  func.func @transform_14(%arg0: i32) -> (i32, i32) {
    %c0_i32 = arith.constant 0 : i32
    %c0_i32_0 = arith.constant 0 : i32
    %c0_i32_1 = arith.constant 0 : i32
    return %c0_i32, %c0_i32_0 : i32, i32
  }
  func.func @transform_15(%arg0: i32) -> (i32, i32) {
    %c0_i32 = arith.constant 0 : i32
    %c0_i32_0 = arith.constant 0 : i32
    return %arg0, %c0_i32 : i32, i32
  }
}

</mosaic_0001>

<llo_original>
// kernel: modifier_forward.1
$region0: #{modifier_forward.1}
  #allocation0 [shape = 'u32[]', space=smem, size = 0x4, offset = 0x4, fixed_abs, tag = 'smem constant byte address 0x4 - core index']
  #allocation1 [shape = 'u32[144,128]{1,0:T(1,128)}', space=vmem, size = 0x12000, scoped, tag = 'internal scratch']
  %s0 = inlined_call_operand.vmem [shape: f32[8,64], index: 0, kind: input, shape index: {}]
  %s1 = inlined_call_operand.vmem [shape: f32[8,100], index: 1, kind: input, shape index: {}]
  %s2 = inlined_call_operand.vmem [shape: f32[8,2], index: 2, kind: input, shape index: {}]
  %s3 = inlined_call_operand.vmem [shape: bf16[64,512], index: 3, kind: input, shape index: {}]
  %s4 = inlined_call_operand.vmem [shape: bf16[100,512], index: 4, kind: input, shape index: {}]
  %s5 = inlined_call_operand.vmem [shape: bf16[2,512], index: 5, kind: input, shape index: {}]
  %s6 = inlined_call_operand.vmem [shape: f32[1,512], index: 6, kind: input, shape index: {}]
  %s7 = inlined_call_operand.hbm [shape: bf16[512,512], index: 7, kind: input, shape index: {}]
  %s8 = inlined_call_operand.vmem [shape: f32[1,512], index: 8, kind: input, shape index: {}]
  %s9 = inlined_call_operand.hbm [shape: bf16[512,512], index: 9, kind: input, shape index: {}]
  %s10 = inlined_call_operand.vmem [shape: f32[1,512], index: 10, kind: input, shape index: {}]
  %s11 = inlined_call_operand.hbm [shape: bf16[512,512], index: 11, kind: input, shape index: {}]
  %s12 = inlined_call_operand.vmem [shape: f32[1,512], index: 12, kind: input, shape index: {}]
  %s13 = inlined_call_operand.vmem [shape: bf16[512,64], index: 13, kind: input, shape index: {}]
  %s14 = inlined_call_operand.vmem [shape: f32[1,64], index: 14, kind: input, shape index: {}]
  %s15 = inlined_call_operand.hbm [shape: f32[8,64], index: 15, kind: output, shape index: {}]
  %s16 = sld [smem:[#allocation0]]
  $region82: #{modifier_forward.1} parent=0
    _
  %s18 = ssub.s32 1, %s16
  %s19 = scalar_select 0, %s18, %s16
  $region1: #{modifier_forward.1} parent=0
    #allocation2 [shape = 'u8[524288]{0}', space=vmem, size = 0x80000, scoped, tag = 'input window, operand 7, single buffered']
    #allocation3 [shape = 's32[1]{0}', space=sflag, size = 0x4, scoped, tag = 'scoped memory for modifier_forward.1']
    #allocation4 [shape = 's32[1]{0}', space=sflag, size = 0x4, scoped, tag = 'scoped memory for modifier_forward.1']
    #allocation5 [shape = 'u8[524288]{0}', space=vmem, size = 0x80000, scoped, tag = 'input window, operand 9, single buffered']
    #allocation6 [shape = 's32[1]{0}', space=sflag, size = 0x4, scoped, tag = 'scoped memory for modifier_forward.1']
    #allocation7 [shape = 'u8[524288]{0}', space=vmem, size = 0x80000, scoped, tag = 'input window, operand 11, single buffered']
    #allocation8 [shape = 'u8[4096]{0}', space=vmem, size = 0x1000, scoped, tag = 'output window, operand 0, single buffered']
    %20 = vsyncpa [#allocation3], 0
    %21 = vsyncpa [#allocation6], 0
    %22 = vsyncpa [#allocation4], 0
    // Predicated region
    $region2: #{modifier_forward.1} parent=1 // pred_check
      _
    $region3: #{modifier_forward.1} parent=1 // pred_check_branch
      %24 = sbr.rel (0) target = $region5
    $region4: #{modifier_forward.1} parent=1 // pred_region
      _
    $region5: #{modifier_forward.1} parent=1 // pred_fallthru
      _
    // Predicated region
    $region6: #{modifier_forward.1} parent=1 // pred_check
      _
    $region7: #{modifier_forward.1} parent=1 // pred_check_branch
      %26 = sbr.rel (0) target = $region9
    $region8: #{modifier_forward.1} parent=1 // pred_region
      _
    $region9: #{modifier_forward.1} parent=1 // pred_fallthru
      _
    // Predicated region
    $region10: #{modifier_forward.1} parent=1 // pred_check
      _
    $region11: #{modifier_forward.1} parent=1 // pred_check_branch
      %28 = sbr.rel (0) target = $region13
    $region12: #{modifier_forward.1} parent=1 // pred_region
      _
    $region13: #{modifier_forward.1} parent=1 // pred_fallthru
      _
    // Predicated region
    $region14: #{modifier_forward.1} parent=1 // pred_check
      _
    $region15: #{modifier_forward.1} parent=1 // pred_check_branch
      %30 = sbr.rel (0) target = $region17
    $region16: #{modifier_forward.1} parent=1 // pred_region
      _
    $region17: #{modifier_forward.1} parent=1 // pred_fallthru
      _
    // Predicated region
    $region18: #{modifier_forward.1} parent=1 // pred_check
      _
    $region19: #{modifier_forward.1} parent=1 // pred_check_branch
      %32 = sbr.rel (0) target = $region21
    $region20: #{modifier_forward.1} parent=1 // pred_region
      _
    $region21: #{modifier_forward.1} parent=1 // pred_fallthru
      _
    // Predicated region
    $region22: #{modifier_forward.1} parent=1 // pred_check
      _
    $region23: #{modifier_forward.1} parent=1 // pred_check_branch
      %34 = sbr.rel (0) target = $region25
    $region24: #{modifier_forward.1} parent=1 // pred_region
      _
    $region25: #{modifier_forward.1} parent=1 // pred_fallthru
      _
    // Predicated region
    $region26: #{modifier_forward.1} parent=1 // pred_check
      _
    $region27: #{modifier_forward.1} parent=1 // pred_check_branch
      %36 = sbr.rel (0) target = $region29
    $region28: #{modifier_forward.1} parent=1 // pred_region
      _
    $region29: #{modifier_forward.1} parent=1 // pred_fallthru
      _
    // Predicated region
    $region30: #{modifier_forward.1} parent=1 // pred_check
      _
    $region31: #{modifier_forward.1} parent=1 // pred_check_branch
      %38 = sbr.rel (0) target = $region33
    $region32: #{modifier_forward.1} parent=1 // pred_region
      %s40 = ssub.s32 16384, 16384
      %41 = vsyncadd [#allocation3], %s40
      %s42 = sshll.u32 [#allocation2], 4
      %s43 = int_to_ptr.vmem [resolvable:$true] %s42
      %48 = dma.hbm_to_vmem [thread:$0]  %s7, 16384, %s43, [#allocation3], 256, 256, 16
    $region33: #{modifier_forward.1} parent=1 // pred_fallthru
      _
    // Predicated region
    $region34: #{modifier_forward.1} parent=1 // pred_check
      _
    $region35: #{modifier_forward.1} parent=1 // pred_check_branch
      %50 = sbr.rel (0) target = $region37
    $region36: #{modifier_forward.1} parent=1 // pred_region
      _
    $region37: #{modifier_forward.1} parent=1 // pred_fallthru
      _
    // Predicated region
    $region38: #{modifier_forward.1} parent=1 // pred_check
      _
    $region39: #{modifier_forward.1} parent=1 // pred_check_branch
      %52 = sbr.rel (0) target = $region41
    $region40: #{modifier_forward.1} parent=1 // pred_region
      %s54 = ssub.s32 16384, 16384
      %55 = vsyncadd [#allocation6], %s54
      %s56 = sshll.u32 [#allocation5], 4
      %s57 = int_to_ptr.vmem [resolvable:$true] %s56
      %62 = dma.hbm_to_vmem [thread:$0]  %s9, 16384, %s57, [#allocation6], 256, 256, 16
    $region41: #{modifier_forward.1} parent=1 // pred_fallthru
      _
    // Predicated region
    $region42: #{modifier_forward.1} parent=1 // pred_check
      _
    $region43: #{modifier_forward.1} parent=1 // pred_check_branch
      %64 = sbr.rel (0) target = $region45
    $region44: #{modifier_forward.1} parent=1 // pred_region
      _
    $region45: #{modifier_forward.1} parent=1 // pred_fallthru
      _
    // Predicated region
    $region46: #{modifier_forward.1} parent=1 // pred_check
      _
    $region47: #{modifier_forward.1} parent=1 // pred_check_branch
      %66 = sbr.rel (0) target = $region49
    $region48: #{modifier_forward.1} parent=1 // pred_region
      %s68 = ssub.s32 16384, 16384
      %69 = vsyncadd [#allocation6], %s68
      %s70 = sshll.u32 [#allocation7], 4
      %s71 = int_to_ptr.vmem [resolvable:$true] %s70
      %76 = dma.hbm_to_vmem [thread:$0]  %s11, 16384, %s71, [#allocation6], 256, 256, 16
    $region49: #{modifier_forward.1} parent=1 // pred_fallthru
      _
    // Predicated region
    $region50: #{modifier_forward.1} parent=1 // pred_check
      _
    $region51: #{modifier_forward.1} parent=1 // pred_check_branch
      %78 = sbr.rel (0) target = $region53
    $region52: #{modifier_forward.1} parent=1 // pred_region
      _
    $region53: #{modifier_forward.1} parent=1 // pred_fallthru
      _
    // Predicated region
    $region54: #{modifier_forward.1} parent=1 // pred_check
      _
    $region55: #{modifier_forward.1} parent=1 // pred_check_branch
      %80 = sbr.rel (0) target = $region57
    $region56: #{modifier_forward.1} parent=1 // pred_region
      _
    $region57: #{modifier_forward.1} parent=1 // pred_fallthru
      _
    // Predicated region
    $region58: #{modifier_forward.1} parent=1 // pred_check
      _
    $region59: #{modifier_forward.1} parent=1 // pred_check_branch
      %82 = sbr.rel (0) target = $region61
    $region60: #{modifier_forward.1} parent=1 // pred_region
      _
    $region61: #{modifier_forward.1} parent=1 // pred_fallthru
      _
    // Predicated region
    $region62: #{modifier_forward.1} parent=1 // pred_check
      _
    $region63: #{modifier_forward.1} parent=1 // pred_check_branch
      %84 = sbr.rel (0) target = $region65
    $region64: #{modifier_forward.1} parent=1 // pred_region
      %85 = dma.done [#allocation3], 16384
    $region65: #{modifier_forward.1} parent=1 // pred_fallthru
      _
    // Predicated region
    $region66: #{modifier_forward.1} parent=1 // pred_check
      _
    $region67: #{modifier_forward.1} parent=1 // pred_check_branch
      %87 = sbr.rel (0) target = $region69
    $region68: #{modifier_forward.1} parent=1 // pred_region
      %88 = dma.done [#allocation6], 16384
    $region69: #{modifier_forward.1} parent=1 // pred_fallthru
      _
    // Predicated region
    $region70: #{modifier_forward.1} parent=1 // pred_check
      _
    $region71: #{modifier_forward.1} parent=1 // pred_check_branch
      %90 = sbr.rel (0) target = $region73
    $region72: #{modifier_forward.1} parent=1 // pred_region
      %91 = dma.done [#allocation6], 16384
    $region73: #{modifier_forward.1} parent=1 // pred_fallthru
      _
    %v93 = vld [vmem:[%s0] sm:$0xff]
    %v94 = vpack.c.bf16 %v93, %v93
    %v95 = vld [vmem:[%s3] sm:$0xff]
    %v96 = vld [vmem:[%s3 + $0x8] sm:$0xff]
    %v97 = vld [vmem:[%s3 + $0x10] sm:$0xff]
    %v98 = vld [vmem:[%s3 + $0x18] sm:$0xff]
    %v99 = vld [vmem:[%s3 + $0x20] sm:$0xff]
    %v100 = vld [vmem:[%s3 + $0x28] sm:$0xff]
    %v101 = vld [vmem:[%s3 + $0x30] sm:$0xff]
    %v102 = vld [vmem:[%s3 + $0x38] sm:$0xff]
    %v103 = vld [vmem:[%s3 + $0x40] sm:$0xff]
    %v104 = vld [vmem:[%s3 + $0x48] sm:$0xff]
    %v105 = vld [vmem:[%s3 + $0x50] sm:$0xff]
    %v106 = vld [vmem:[%s3 + $0x58] sm:$0xff]
    %v107 = vld [vmem:[%s3 + $0x60] sm:$0xff]
    %v108 = vld [vmem:[%s3 + $0x68] sm:$0xff]
    %v109 = vld [vmem:[%s3 + $0x70] sm:$0xff]
    %v110 = vld [vmem:[%s3 + $0x78] sm:$0xff]
    %v111 = vld [vmem:[%s1] sm:$0xff]
    %v112 = vpack.c.bf16 %v111, %v111
    %v113 = vld [vmem:[%s4] sm:$0xff]
    %v114 = vld [vmem:[%s4 + $0x8] sm:$0xff]
    %v115 = vld [vmem:[%s4 + $0x10] sm:$0xff]
    %v116 = vld [vmem:[%s4 + $0x18] sm:$0xff]
    %v117 = vld [vmem:[%s4 + $0x20] sm:$0xff]
    %v118 = vld [vmem:[%s4 + $0x28] sm:$0xff]
    %v119 = vld [vmem:[%s4 + $0x30] sm:$0xff]
    %v120 = vld [vmem:[%s4 + $0x38] sm:$0xff]
    %v121 = vld [vmem:[%s4 + $0x40] sm:$0xff]
    %v122 = vld [vmem:[%s4 + $0x48] sm:$0xff]
    %v123 = vld [vmem:[%s4 + $0x50] sm:$0xff]
    %v124 = vld [vmem:[%s4 + $0x58] sm:$0xff]
    %v125 = vld [vmem:[%s4 + $0x60] sm:$0xff]
    %v126 = vld [vmem:[%s4 + $0x68] sm:$0xff]
    %v127 = vld [vmem:[%s4 + $0x70] sm:$0xff]
    %v128 = vld [vmem:[%s4 + $0x78] sm:$0xff]
    %v129 = vld [vmem:[%s4 + $0x80] sm:$0xff]
    %v130 = vld [vmem:[%s4 + $0x88] sm:$0xff]
    %v131 = vld [vmem:[%s4 + $0x90] sm:$0xff]
    %v132 = vld [vmem:[%s4 + $0x98] sm:$0xff]
    %v133 = vld [vmem:[%s4 + $0xa0] sm:$0xff]
    %v134 = vld [vmem:[%s4 + $0xa8] sm:$0xff]
    %v135 = vld [vmem:[%s4 + $0xb0] sm:$0xff]
    %v136 = vld [vmem:[%s4 + $0xb8] sm:$0xff]
    %v137 = vld [vmem:[%s4 + $0xc0] sm:$0x33]
    %v138 = vld [vmem:[%s4 + $0xc8] sm:$0x33]
    %v165 = vunpack.c.l.b16 %v113
    %v166 = vunpack.c.h.b16 %v113
    %v167 = vunpack.c.l.b16 %v114
    %v168 = vunpack.c.h.b16 %v114
    %v169 = vunpack.c.l.b16 %v115
    %v170 = vunpack.c.h.b16 %v115
    %v171 = vunpack.c.l.b16 %v116
    %v172 = vunpack.c.h.b16 %v116
    %v173 = vunpack.c.l.b16 %v117
    %v174 = vunpack.c.h.b16 %v117
    %v175 = vunpack.c.l.b16 %v118
    %v176 = vunpack.c.h.b16 %v118
    %v177 = vunpack.c.l.b16 %v119
    %v178 = vunpack.c.h.b16 %v119
    %v179 = vunpack.c.l.b16 %v120
    %v180 = vunpack.c.h.b16 %v120
    %v181 = vunpack.c.l.b16 %v121
    %v182 = vunpack.c.h.b16 %v121
    %v183 = vunpack.c.l.b16 %v122
    %v184 = vunpack.c.h.b16 %v122
    %v185 = vunpack.c.l.b16 %v123
    %v186 = vunpack.c.h.b16 %v123
    %v187 = vunpack.c.l.b16 %v124
    %v188 = vunpack.c.h.b16 %v124
    %v189 = vunpack.c.l.b16 %v125
    %v190 = vunpack.c.h.b16 %v125
    %v191 = vunpack.c.l.b16 %v126
    %v192 = vunpack.c.h.b16 %v126
    %v193 = vunpack.c.l.b16 %v127
    %v194 = vunpack.c.h.b16 %v127
    %v195 = vunpack.c.l.b16 %v128
    %v196 = vunpack.c.h.b16 %v128
    %v197 = vunpack.c.l.b16 %v129
    %v198 = vunpack.c.h.b16 %v129
    %v199 = vunpack.c.l.b16 %v130
    %v200 = vunpack.c.h.b16 %v130
    %v201 = vunpack.c.l.b16 %v131
    %v202 = vunpack.c.h.b16 %v131
    %v203 = vunpack.c.l.b16 %v132
    %v204 = vunpack.c.h.b16 %v132
    %v205 = vunpack.c.l.b16 %v133
    %v206 = vunpack.c.h.b16 %v133
    %v207 = vunpack.c.l.b16 %v134
    %v208 = vunpack.c.h.b16 %v134
    %v209 = vunpack.c.l.b16 %v135
    %v210 = vunpack.c.h.b16 %v135
    %v211 = vunpack.c.l.b16 %v136
    %v212 = vunpack.c.h.b16 %v136
    %v213 = vunpack.c.l.b16 %v137
    %v214 = vunpack.c.h.b16 %v137
    %v215 = vunpack.c.l.b16 %v138
    %v216 = vunpack.c.h.b16 %v138
    %v217 = vpack.c.b16 %v169, %v165
    %v218 = vpack.c.b16 %v170, %v166
    %v219 = vpack.c.b16 %v171, %v167
    %v220 = vpack.c.b16 %v172, %v168
    %v221 = vpack.c.b16 %v177, %v173
    %v222 = vpack.c.b16 %v178, %v174
    %v223 = vpack.c.b16 %v179, %v175
    %v224 = vpack.c.b16 %v180, %v176
    %v225 = vpack.c.b16 %v185, %v181
    %v226 = vpack.c.b16 %v186, %v182
    %v227 = vpack.c.b16 %v187, %v183
    %v228 = vpack.c.b16 %v188, %v184
    %v229 = vpack.c.b16 %v193, %v189
    %v230 = vpack.c.b16 %v194, %v190
    %v231 = vpack.c.b16 %v195, %v191
    %v232 = vpack.c.b16 %v196, %v192
    %v233 = vpack.c.b16 %v201, %v197
    %v234 = vpack.c.b16 %v202, %v198
    %v235 = vpack.c.b16 %v203, %v199
    %v236 = vpack.c.b16 %v204, %v200
    %v237 = vpack.c.b16 %v209, %v205
    %v238 = vpack.c.b16 %v210, %v206
    %v239 = vpack.c.b16 %v211, %v207
    %v240 = vpack.c.b16 %v212, %v208
    %v241 = vpack.c.b16 %v213, %v213
    %v242 = vpack.c.b16 %v214, %v214
    %v243 = vpack.c.b16 %v215, %v215
    %v244 = vpack.c.b16 %v216, %v216
    %vm269 = vcmask 818176
    %v271 = vsel %vm269, %v112, 0
    %vm273 = vcmask 1041408
    %v275 = vsel %vm273, %v241, 0
    %v278 = vsel %vm273, %v242, 0
    %v281 = vsel %vm273, %v243, 0
    %v284 = vsel %vm273, %v244, 0
    %286 = vmatprep.subr.bf16.mxu0 %v218
    %287 = vmatpush1.bf16.msra.mxu0 %v217
    %288 = vmatprep.subr.bf16.mxu0 %v222
    %289 = vmatpush1.bf16.msra.mxu0 %v221
    %290 = vmatprep.subr.bf16.mxu0 %v226
    %291 = vmatpush1.bf16.msra.mxu0 %v225
    %292 = vmatprep.subr.bf16.mxu0 %v230
    %293 = vmatpush1.bf16.msra.mxu0 %v229
    %294 = vmatprep.subr.bf16.mxu0 %v234
    %295 = vmatpush1.bf16.msra.mxu0 %v233
    %296 = vmatprep.subr.bf16.mxu0 %v238
    %297 = vmatpush1.bf16.msra.mxu0 %v237
    %298 = vmatprep.subr.bf16.mxu0 %v278
    %299 = vmatpush1.bf16.msra.mxu0 %v275
    %300 = vmatprep.subr.bf16.mxu0 0
    %301 = vmatpush1.bf16.msra.mxu0 0
    %302 = vmatprep.subr.bf16.mxu0 0
    %303 = vmatpush1.bf16.msra.mxu0 0
    %304 = vmatprep.subr.bf16.mxu0 0
    %305 = vmatpush1.bf16.msra.mxu0 0
    %306 = vmatprep.subr.bf16.mxu0 0
    %307 = vmatpush1.bf16.msra.mxu0 0
    %308 = vmatprep.subr.bf16.mxu0 0
    %309 = vmatpush1.bf16.msra.mxu0 0
    %310 = vmatprep.subr.bf16.mxu0 0
    %311 = vmatpush1.bf16.msra.mxu0 0
    %312 = vmatprep.subr.bf16.mxu0 0
    %313 = vmatpush1.bf16.msra.mxu0 0
    %314 = vmatprep.subr.bf16.mxu0 0
    %315 = vmatpush1.bf16.msra.mxu0 0
    %316 = vmatprep.subr.bf16.mxu0 0
    %317 = vmatpush1.bf16.msra.mxu0 0
    %318 = vmatprep.mubr.bf16.mxu0 0
    %319 = vmatmul.mubr.bf16.gmra.mrb[0].mxu0 %v271
    %v320 = vpop.f32.mrb[0].mxu0
    %v321 = vadd.f32 0.0, %v320
    %v322 = vpop.f32.mrb[0].mxu0
    %v323 = vadd.f32 0.0, %v322
    %v324 = vpop.f32.mrb[0].mxu0
    %v325 = vpop.f32.mrb[0].mxu0
    %326 = vdwg.mxu0
    %327 = vmatprep.subr.bf16.mxu0 %v220
    %328 = vmatpush1.bf16.msra.mxu0 %v219
    %329 = vmatprep.subr.bf16.mxu0 %v224
    %330 = vmatpush1.bf16.msra.mxu0 %v223
    %331 = vmatprep.subr.bf16.mxu0 %v228
    %332 = vmatpush1.bf16.msra.mxu0 %v227
    %333 = vmatprep.subr.bf16.mxu0 %v232
    %334 = vmatpush1.bf16.msra.mxu0 %v231
    %335 = vmatprep.subr.bf16.mxu0 %v236
    %336 = vmatpush1.bf16.msra.mxu0 %v235
    %337 = vmatprep.subr.bf16.mxu0 %v240
    %338 = vmatpush1.bf16.msra.mxu0 %v239
    %339 = vmatprep.subr.bf16.mxu0 %v284
    %340 = vmatpush1.bf16.msra.mxu0 %v281
    %341 = vmatprep.subr.bf16.mxu0 0
    %342 = vmatpush1.bf16.msra.mxu0 0
    %343 = vmatprep.subr.bf16.mxu0 0
    %344 = vmatpush1.bf16.msra.mxu0 0
    %345 = vmatprep.subr.bf16.mxu0 0
    %346 = vmatpush1.bf16.msra.mxu0 0
    %347 = vmatprep.subr.bf16.mxu0 0
    %348 = vmatpush1.bf16.msra.mxu0 0
    %349 = vmatprep.subr.bf16.mxu0 0
    %350 = vmatpush1.bf16.msra.mxu0 0
    %351 = vmatprep.subr.bf16.mxu0 0
    %352 = vmatpush1.bf16.msra.mxu0 0
    %353 = vmatprep.subr.bf16.mxu0 0
    %354 = vmatpush1.bf16.msra.mxu0 0
    %355 = vmatprep.subr.bf16.mxu0 0
    %356 = vmatpush1.bf16.msra.mxu0 0
    %357 = vmatprep.subr.bf16.mxu0 0
    %358 = vmatpush1.bf16.msra.mxu0 0
    %359 = vmatprep.mubr.bf16.mxu0 0
    %360 = vmatmul.mubr.bf16.gmra.mrb[0].mxu0 %v271
    %v361 = vpop.f32.mrb[0].mxu0
    %v362 = vadd.f32 0.0, %v361
    %v363 = vpop.f32.mrb[0].mxu0
    %v364 = vadd.f32 0.0, %v363
    %v365 = vpop.f32.mrb[0].mxu0
    %v366 = vpop.f32.mrb[0].mxu0
    %367 = vdwg.mxu0
    %v384 = vunpack.c.l.b16 %v95
    %v385 = vunpack.c.h.b16 %v95
    %v386 = vunpack.c.l.b16 %v96
    %v387 = vunpack.c.h.b16 %v96
    %v388 = vunpack.c.l.b16 %v97
    %v389 = vunpack.c.h.b16 %v97
    %v390 = vunpack.c.l.b16 %v98
    %v391 = vunpack.c.h.b16 %v98
    %v392 = vunpack.c.l.b16 %v99
    %v393 = vunpack.c.h.b16 %v99
    %v394 = vunpack.c.l.b16 %v100
    %v395 = vunpack.c.h.b16 %v100
    %v396 = vunpack.c.l.b16 %v101
    %v397 = vunpack.c.h.b16 %v101
    %v398 = vunpack.c.l.b16 %v102
    %v399 = vunpack.c.h.b16 %v102
    %v400 = vunpack.c.l.b16 %v103
    %v401 = vunpack.c.h.b16 %v103
    %v402 = vunpack.c.l.b16 %v104
    %v403 = vunpack.c.h.b16 %v104
    %v404 = vunpack.c.l.b16 %v105
    %v405 = vunpack.c.h.b16 %v105
    %v406 = vunpack.c.l.b16 %v106
    %v407 = vunpack.c.h.b16 %v106
    %v408 = vunpack.c.l.b16 %v107
    %v409 = vunpack.c.h.b16 %v107
    %v410 = vunpack.c.l.b16 %v108
    %v411 = vunpack.c.h.b16 %v108
    %v412 = vunpack.c.l.b16 %v109
    %v413 = vunpack.c.h.b16 %v109
    %v414 = vunpack.c.l.b16 %v110
    %v415 = vunpack.c.h.b16 %v110
    %v416 = vpack.c.b16 %v388, %v384
    %v417 = vpack.c.b16 %v389, %v385
    %v418 = vpack.c.b16 %v390, %v386
    %v419 = vpack.c.b16 %v391, %v387
    %v420 = vpack.c.b16 %v396, %v392
    %v421 = vpack.c.b16 %v397, %v393
    %v422 = vpack.c.b16 %v398, %v394
    %v423 = vpack.c.b16 %v399, %v395
    %v424 = vpack.c.b16 %v404, %v400
    %v425 = vpack.c.b16 %v405, %v401
    %v426 = vpack.c.b16 %v406, %v402
    %v427 = vpack.c.b16 %v407, %v403
    %v428 = vpack.c.b16 %v412, %v408
    %v429 = vpack.c.b16 %v413, %v409
    %v430 = vpack.c.b16 %v414, %v410
    %v431 = vpack.c.b16 %v415, %v411
    %vm448 = vcmask 523264
    %v450 = vsel %vm448, %v94, 0
    %452 = vmatprep.subr.bf16.mxu0 %v417
    %453 = vmatpush1.bf16.msra.mxu0 %v416
    %454 = vmatprep.subr.bf16.mxu0 %v421
    %455 = vmatpush1.bf16.msra.mxu0 %v420
    %456 = vmatprep.subr.bf16.mxu0 %v425
    %457 = vmatpush1.bf16.msra.mxu0 %v424
    %458 = vmatprep.subr.bf16.mxu0 %v429
    %459 = vmatpush1.bf16.msra.mxu0 %v428
    %460 = vmatprep.subr.bf16.mxu0 0
    %461 = vmatpush1.bf16.msra.mxu0 0
    %462 = vmatprep.subr.bf16.mxu0 0
    %463 = vmatpush1.bf16.msra.mxu0 0
    %464 = vmatprep.subr.bf16.mxu0 0
    %465 = vmatpush1.bf16.msra.mxu0 0
    %466 = vmatprep.subr.bf16.mxu0 0
    %467 = vmatpush1.bf16.msra.mxu0 0
    %468 = vmatprep.subr.bf16.mxu0 0
    %469 = vmatpush1.bf16.msra.mxu0 0
    %470 = vmatprep.subr.bf16.mxu0 0
    %471 = vmatpush1.bf16.msra.mxu0 0
    %472 = vmatprep.subr.bf16.mxu0 0
    %473 = vmatpush1.bf16.msra.mxu0 0
    %474 = vmatprep.subr.bf16.mxu0 0
    %475 = vmatpush1.bf16.msra.mxu0 0
    %476 = vmatprep.subr.bf16.mxu0 0
    %477 = vmatpush1.bf16.msra.mxu0 0
    %478 = vmatprep.subr.bf16.mxu0 0
    %479 = vmatpush1.bf16.msra.mxu0 0
    %480 = vmatprep.subr.bf16.mxu0 0
    %481 = vmatpush1.bf16.msra.mxu0 0
    %482 = vmatprep.subr.bf16.mxu0 0
    %483 = vmatpush1.bf16.msra.mxu0 0
    %484 = vmatprep.mubr.bf16.mxu0 0
    %485 = vmatmul.mubr.bf16.gmra.mrb[0].mxu0 %v450
    %v486 = vpop.f32.mrb[0].mxu0
    %v487 = vadd.f32 %v321, %v486
    %v488 = vpop.f32.mrb[0].mxu0
    %v489 = vadd.f32 %v323, %v488
    %v490 = vpop.f32.mrb[0].mxu0
    %v491 = vpop.f32.mrb[0].mxu0
    %492 = vdwg.mxu0
    %493 = vmatprep.subr.bf16.mxu0 %v419
    %494 = vmatpush1.bf16.msra.mxu0 %v418
    %495 = vmatprep.subr.bf16.mxu0 %v423
    %496 = vmatpush1.bf16.msra.mxu0 %v422
    %497 = vmatprep.subr.bf16.mxu0 %v427
    %498 = vmatpush1.bf16.msra.mxu0 %v426
    %499 = vmatprep.subr.bf16.mxu0 %v431
    %500 = vmatpush1.bf16.msra.mxu0 %v430
    %501 = vmatprep.subr.bf16.mxu0 0
    %502 = vmatpush1.bf16.msra.mxu0 0
    %503 = vmatprep.subr.bf16.mxu0 0
    %504 = vmatpush1.bf16.msra.mxu0 0
    %505 = vmatprep.subr.bf16.mxu0 0
    %506 = vmatpush1.bf16.msra.mxu0 0
    %507 = vmatprep.subr.bf16.mxu0 0
    %508 = vmatpush1.bf16.msra.mxu0 0
    %509 = vmatprep.subr.bf16.mxu0 0
    %510 = vmatpush1.bf16.msra.mxu0 0
    %511 = vmatprep.subr.bf16.mxu0 0
    %512 = vmatpush1.bf16.msra.mxu0 0
    %513 = vmatprep.subr.bf16.mxu0 0
    %514 = vmatpush1.bf16.msra.mxu0 0
    %515 = vmatprep.subr.bf16.mxu0 0
    %516 = vmatpush1.bf16.msra.mxu0 0
    %517 = vmatprep.subr.bf16.mxu0 0
    %518 = vmatpush1.bf16.msra.mxu0 0
    %519 = vmatprep.subr.bf16.mxu0 0
    %520 = vmatpush1.bf16.msra.mxu0 0
    %521 = vmatprep.subr.bf16.mxu0 0
    %522 = vmatpush1.bf16.msra.mxu0 0
    %523 = vmatprep.subr.bf16.mxu0 0
    %524 = vmatpush1.bf16.msra.mxu0 0
    %525 = vmatprep.mubr.bf16.mxu0 0
    %526 = vmatmul.mubr.bf16.gmra.mrb[0].mxu0 %v450
    %v527 = vpop.f32.mrb[0].mxu0
    %v528 = vadd.f32 %v362, %v527
    %v529 = vpop.f32.mrb[0].mxu0
    %v530 = vadd.f32 %v364, %v529
    %v531 = vpop.f32.mrb[0].mxu0
    %v532 = vpop.f32.mrb[0].mxu0
    %533 = vdwg.mxu0
    %v534 = vld [vmem:[%s2] sm:$0xff]
    %v535 = vld [vmem:[%s5] sm:$0xf]
    %v536 = vunpack.c.l.bf16 %v535
    %538 = vset.pattern.permute.xlu0 0
    %539 = vperm.xlu0 %538, %v534
    %v540 = vpop.permute.xlu0 %539
    %v543 = vlaneseq
    %v544 = vshrl.u32 %v543, 7
    %v545 = vsub.s32 0, %v544
    %v546 = vrot.slane %v536, %v545
    %v547 = vlaneseq
    %v548 = vshrl.u32 %v547, 7
    %v549 = vsub.s32 2, %v548
    %v550 = vrot.slane %v536, %v549
    %v551 = vlaneseq
    %v552 = vshrl.u32 %v551, 7
    %v553 = vsub.s32 4, %v552
    %v554 = vrot.slane %v536, %v553
    %v555 = vlaneseq
    %v556 = vshrl.u32 %v555, 7
    %v557 = vsub.s32 6, %v556
    %v558 = vrot.slane %v536, %v557
    %v563 = vlaneseq
    %v564 = vshrl.u32 %v563, 7
    %v565 = vsub.s32 0, %v564
    %v566 = vrot.slane %v546, %v565
    %v567 = vlaneseq
    %v568 = vshrl.u32 %v567, 7
    %v569 = vsub.s32 0, %v568
    %v570 = vrot.slane %v550, %v569
    %v571 = vlaneseq
    %v572 = vshrl.u32 %v571, 7
    %v573 = vsub.s32 0, %v572
    %v574 = vrot.slane %v554, %v573
    %v575 = vlaneseq
    %v576 = vshrl.u32 %v575, 7
    %v577 = vsub.s32 0, %v576
    %v578 = vrot.slane %v558, %v577
    %v579 = vmul.f32 %v540, %v566
    %v580 = vmul.f32 %v540, %v570
    %v581 = vmul.f32 %v540, %v574
    %v582 = vmul.f32 %v540, %v578
    %v583 = vadd.f32 %v487, %v579
    %v584 = vadd.f32 %v489, %v580
    %v585 = vadd.f32 %v528, %v581
    %v586 = vadd.f32 %v530, %v582
    %587 = vset.pattern.permute.xlu0 1
    %588 = vperm.xlu0 %587, %v534
    %v589 = vpop.permute.xlu0 %588
    %v591 = vlaneseq
    %v592 = vshrl.u32 %v591, 7
    %v593 = vsub.s32 1, %v592
    %v594 = vrot.slane %v536, %v593
    %v595 = vlaneseq
    %v596 = vshrl.u32 %v595, 7
    %v597 = vsub.s32 3, %v596
    %v598 = vrot.slane %v536, %v597
    %v599 = vlaneseq
    %v600 = vshrl.u32 %v599, 7
    %v601 = vsub.s32 5, %v600
    %v602 = vrot.slane %v536, %v601
    %v603 = vlaneseq
    %v604 = vshrl.u32 %v603, 7
    %v605 = vsub.s32 7, %v604
    %v606 = vrot.slane %v536, %v605
    %v611 = vlaneseq
    %v612 = vshrl.u32 %v611, 7
    %v613 = vsub.s32 1, %v612
    %v614 = vrot.slane %v594, %v613
    %v615 = vlaneseq
    %v616 = vshrl.u32 %v615, 7
    %v617 = vsub.s32 1, %v616
    %v618 = vrot.slane %v598, %v617
    %v619 = vlaneseq
    %v620 = vshrl.u32 %v619, 7
    %v621 = vsub.s32 1, %v620
    %v622 = vrot.slane %v602, %v621
    %v623 = vlaneseq
    %v624 = vshrl.u32 %v623, 7
    %v625 = vsub.s32 1, %v624
    %v626 = vrot.slane %v606, %v625
    %v627 = vmul.f32 %v589, %v614
    %v628 = vmul.f32 %v589, %v618
    %v629 = vmul.f32 %v589, %v622
    %v630 = vmul.f32 %v589, %v626
    %v631 = vadd.f32 %v583, %v627
    %v632 = vadd.f32 %v584, %v628
    %v633 = vadd.f32 %v585, %v629
    %v634 = vadd.f32 %v586, %v630
    %v635 = vld [vmem:[%s6] sm:$0xf]
    %v637 = vlaneseq
    %v638 = vshrl.u32 %v637, 7
    %v639 = vsub.s32 0, %v638
    %v640 = vrot.slane %v635, %v639
    %v641 = vlaneseq
    %v642 = vshrl.u32 %v641, 7
    %v643 = vsub.s32 1, %v642
    %v644 = vrot.slane %v635, %v643
    %v645 = vlaneseq
    %v646 = vshrl.u32 %v645, 7
    %v647 = vsub.s32 2, %v646
    %v648 = vrot.slane %v635, %v647
    %v649 = vlaneseq
    %v650 = vshrl.u32 %v649, 7
    %v651 = vsub.s32 3, %v650
    %v652 = vrot.slane %v635, %v651
    %v657 = vadd.f32 %v631, %v640
    %v658 = vadd.f32 %v632, %v644
    %v659 = vadd.f32 %v633, %v648
    %v660 = vadd.f32 %v634, %v652
    %vm661 = vcmp.gt.f32.partialorder %v657, 0.0
    %vm662 = vcmp.gt.f32.partialorder %v658, 0.0
    %vm663 = vcmp.gt.f32.partialorder %v659, 0.0
    %vm664 = vcmp.gt.f32.partialorder %v660, 0.0
    %v665 = vmin.f32 %v657, 0.0
    %v666 = vmin.f32 %v658, 0.0
    %v667 = vmin.f32 %v659, 0.0
    %v668 = vmin.f32 %v660, 0.0
    %v669 = vmul.f32 %v665, 1.442695
    %v670 = vpow.pop %v669
    %v671 = vmul.f32 %v666, 1.442695
    %v672 = vpow.pop %v671
    %v673 = vmul.f32 %v667, 1.442695
    %v674 = vpow.pop %v673
    %v675 = vmul.f32 %v668, 1.442695
    %v676 = vpow.pop %v675
    %v677 = vsub.f32 %v670, 1.0
    %v678 = vsub.f32 %v672, 1.0
    %v679 = vsub.f32 %v674, 1.0
    %v680 = vsub.f32 %v676, 1.0
    %v681 = vmul.f32 %v677, 1.6732632
    %v682 = vmul.f32 %v678, 1.6732632
    %v683 = vmul.f32 %v679, 1.6732632
    %v684 = vmul.f32 %v680, 1.6732632
    %v685 = vsel %vm661, %v657, %v681
    %v686 = vsel %vm662, %v658, %v682
    %v687 = vsel %vm663, %v659, %v683
    %v688 = vsel %vm664, %v660, %v684
    %v689 = vmul.f32 %v685, 1.050701
    %v690 = vmul.f32 %v686, 1.050701
    %v691 = vmul.f32 %v687, 1.050701
    %v692 = vmul.f32 %v688, 1.050701
    %v693 = vpack.c.bf16 %v689, %v689
    %v694 = vpack.c.bf16 %v690, %v690
    %v695 = vpack.c.bf16 %v691, %v691
    %v696 = vpack.c.bf16 %v692, %v692
    %v697 = vld [vmem:[#allocation2] sm:$0xff]
    %v698 = vld [vmem:[#allocation2 + $0x8] sm:$0xff]
    %v699 = vld [vmem:[#allocation2 + $0x10] sm:$0xff]
    %v700 = vld [vmem:[#allocation2 + $0x18] sm:$0xff]
    %v701 = vld [vmem:[#allocation2 + $0x20] sm:$0xff]
    %v702 = vld [vmem:[#allocation2 + $0x28] sm:$0xff]
    %v703 = vld [vmem:[#allocation2 + $0x30] sm:$0xff]
    %v704 = vld [vmem:[#allocation2 + $0x38] sm:$0xff]
    %v705 = vld [vmem:[#allocation2 + $0x40] sm:$0xff]
    %v706 = vld [vmem:[#allocation2 + $0x48] sm:$0xff]
    %v707 = vld [vmem:[#allocation2 + $0x50] sm:$0xff]
    %v708 = vld [vmem:[#allocation2 + $0x58] sm:$0xff]
    %v709 = vld [vmem:[#allocation2 + $0x60] sm:$0xff]
    %v710 = vld [vmem:[#allocation2 + $0x68] sm:$0xff]
    %v711 = vld [vmem:[#allocation2 + $0x70] sm:$0xff]
    %v712 = vld [vmem:[#allocation2 + $0x78] sm:$0xff]
    %v713 = vld [vmem:[#allocation2 + $0x80] sm:$0xff]
    %v714 = vld [vmem:[#allocation2 + $0x88] sm:$0xff]
    %v715 = vld [vmem:[#allocation2 + $0x90] sm:$0xff]
    %v716 = vld [vmem:[#allocation2 + $0x98] sm:$0xff]
    %v717 = vld [vmem:[#allocation2 + $0xa0] sm:$0xff]
    %v718 = vld [vmem:[#allocation2 + $0xa8] sm:$0xff]
    %v719 = vld [vmem:[#allocation2 + $0xb0] sm:$0xff]
    %v720 = vld [vmem:[#allocation2 + $0xb8] sm:$0xff]
    %v721 = vld [vmem:[#allocation2 + $0xc0] sm:$0xff]
    %v722 = vld [vmem:[#allocation2 + $0xc8] sm:$0xff]
    %v723 = vld [vmem:[#allocation2 + $0xd0] sm:$0xff]
    %v724 = vld [vmem:[#allocation2 + $0xd8] sm:$0xff]
    %v725 = vld [vmem:[#allocation2 + $0xe0] sm:$0xff]
    %v726 = vld [vmem:[#allocation2 + $0xe8] sm:$0xff]
    %v727 = vld [vmem:[#allocation2 + $0xf0] sm:$0xff]
    %v728 = vld [vmem:[#allocation2 + $0xf8] sm:$0xff]
    %v729 = vld [vmem:[#allocation2 + $0x100] sm:$0xff]
    %v730 = vld [vmem:[#allocation2 + $0x108] sm:$0xff]
    %v731 = vld [vmem:[#allocation2 + $0x110] sm:$0xff]
    %v732 = vld [vmem:[#allocation2 + $0x118] sm:$0xff]
    %v733 = vld [vmem:[#allocation2 + $0x120] sm:$0xff]
    %v734 = vld [vmem:[#allocation2 + $0x128] sm:$0xff]
    %v735 = vld [vmem:[#allocation2 + $0x130] sm:$0xff]
    %v736 = vld [vmem:[#allocation2 + $0x138] sm:$0xff]
    %v737 = vld [vmem:[#allocation2 + $0x140] sm:$0xff]
    %v738 = vld [vmem:[#allocation2 + $0x148] sm:$0xff]
    %v739 = vld [vmem:[#allocation2 + $0x150] sm:$0xff]
    %v740 = vld [vmem:[#allocation2 + $0x158] sm:$0xff]
    %v741 = vld [vmem:[#allocation2 + $0x160] sm:$0xff]
    %v742 = vld [vmem:[#allocation2 + $0x168] sm:$0xff]
    %v743 = vld [vmem:[#allocation2 + $0x170] sm:$0xff]
    %v744 = vld [vmem:[#allocation2 + $0x178] sm:$0xff]
    %v745 = vld [vmem:[#allocation2 + $0x180] sm:$0xff]
    %v746 = vld [vmem:[#allocation2 + $0x188] sm:$0xff]
    %v747 = vld [vmem:[#allocation2 + $0x190] sm:$0xff]
    %v748 = vld [vmem:[#allocation2 + $0x198] sm:$0xff]
    %v749 = vld [vmem:[#allocation2 + $0x1a0] sm:$0xff]
    %v750 = vld [vmem:[#allocation2 + $0x1a8] sm:$0xff]
    %v751 = vld [vmem:[#allocation2 + $0x1b0] sm:$0xff]
    %v752 = vld [vmem:[#allocation2 + $0x1b8] sm:$0xff]
    %v753 = vld [vmem:[#allocation2 + $0x1c0] sm:$0xff]
    %v754 = vld [vmem:[#allocation2 + $0x1c8] sm:$0xff]
    %v755 = vld [vmem:[#allocation2 + $0x1d0] sm:$0xff]
    %v756 = vld [vmem:[#allocation2 + $0x1d8] sm:$0xff]
    %v757 = vld [vmem:[#allocation2 + $0x1e0] sm:$0xff]
    %v758 = vld [vmem:[#allocation2 + $0x1e8] sm:$0xff]
    %v759 = vld [vmem:[#allocation2 + $0x1f0] sm:$0xff]
    %v760 = vld [vmem:[#allocation2 + $0x1f8] sm:$0xff]
    %v761 = vld [vmem:[#allocation2 + $0x200] sm:$0xff]
    %v762 = vld [vmem:[#allocation2 + $0x208] sm:$0xff]
    %v763 = vld [vmem:[#allocation2 + $0x210] sm:$0xff]
    %v764 = vld [vmem:[#allocation2 + $0x218] sm:$0xff]
    %v765 = vld [vmem:[#allocation2 + $0x220] sm:$0xff]
    %v766 = vld [vmem:[#allocation2 + $0x228] sm:$0xff]
    %v767 = vld [vmem:[#allocation2 + $0x230] sm:$0xff]
    %v768 = vld [vmem:[#allocation2 + $0x238] sm:$0xff]
    %v769 = vld [vmem:[#allocation2 + $0x240] sm:$0xff]
    %v770 = vld [vmem:[#allocation2 + $0x248] sm:$0xff]
    %v771 = vld [vmem:[#allocation2 + $0x250] sm:$0xff]
    %v772 = vld [vmem:[#allocation2 + $0x258] sm:$0xff]
    %v773 = vld [vmem:[#allocation2 + $0x260] sm:$0xff]
    %v774 = vld [vmem:[#allocation2 + $0x268] sm:$0xff]
    %v775 = vld [vmem:[#allocation2 + $0x270] sm:$0xff]
    %v776 = vld [vmem:[#allocation2 + $0x278] sm:$0xff]
    %v777 = vld [vmem:[#allocation2 + $0x280] sm:$0xff]
    %v778 = vld [vmem:[#allocation2 + $0x288] sm:$0xff]
    %v779 = vld [vmem:[#allocation2 + $0x290] sm:$0xff]
    %v780 = vld [vmem:[#allocation2 + $0x298] sm:$0xff]
    %v781 = vld [vmem:[#allocation2 + $0x2a0] sm:$0xff]
    %v782 = vld [vmem:[#allocation2 + $0x2a8] sm:$0xff]
    %v783 = vld [vmem:[#allocation2 + $0x2b0] sm:$0xff]
    %v784 = vld [vmem:[#allocation2 + $0x2b8] sm:$0xff]
    %v785 = vld [vmem:[#allocation2 + $0x2c0] sm:$0xff]
    %v786 = vld [vmem:[#allocation2 + $0x2c8] sm:$0xff]
    %v787 = vld [vmem:[#allocation2 + $0x2d0] sm:$0xff]
    %v788 = vld [vmem:[#allocation2 + $0x2d8] sm:$0xff]
    %v789 = vld [vmem:[#allocation2 + $0x2e0] sm:$0xff]
    %v790 = vld [vmem:[#allocation2 + $0x2e8] sm:$0xff]
    %v791 = vld [vmem:[#allocation2 + $0x2f0] sm:$0xff]
    %v792 = vld [vmem:[#allocation2 + $0x2f8] sm:$0xff]
    %v793 = vld [vmem:[#allocation2 + $0x300] sm:$0xff]
    %v794 = vld [vmem:[#allocation2 + $0x308] sm:$0xff]
    %v795 = vld [vmem:[#allocation2 + $0x310] sm:$0xff]
    %v796 = vld [vmem:[#allocation2 + $0x318] sm:$0xff]
    %v797 = vld [vmem:[#allocation2 + $0x320] sm:$0xff]
    %v798 = vld [vmem:[#allocation2 + $0x328] sm:$0xff]
    %v799 = vld [vmem:[#allocation2 + $0x330] sm:$0xff]
    %v800 = vld [vmem:[#allocation2 + $0x338] sm:$0xff]
    %v801 = vld [vmem:[#allocation2 + $0x340] sm:$0xff]
    %v802 = vld [vmem:[#allocation2 + $0x348] sm:$0xff]
    %v803 = vld [vmem:[#allocation2 + $0x350] sm:$0xff]
    %v804 = vld [vmem:[#allocation2 + $0x358] sm:$0xff]
    %v805 = vld [vmem:[#allocation2 + $0x360] sm:$0xff]
    %v806 = vld [vmem:[#allocation2 + $0x368] sm:$0xff]
    %v807 = vld [vmem:[#allocation2 + $0x370] sm:$0xff]
    %v808 = vld [vmem:[#allocation2 + $0x378] sm:$0xff]
    %v809 = vld [vmem:[#allocation2 + $0x380] sm:$0xff]
    %v810 = vld [vmem:[#allocation2 + $0x388] sm:$0xff]
    %v811 = vld [vmem:[#allocation2 + $0x390] sm:$0xff]
    %v812 = vld [vmem:[#allocation2 + $0x398] sm:$0xff]
    %v813 = vld [vmem:[#allocation2 + $0x3a0] sm:$0xff]
    %v814 = vld [vmem:[#allocation2 + $0x3a8] sm:$0xff]
    %v815 = vld [vmem:[#allocation2 + $0x3b0] sm:$0xff]
    %v816 = vld [vmem:[#allocation2 + $0x3b8] sm:$0xff]
    %v817 = vld [vmem:[#allocation2 + $0x3c0] sm:$0xff]
    %v818 = vld [vmem:[#allocation2 + $0x3c8] sm:$0xff]
    %v819 = vld [vmem:[#allocation2 + $0x3d0] sm:$0xff]
    %v820 = vld [vmem:[#allocation2 + $0x3d8] sm:$0xff]
    %v821 = vld [vmem:[#allocation2 + $0x3e0] sm:$0xff]
    %v822 = vld [vmem:[#allocation2 + $0x3e8] sm:$0xff]
    %v823 = vld [vmem:[#allocation2 + $0x3f0] sm:$0xff]
    %v824 = vld [vmem:[#allocation2 + $0x3f8] sm:$0xff]
    %v825 = vld [vmem:[%s8] sm:$0xf]
    %v827 = vlaneseq
    %v828 = vshrl.u32 %v827, 7
    %v829 = vsub.s32 0, %v828
    %v830 = vrot.slane %v825, %v829
    %v831 = vlaneseq
    %v832 = vshrl.u32 %v831, 7
    %v833 = vsub.s32 1, %v832
    %v834 = vrot.slane %v825, %v833
    %v835 = vlaneseq
    %v836 = vshrl.u32 %v835, 7
    %v837 = vsub.s32 2, %v836
    %v838 = vrot.slane %v825, %v837
    %v839 = vlaneseq
    %v840 = vshrl.u32 %v839, 7
    %v841 = vsub.s32 3, %v840
    %v842 = vrot.slane %v825, %v841
    %v975 = vunpack.c.l.b16 %v697
    %v976 = vunpack.c.h.b16 %v697
    %v977 = vunpack.c.l.b16 %v698
    %v978 = vunpack.c.h.b16 %v698
    %v979 = vunpack.c.l.b16 %v699
    %v980 = vunpack.c.h.b16 %v699
    %v981 = vunpack.c.l.b16 %v700
    %v982 = vunpack.c.h.b16 %v700
    %v983 = vunpack.c.l.b16 %v701
    %v984 = vunpack.c.h.b16 %v701
    %v985 = vunpack.c.l.b16 %v702
    %v986 = vunpack.c.h.b16 %v702
    %v987 = vunpack.c.l.b16 %v703
    %v988 = vunpack.c.h.b16 %v703
    %v989 = vunpack.c.l.b16 %v704
    %v990 = vunpack.c.h.b16 %v704
    %v991 = vunpack.c.l.b16 %v705
    %v992 = vunpack.c.h.b16 %v705
    %v993 = vunpack.c.l.b16 %v706
    %v994 = vunpack.c.h.b16 %v706
    %v995 = vunpack.c.l.b16 %v707
    %v996 = vunpack.c.h.b16 %v707
    %v997 = vunpack.c.l.b16 %v708
    %v998 = vunpack.c.h.b16 %v708
    %v999 = vunpack.c.l.b16 %v709
    %v1000 = vunpack.c.h.b16 %v709
    %v1001 = vunpack.c.l.b16 %v710
    %v1002 = vunpack.c.h.b16 %v710
    %v1003 = vunpack.c.l.b16 %v711
    %v1004 = vunpack.c.h.b16 %v711
    %v1005 = vunpack.c.l.b16 %v712
    %v1006 = vunpack.c.h.b16 %v712
    %v1007 = vunpack.c.l.b16 %v713
    %v1008 = vunpack.c.h.b16 %v713
    %v1009 = vunpack.c.l.b16 %v714
    %v1010 = vunpack.c.h.b16 %v714
    %v1011 = vunpack.c.l.b16 %v715
    %v1012 = vunpack.c.h.b16 %v715
    %v1013 = vunpack.c.l.b16 %v716
    %v1014 = vunpack.c.h.b16 %v716
    %v1015 = vunpack.c.l.b16 %v717
    %v1016 = vunpack.c.h.b16 %v717
    %v1017 = vunpack.c.l.b16 %v718
    %v1018 = vunpack.c.h.b16 %v718
    %v1019 = vunpack.c.l.b16 %v719
    %v1020 = vunpack.c.h.b16 %v719
    %v1021 = vunpack.c.l.b16 %v720
    %v1022 = vunpack.c.h.b16 %v720
    %v1023 = vunpack.c.l.b16 %v721
    %v1024 = vunpack.c.h.b16 %v721
    %v1025 = vunpack.c.l.b16 %v722
    %v1026 = vunpack.c.h.b16 %v722
    %v1027 = vunpack.c.l.b16 %v723
    %v1028 = vunpack.c.h.b16 %v723
    %v1029 = vunpack.c.l.b16 %v724
    %v1030 = vunpack.c.h.b16 %v724
    %v1031 = vunpack.c.l.b16 %v725
    %v1032 = vunpack.c.h.b16 %v725
    %v1033 = vunpack.c.l.b16 %v726
    %v1034 = vunpack.c.h.b16 %v726
    %v1035 = vunpack.c.l.b16 %v727
    %v1036 = vunpack.c.h.b16 %v727
    %v1037 = vunpack.c.l.b16 %v728
    %v1038 = vunpack.c.h.b16 %v728
    %v1039 = vunpack.c.l.b16 %v729
    %v1040 = vunpack.c.h.b16 %v729
    %v1041 = vunpack.c.l.b16 %v730
    %v1042 = vunpack.c.h.b16 %v730
    %v1043 = vunpack.c.l.b16 %v731
    %v1044 = vunpack.c.h.b16 %v731
    %v1045 = vunpack.c.l.b16 %v732
    %v1046 = vunpack.c.h.b16 %v732
    %v1047 = vunpack.c.l.b16 %v733
    %v1048 = vunpack.c.h.b16 %v733
    %v1049 = vunpack.c.l.b16 %v734
    %v1050 = vunpack.c.h.b16 %v734
    %v1051 = vunpack.c.l.b16 %v735
    %v1052 = vunpack.c.h.b16 %v735
    %v1053 = vunpack.c.l.b16 %v736
    %v1054 = vunpack.c.h.b16 %v736
    %v1055 = vunpack.c.l.b16 %v737
    %v1056 = vunpack.c.h.b16 %v737
    %v1057 = vunpack.c.l.b16 %v738
    %v1058 = vunpack.c.h.b16 %v738
    %v1059 = vunpack.c.l.b16 %v739
    %v1060 = vunpack.c.h.b16 %v739
    %v1061 = vunpack.c.l.b16 %v740
    %v1062 = vunpack.c.h.b16 %v740
    %v1063 = vunpack.c.l.b16 %v741
    %v1064 = vunpack.c.h.b16 %v741
    %v1065 = vunpack.c.l.b16 %v742
    %v1066 = vunpack.c.h.b16 %v742
    %v1067 = vunpack.c.l.b16 %v743
    %v1068 = vunpack.c.h.b16 %v743
    %v1069 = vunpack.c.l.b16 %v744
    %v1070 = vunpack.c.h.b16 %v744
    %v1071 = vunpack.c.l.b16 %v745
    %v1072 = vunpack.c.h.b16 %v745
    %v1073 = vunpack.c.l.b16 %v746
    %v1074 = vunpack.c.h.b16 %v746
    %v1075 = vunpack.c.l.b16 %v747
    %v1076 = vunpack.c.h.b16 %v747
    %v1077 = vunpack.c.l.b16 %v748
    %v1078 = vunpack.c.h.b16 %v748
    %v1079 = vunpack.c.l.b16 %v749
    %v1080 = vunpack.c.h.b16 %v749
    %v1081 = vunpack.c.l.b16 %v750
    %v1082 = vunpack.c.h.b16 %v750
    %v1083 = vunpack.c.l.b16 %v751
    %v1084 = vunpack.c.h.b16 %v751
    %v1085 = vunpack.c.l.b16 %v752
    %v1086 = vunpack.c.h.b16 %v752
    %v1087 = vunpack.c.l.b16 %v753
    %v1088 = vunpack.c.h.b16 %v753
    %v1089 = vunpack.c.l.b16 %v754
    %v1090 = vunpack.c.h.b16 %v754
    %v1091 = vunpack.c.l.b16 %v755
    %v1092 = vunpack.c.h.b16 %v755
    %v1093 = vunpack.c.l.b16 %v756
    %v1094 = vunpack.c.h.b16 %v756
    %v1095 = vunpack.c.l.b16 %v757
    %v1096 = vunpack.c.h.b16 %v757
    %v1097 = vunpack.c.l.b16 %v758
    %v1098 = vunpack.c.h.b16 %v758
    %v1099 = vunpack.c.l.b16 %v759
    %v1100 = vunpack.c.h.b16 %v759
    %v1101 = vunpack.c.l.b16 %v760
    %v1102 = vunpack.c.h.b16 %v760
    %v1103 = vunpack.c.l.b16 %v761
    %v1104 = vunpack.c.h.b16 %v761
    %v1105 = vunpack.c.l.b16 %v762
    %v1106 = vunpack.c.h.b16 %v762
    %v1107 = vunpack.c.l.b16 %v763
    %v1108 = vunpack.c.h.b16 %v763
    %v1109 = vunpack.c.l.b16 %v764
    %v1110 = vunpack.c.h.b16 %v764
    %v1111 = vunpack.c.l.b16 %v765
    %v1112 = vunpack.c.h.b16 %v765
    %v1113 = vunpack.c.l.b16 %v766
    %v1114 = vunpack.c.h.b16 %v766
    %v1115 = vunpack.c.l.b16 %v767
    %v1116 = vunpack.c.h.b16 %v767
    %v1117 = vunpack.c.l.b16 %v768
    %v1118 = vunpack.c.h.b16 %v768
    %v1119 = vunpack.c.l.b16 %v769
    %v1120 = vunpack.c.h.b16 %v769
    %v1121 = vunpack.c.l.b16 %v770
    %v1122 = vunpack.c.h.b16 %v770
    %v1123 = vunpack.c.l.b16 %v771
    %v1124 = vunpack.c.h.b16 %v771
    %v1125 = vunpack.c.l.b16 %v772
    %v1126 = vunpack.c.h.b16 %v772
    %v1127 = vunpack.c.l.b16 %v773
    %v1128 = vunpack.c.h.b16 %v773
    %v1129 = vunpack.c.l.b16 %v774
    %v1130 = vunpack.c.h.b16 %v774
    %v1131 = vunpack.c.l.b16 %v775
    %v1132 = vunpack.c.h.b16 %v775
    %v1133 = vunpack.c.l.b16 %v776
    %v1134 = vunpack.c.h.b16 %v776
    %v1135 = vunpack.c.l.b16 %v777
    %v1136 = vunpack.c.h.b16 %v777
    %v1137 = vunpack.c.l.b16 %v778
    %v1138 = vunpack.c.h.b16 %v778
    %v1139 = vunpack.c.l.b16 %v779
    %v1140 = vunpack.c.h.b16 %v779
    %v1141 = vunpack.c.l.b16 %v780
    %v1142 = vunpack.c.h.b16 %v780
    %v1143 = vunpack.c.l.b16 %v781
    %v1144 = vunpack.c.h.b16 %v781
    %v1145 = vunpack.c.l.b16 %v782
    %v1146 = vunpack.c.h.b16 %v782
    %v1147 = vunpack.c.l.b16 %v783
    %v1148 = vunpack.c.h.b16 %v783
    %v1149 = vunpack.c.l.b16 %v784
    %v1150 = vunpack.c.h.b16 %v784
    %v1151 = vunpack.c.l.b16 %v785
    %v1152 = vunpack.c.h.b16 %v785
    %v1153 = vunpack.c.l.b16 %v786
    %v1154 = vunpack.c.h.b16 %v786
    %v1155 = vunpack.c.l.b16 %v787
    %v1156 = vunpack.c.h.b16 %v787
    %v1157 = vunpack.c.l.b16 %v788
    %v1158 = vunpack.c.h.b16 %v788
    %v1159 = vunpack.c.l.b16 %v789
    %v1160 = vunpack.c.h.b16 %v789
    %v1161 = vunpack.c.l.b16 %v790
    %v1162 = vunpack.c.h.b16 %v790
    %v1163 = vunpack.c.l.b16 %v791
    %v1164 = vunpack.c.h.b16 %v791
    %v1165 = vunpack.c.l.b16 %v792
    %v1166 = vunpack.c.h.b16 %v792
    %v1167 = vunpack.c.l.b16 %v793
    %v1168 = vunpack.c.h.b16 %v793
    %v1169 = vunpack.c.l.b16 %v794
    %v1170 = vunpack.c.h.b16 %v794
    %v1171 = vunpack.c.l.b16 %v795
    %v1172 = vunpack.c.h.b16 %v795
    %v1173 = vunpack.c.l.b16 %v796
    %v1174 = vunpack.c.h.b16 %v796
    %v1175 = vunpack.c.l.b16 %v797
    %v1176 = vunpack.c.h.b16 %v797
    %v1177 = vunpack.c.l.b16 %v798
    %v1178 = vunpack.c.h.b16 %v798
    %v1179 = vunpack.c.l.b16 %v799
    %v1180 = vunpack.c.h.b16 %v799
    %v1181 = vunpack.c.l.b16 %v800
    %v1182 = vunpack.c.h.b16 %v800
    %v1183 = vunpack.c.l.b16 %v801
    %v1184 = vunpack.c.h.b16 %v801
    %v1185 = vunpack.c.l.b16 %v802
    %v1186 = vunpack.c.h.b16 %v802
    %v1187 = vunpack.c.l.b16 %v803
    %v1188 = vunpack.c.h.b16 %v803
    %v1189 = vunpack.c.l.b16 %v804
    %v1190 = vunpack.c.h.b16 %v804
    %v1191 = vunpack.c.l.b16 %v805
    %v1192 = vunpack.c.h.b16 %v805
    %v1193 = vunpack.c.l.b16 %v806
    %v1194 = vunpack.c.h.b16 %v806
    %v1195 = vunpack.c.l.b16 %v807
    %v1196 = vunpack.c.h.b16 %v807
    %v1197 = vunpack.c.l.b16 %v808
    %v1198 = vunpack.c.h.b16 %v808
    %v1199 = vunpack.c.l.b16 %v809
    %v1200 = vunpack.c.h.b16 %v809
    %v1201 = vunpack.c.l.b16 %v810
    %v1202 = vunpack.c.h.b16 %v810
    %v1203 = vunpack.c.l.b16 %v811
    %v1204 = vunpack.c.h.b16 %v811
    %v1205 = vunpack.c.l.b16 %v812
    %v1206 = vunpack.c.h.b16 %v812
    %v1207 = vunpack.c.l.b16 %v813
    %v1208 = vunpack.c.h.b16 %v813
    %v1209 = vunpack.c.l.b16 %v814
    %v1210 = vunpack.c.h.b16 %v814
    %v1211 = vunpack.c.l.b16 %v815
    %v1212 = vunpack.c.h.b16 %v815
    %v1213 = vunpack.c.l.b16 %v816
    %v1214 = vunpack.c.h.b16 %v816
    %v1215 = vunpack.c.l.b16 %v817
    %v1216 = vunpack.c.h.b16 %v817
    %v1217 = vunpack.c.l.b16 %v818
    %v1218 = vunpack.c.h.b16 %v818
    %v1219 = vunpack.c.l.b16 %v819
    %v1220 = vunpack.c.h.b16 %v819
    %v1221 = vunpack.c.l.b16 %v820
    %v1222 = vunpack.c.h.b16 %v820
    %v1223 = vunpack.c.l.b16 %v821
    %v1224 = vunpack.c.h.b16 %v821
    %v1225 = vunpack.c.l.b16 %v822
    %v1226 = vunpack.c.h.b16 %v822
    %v1227 = vunpack.c.l.b16 %v823
    %v1228 = vunpack.c.h.b16 %v823
    %v1229 = vunpack.c.l.b16 %v824
    %v1230 = vunpack.c.h.b16 %v824
    %v1231 = vpack.c.b16 %v979, %v975
    %v1232 = vpack.c.b16 %v980, %v976
    %v1233 = vpack.c.b16 %v981, %v977
    %v1234 = vpack.c.b16 %v982, %v978
    %v1235 = vpack.c.b16 %v987, %v983
    %v1236 = vpack.c.b16 %v988, %v984
    %v1237 = vpack.c.b16 %v989, %v985
    %v1238 = vpack.c.b16 %v990, %v986
    %v1239 = vpack.c.b16 %v995, %v991
    %v1240 = vpack.c.b16 %v996, %v992
    %v1241 = vpack.c.b16 %v997, %v993
    %v1242 = vpack.c.b16 %v998, %v994
    %v1243 = vpack.c.b16 %v1003, %v999
    %v1244 = vpack.c.b16 %v1004, %v1000
    %v1245 = vpack.c.b16 %v1005, %v1001
    %v1246 = vpack.c.b16 %v1006, %v1002
    %v1247 = vpack.c.b16 %v1011, %v1007
    %v1248 = vpack.c.b16 %v1012, %v1008
    %v1249 = vpack.c.b16 %v1013, %v1009
    %v1250 = vpack.c.b16 %v1014, %v1010
    %v1251 = vpack.c.b16 %v1019, %v1015
    %v1252 = vpack.c.b16 %v1020, %v1016
    %v1253 = vpack.c.b16 %v1021, %v1017
    %v1254 = vpack.c.b16 %v1022, %v1018
    %v1255 = vpack.c.b16 %v1027, %v1023
    %v1256 = vpack.c.b16 %v1028, %v1024
    %v1257 = vpack.c.b16 %v1029, %v1025
    %v1258 = vpack.c.b16 %v1030, %v1026
    %v1259 = vpack.c.b16 %v1035, %v1031
    %v1260 = vpack.c.b16 %v1036, %v1032
    %v1261 = vpack.c.b16 %v1037, %v1033
    %v1262 = vpack.c.b16 %v1038, %v1034
    %v1263 = vpack.c.b16 %v1043, %v1039
    %v1264 = vpack.c.b16 %v1044, %v1040
    %v1265 = vpack.c.b16 %v1045, %v1041
    %v1266 = vpack.c.b16 %v1046, %v1042
    %v1267 = vpack.c.b16 %v1051, %v1047
    %v1268 = vpack.c.b16 %v1052, %v1048
    %v1269 = vpack.c.b16 %v1053, %v1049
    %v1270 = vpack.c.b16 %v1054, %v1050
    %v1271 = vpack.c.b16 %v1059, %v1055
    %v1272 = vpack.c.b16 %v1060, %v1056
    %v1273 = vpack.c.b16 %v1061, %v1057
    %v1274 = vpack.c.b16 %v1062, %v1058
    %v1275 = vpack.c.b16 %v1067, %v1063
    %v1276 = vpack.c.b16 %v1068, %v1064
    %v1277 = vpack.c.b16 %v1069, %v1065
    %v1278 = vpack.c.b16 %v1070, %v1066
    %v1279 = vpack.c.b16 %v1075, %v1071
    %v1280 = vpack.c.b16 %v1076, %v1072
    %v1281 = vpack.c.b16 %v1077, %v1073
    %v1282 = vpack.c.b16 %v1078, %v1074
    %v1283 = vpack.c.b16 %v1083, %v1079
    %v1284 = vpack.c.b16 %v1084, %v1080
    %v1285 = vpack.c.b16 %v1085, %v1081
    %v1286 = vpack.c.b16 %v1086, %v1082
    %v1287 = vpack.c.b16 %v1091, %v1087
    %v1288 = vpack.c.b16 %v1092, %v1088
    %v1289 = vpack.c.b16 %v1093, %v1089
    %v1290 = vpack.c.b16 %v1094, %v1090
    %v1291 = vpack.c.b16 %v1099, %v1095
    %v1292 = vpack.c.b16 %v1100, %v1096
    %v1293 = vpack.c.b16 %v1101, %v1097
    %v1294 = vpack.c.b16 %v1102, %v1098
    %v1295 = vpack.c.b16 %v1107, %v1103
    %v1296 = vpack.c.b16 %v1108, %v1104
    %v1297 = vpack.c.b16 %v1109, %v1105
    %v1298 = vpack.c.b16 %v1110, %v1106
    %v1299 = vpack.c.b16 %v1115, %v1111
    %v1300 = vpack.c.b16 %v1116, %v1112
    %v1301 = vpack.c.b16 %v1117, %v1113
    %v1302 = vpack.c.b16 %v1118, %v1114
    %v1303 = vpack.c.b16 %v1123, %v1119
    %v1304 = vpack.c.b16 %v1124, %v1120
    %v1305 = vpack.c.b16 %v1125, %v1121
    %v1306 = vpack.c.b16 %v1126, %v1122
    %v1307 = vpack.c.b16 %v1131, %v1127
    %v1308 = vpack.c.b16 %v1132, %v1128
    %v1309 = vpack.c.b16 %v1133, %v1129
    %v1310 = vpack.c.b16 %v1134, %v1130
    %v1311 = vpack.c.b16 %v1139, %v1135
    %v1312 = vpack.c.b16 %v1140, %v1136
    %v1313 = vpack.c.b16 %v1141, %v1137
    %v1314 = vpack.c.b16 %v1142, %v1138
    %v1315 = vpack.c.b16 %v1147, %v1143
    %v1316 = vpack.c.b16 %v1148, %v1144
    %v1317 = vpack.c.b16 %v1149, %v1145
    %v1318 = vpack.c.b16 %v1150, %v1146
    %v1319 = vpack.c.b16 %v1155, %v1151
    %v1320 = vpack.c.b16 %v1156, %v1152
    %v1321 = vpack.c.b16 %v1157, %v1153
    %v1322 = vpack.c.b16 %v1158, %v1154
    %v1323 = vpack.c.b16 %v1163, %v1159
    %v1324 = vpack.c.b16 %v1164, %v1160
    %v1325 = vpack.c.b16 %v1165, %v1161
    %v1326 = vpack.c.b16 %v1166, %v1162
    %v1327 = vpack.c.b16 %v1171, %v1167
    %v1328 = vpack.c.b16 %v1172, %v1168
    %v1329 = vpack.c.b16 %v1173, %v1169
    %v1330 = vpack.c.b16 %v1174, %v1170
    %v1331 = vpack.c.b16 %v1179, %v1175
    %v1332 = vpack.c.b16 %v1180, %v1176
    %v1333 = vpack.c.b16 %v1181, %v1177
    %v1334 = vpack.c.b16 %v1182, %v1178
    %v1335 = vpack.c.b16 %v1187, %v1183
    %v1336 = vpack.c.b16 %v1188, %v1184
    %v1337 = vpack.c.b16 %v1189, %v1185
    %v1338 = vpack.c.b16 %v1190, %v1186
    %v1339 = vpack.c.b16 %v1195, %v1191
    %v1340 = vpack.c.b16 %v1196, %v1192
    %v1341 = vpack.c.b16 %v1197, %v1193
    %v1342 = vpack.c.b16 %v1198, %v1194
    %v1343 = vpack.c.b16 %v1203, %v1199
    %v1344 = vpack.c.b16 %v1204, %v1200
    %v1345 = vpack.c.b16 %v1205, %v1201
    %v1346 = vpack.c.b16 %v1206, %v1202
    %v1347 = vpack.c.b16 %v1211, %v1207
    %v1348 = vpack.c.b16 %v1212, %v1208
    %v1349 = vpack.c.b16 %v1213, %v1209
    %v1350 = vpack.c.b16 %v1214, %v1210
    %v1351 = vpack.c.b16 %v1219, %v1215
    %v1352 = vpack.c.b16 %v1220, %v1216
    %v1353 = vpack.c.b16 %v1221, %v1217
    %v1354 = vpack.c.b16 %v1222, %v1218
    %v1355 = vpack.c.b16 %v1227, %v1223
    %v1356 = vpack.c.b16 %v1228, %v1224
    %v1357 = vpack.c.b16 %v1229, %v1225
    %v1358 = vpack.c.b16 %v1230, %v1226
    %1487 = vmatprep.subr.bf16.mxu0 %v1232
    %1488 = vmatpush1.bf16.msra.mxu0 %v1231
    %1489 = vmatprep.subr.bf16.mxu0 %v1236
    %1490 = vmatpush1.bf16.msra.mxu0 %v1235
    %1491 = vmatprep.subr.bf16.mxu0 %v1240
    %1492 = vmatpush1.bf16.msra.mxu0 %v1239
    %1493 = vmatprep.subr.bf16.mxu0 %v1244
    %1494 = vmatpush1.bf16.msra.mxu0 %v1243
    %1495 = vmatprep.subr.bf16.mxu0 %v1248
    %1496 = vmatpush1.bf16.msra.mxu0 %v1247
    %1497 = vmatprep.subr.bf16.mxu0 %v1252
    %1498 = vmatpush1.bf16.msra.mxu0 %v1251
    %1499 = vmatprep.subr.bf16.mxu0 %v1256
    %1500 = vmatpush1.bf16.msra.mxu0 %v1255
    %1501 = vmatprep.subr.bf16.mxu0 %v1260
    %1502 = vmatpush1.bf16.msra.mxu0 %v1259
    %1503 = vmatprep.subr.bf16.mxu0 %v1264
    %1504 = vmatpush1.bf16.msra.mxu0 %v1263
    %1505 = vmatprep.subr.bf16.mxu0 %v1268
    %1506 = vmatpush1.bf16.msra.mxu0 %v1267
    %1507 = vmatprep.subr.bf16.mxu0 %v1272
    %1508 = vmatpush1.bf16.msra.mxu0 %v1271
    %1509 = vmatprep.subr.bf16.mxu0 %v1276
    %1510 = vmatpush1.bf16.msra.mxu0 %v1275
    %1511 = vmatprep.subr.bf16.mxu0 %v1280
    %1512 = vmatpush1.bf16.msra.mxu0 %v1279
    %1513 = vmatprep.subr.bf16.mxu0 %v1284
    %1514 = vmatpush1.bf16.msra.mxu0 %v1283
    %1515 = vmatprep.subr.bf16.mxu0 %v1288
    %1516 = vmatpush1.bf16.msra.mxu0 %v1287
    %1517 = vmatprep.subr.bf16.mxu0 %v1292
    %1518 = vmatpush1.bf16.msra.mxu0 %v1291
    %1519 = vmatprep.mubr.bf16.mxu0 %v694
    %1520 = vmatmul.mubr.bf16.gmra.mrb[0].mxu0 %v693
    %v1521 = vpop.f32.mrb[0].mxu0
    %v1522 = vadd.f32 %v830, %v1521
    %v1523 = vpop.f32.mrb[0].mxu0
    %v1524 = vadd.f32 %v834, %v1523
    %v1525 = vpop.f32.mrb[0].mxu0
    %v1526 = vpop.f32.mrb[0].mxu0
    %1527 = vdwg.mxu0
    %1528 = vmatprep.subr.bf16.mxu0 %v1296
    %1529 = vmatpush1.bf16.msra.mxu0 %v1295
    %1530 = vmatprep.subr.bf16.mxu0 %v1300
    %1531 = vmatpush1.bf16.msra.mxu0 %v1299
    %1532 = vmatprep.subr.bf16.mxu0 %v1304
    %1533 = vmatpush1.bf16.msra.mxu0 %v1303
    %1534 = vmatprep.subr.bf16.mxu0 %v1308
    %1535 = vmatpush1.bf16.msra.mxu0 %v1307
    %1536 = vmatprep.subr.bf16.mxu0 %v1312
    %1537 = vmatpush1.bf16.msra.mxu0 %v1311
    %1538 = vmatprep.subr.bf16.mxu0 %v1316
    %1539 = vmatpush1.bf16.msra.mxu0 %v1315
    %1540 = vmatprep.subr.bf16.mxu0 %v1320
    %1541 = vmatpush1.bf16.msra.mxu0 %v1319
    %1542 = vmatprep.subr.bf16.mxu0 %v1324
    %1543 = vmatpush1.bf16.msra.mxu0 %v1323
    %1544 = vmatprep.subr.bf16.mxu0 %v1328
    %1545 = vmatpush1.bf16.msra.mxu0 %v1327
    %1546 = vmatprep.subr.bf16.mxu0 %v1332
    %1547 = vmatpush1.bf16.msra.mxu0 %v1331
    %1548 = vmatprep.subr.bf16.mxu0 %v1336
    %1549 = vmatpush1.bf16.msra.mxu0 %v1335
    %1550 = vmatprep.subr.bf16.mxu0 %v1340
    %1551 = vmatpush1.bf16.msra.mxu0 %v1339
    %1552 = vmatprep.subr.bf16.mxu0 %v1344
    %1553 = vmatpush1.bf16.msra.mxu0 %v1343
    %1554 = vmatprep.subr.bf16.mxu0 %v1348
    %1555 = vmatpush1.bf16.msra.mxu0 %v1347
    %1556 = vmatprep.subr.bf16.mxu0 %v1352
    %1557 = vmatpush1.bf16.msra.mxu0 %v1351
    %1558 = vmatprep.subr.bf16.mxu0 %v1356
    %1559 = vmatpush1.bf16.msra.mxu0 %v1355
    %1560 = vmatprep.mubr.bf16.mxu0 %v696
    %1561 = vmatmul.mubr.bf16.gmra.mrb[0].mxu0 %v695
    %v1562 = vpop.f32.mrb[0].mxu0
    %v1563 = vadd.f32 %v1522, %v1562
    %v1564 = vpop.f32.mrb[0].mxu0
    %v1565 = vadd.f32 %v1524, %v1564
    %v1566 = vpop.f32.mrb[0].mxu0
    %v1567 = vpop.f32.mrb[0].mxu0
    %1568 = vdwg.mxu0
    %1569 = vmatprep.subr.bf16.mxu0 %v1234
    %1570 = vmatpush1.bf16.msra.mxu0 %v1233
    %1571 = vmatprep.subr.bf16.mxu0 %v1238
    %1572 = vmatpush1.bf16.msra.mxu0 %v1237
    %1573 = vmatprep.subr.bf16.mxu0 %v1242
    %1574 = vmatpush1.bf16.msra.mxu0 %v1241
    %1575 = vmatprep.subr.bf16.mxu0 %v1246
    %1576 = vmatpush1.bf16.msra.mxu0 %v1245
    %1577 = vmatprep.subr.bf16.mxu0 %v1250
    %1578 = vmatpush1.bf16.msra.mxu0 %v1249
    %1579 = vmatprep.subr.bf16.mxu0 %v1254
    %1580 = vmatpush1.bf16.msra.mxu0 %v1253
    %1581 = vmatprep.subr.bf16.mxu0 %v1258
    %1582 = vmatpush1.bf16.msra.mxu0 %v1257
    %1583 = vmatprep.subr.bf16.mxu0 %v1262
    %1584 = vmatpush1.bf16.msra.mxu0 %v1261
    %1585 = vmatprep.subr.bf16.mxu0 %v1266
    %1586 = vmatpush1.bf16.msra.mxu0 %v1265
    %1587 = vmatprep.subr.bf16.mxu0 %v1270
    %1588 = vmatpush1.bf16.msra.mxu0 %v1269
    %1589 = vmatprep.subr.bf16.mxu0 %v1274
    %1590 = vmatpush1.bf16.msra.mxu0 %v1273
    %1591 = vmatprep.subr.bf16.mxu0 %v1278
    %1592 = vmatpush1.bf16.msra.mxu0 %v1277
    %1593 = vmatprep.subr.bf16.mxu0 %v1282
    %1594 = vmatpush1.bf16.msra.mxu0 %v1281
    %1595 = vmatprep.subr.bf16.mxu0 %v1286
    %1596 = vmatpush1.bf16.msra.mxu0 %v1285
    %1597 = vmatprep.subr.bf16.mxu0 %v1290
    %1598 = vmatpush1.bf16.msra.mxu0 %v1289
    %1599 = vmatprep.subr.bf16.mxu0 %v1294
    %1600 = vmatpush1.bf16.msra.mxu0 %v1293
    %1601 = vmatprep.mubr.bf16.mxu0 %v694
    %1602 = vmatmul.mubr.bf16.gmra.mrb[0].mxu0 %v693
    %v1603 = vpop.f32.mrb[0].mxu0
    %v1604 = vadd.f32 %v838, %v1603
    %v1605 = vpop.f32.mrb[0].mxu0
    %v1606 = vadd.f32 %v842, %v1605
    %v1607 = vpop.f32.mrb[0].mxu0
    %v1608 = vpop.f32.mrb[0].mxu0
    %1609 = vdwg.mxu0
    %1610 = vmatprep.subr.bf16.mxu0 %v1298
    %1611 = vmatpush1.bf16.msra.mxu0 %v1297
    %1612 = vmatprep.subr.bf16.mxu0 %v1302
    %1613 = vmatpush1.bf16.msra.mxu0 %v1301
    %1614 = vmatprep.subr.bf16.mxu0 %v1306
    %1615 = vmatpush1.bf16.msra.mxu0 %v1305
    %1616 = vmatprep.subr.bf16.mxu0 %v1310
    %1617 = vmatpush1.bf16.msra.mxu0 %v1309
    %1618 = vmatprep.subr.bf16.mxu0 %v1314
    %1619 = vmatpush1.bf16.msra.mxu0 %v1313
    %1620 = vmatprep.subr.bf16.mxu0 %v1318
    %1621 = vmatpush1.bf16.msra.mxu0 %v1317
    %1622 = vmatprep.subr.bf16.mxu0 %v1322
    %1623 = vmatpush1.bf16.msra.mxu0 %v1321
    %1624 = vmatprep.subr.bf16.mxu0 %v1326
    %1625 = vmatpush1.bf16.msra.mxu0 %v1325
    %1626 = vmatprep.subr.bf16.mxu0 %v1330
    %1627 = vmatpush1.bf16.msra.mxu0 %v1329
    %1628 = vmatprep.subr.bf16.mxu0 %v1334
    %1629 = vmatpush1.bf16.msra.mxu0 %v1333
    %1630 = vmatprep.subr.bf16.mxu0 %v1338
    %1631 = vmatpush1.bf16.msra.mxu0 %v1337
    %1632 = vmatprep.subr.bf16.mxu0 %v1342
    %1633 = vmatpush1.bf16.msra.mxu0 %v1341
    %1634 = vmatprep.subr.bf16.mxu0 %v1346
    %1635 = vmatpush1.bf16.msra.mxu0 %v1345
    %1636 = vmatprep.subr.bf16.mxu0 %v1350
    %1637 = vmatpush1.bf16.msra.mxu0 %v1349
    %1638 = vmatprep.subr.bf16.mxu0 %v1354
    %1639 = vmatpush1.bf16.msra.mxu0 %v1353
    %1640 = vmatprep.subr.bf16.mxu0 %v1358
    %1641 = vmatpush1.bf16.msra.mxu0 %v1357
    %1642 = vmatprep.mubr.bf16.mxu0 %v696
    %1643 = vmatmul.mubr.bf16.gmra.mrb[0].mxu0 %v695
    %v1644 = vpop.f32.mrb[0].mxu0
    %v1645 = vadd.f32 %v1604, %v1644
    %v1646 = vpop.f32.mrb[0].mxu0
    %v1647 = vadd.f32 %v1606, %v1646
    %v1648 = vpop.f32.mrb[0].mxu0
    %v1649 = vpop.f32.mrb[0].mxu0
    %1650 = vdwg.mxu0
    %vm1651 = vcmp.gt.f32.partialorder %v1563, 0.0
    %vm1652 = vcmp.gt.f32.partialorder %v1565, 0.0
    %vm1653 = vcmp.gt.f32.partialorder %v1645, 0.0
    %vm1654 = vcmp.gt.f32.partialorder %v1647, 0.0
    %v1655 = vmin.f32 %v1563, 0.0
    %v1656 = vmin.f32 %v1565, 0.0
    %v1657 = vmin.f32 %v1645, 0.0
    %v1658 = vmin.f32 %v1647, 0.0
    %v1659 = vmul.f32 %v1655, 1.442695
    %v1660 = vpow.pop %v1659
    %v1661 = vmul.f32 %v1656, 1.442695
    %v1662 = vpow.pop %v1661
    %v1663 = vmul.f32 %v1657, 1.442695
    %v1664 = vpow.pop %v1663
    %v1665 = vmul.f32 %v1658, 1.442695
    %v1666 = vpow.pop %v1665
    %v1667 = vsub.f32 %v1660, 1.0
    %v1668 = vsub.f32 %v1662, 1.0
    %v1669 = vsub.f32 %v1664, 1.0
    %v1670 = vsub.f32 %v1666, 1.0
    %v1671 = vmul.f32 %v1667, 1.6732632
    %v1672 = vmul.f32 %v1668, 1.6732632
    %v1673 = vmul.f32 %v1669, 1.6732632
    %v1674 = vmul.f32 %v1670, 1.6732632
    %v1675 = vsel %vm1651, %v1563, %v1671
    %v1676 = vsel %vm1652, %v1565, %v1672
    %v1677 = vsel %vm1653, %v1645, %v1673
    %v1678 = vsel %vm1654, %v1647, %v1674
    %v1679 = vmul.f32 %v1675, 1.050701
    %v1680 = vmul.f32 %v1676, 1.050701
    %v1681 = vmul.f32 %v1677, 1.050701
    %v1682 = vmul.f32 %v1678, 1.050701
    %v1683 = vpack.c.bf16 %v1679, %v1679
    %v1684 = vpack.c.bf16 %v1680, %v1680
    %v1685 = vpack.c.bf16 %v1681, %v1681
    %v1686 = vpack.c.bf16 %v1682, %v1682
    %v1687 = vld [vmem:[#allocation5] sm:$0xff]
    %v1688 = vld [vmem:[#allocation5 + $0x8] sm:$0xff]
    %v1689 = vld [vmem:[#allocation5 + $0x10] sm:$0xff]
    %v1690 = vld [vmem:[#allocation5 + $0x18] sm:$0xff]
    %v1691 = vld [vmem:[#allocation5 + $0x20] sm:$0xff]
    %v1692 = vld [vmem:[#allocation5 + $0x28] sm:$0xff]
    %v1693 = vld [vmem:[#allocation5 + $0x30] sm:$0xff]
    %v1694 = vld [vmem:[#allocation5 + $0x38] sm:$0xff]
    %v1695 = vld [vmem:[#allocation5 + $0x40] sm:$0xff]
    %v1696 = vld [vmem:[#allocation5 + $0x48] sm:$0xff]
    %v1697 = vld [vmem:[#allocation5 + $0x50] sm:$0xff]
    %v1698 = vld [vmem:[#allocation5 + $0x58] sm:$0xff]
    %v1699 = vld [vmem:[#allocation5 + $0x60] sm:$0xff]
    %v1700 = vld [vmem:[#allocation5 + $0x68] sm:$0xff]
    %v1701 = vld [vmem:[#allocation5 + $0x70] sm:$0xff]
    %v1702 = vld [vmem:[#allocation5 + $0x78] sm:$0xff]
    %v1703 = vld [vmem:[#allocation5 + $0x80] sm:$0xff]
    %v1704 = vld [vmem:[#allocation5 + $0x88] sm:$0xff]
    %v1705 = vld [vmem:[#allocation5 + $0x90] sm:$0xff]
    %v1706 = vld [vmem:[#allocation5 + $0x98] sm:$0xff]
    %v1707 = vld [vmem:[#allocation5 + $0xa0] sm:$0xff]
    %v1708 = vld [vmem:[#allocation5 + $0xa8] sm:$0xff]
    %v1709 = vld [vmem:[#allocation5 + $0xb0] sm:$0xff]
    %v1710 = vld [vmem:[#allocation5 + $0xb8] sm:$0xff]
    %v1711 = vld [vmem:[#allocation5 + $0xc0] sm:$0xff]
    %v1712 = vld [vmem:[#allocation5 + $0xc8] sm:$0xff]
    %v1713 = vld [vmem:[#allocation5 + $0xd0] sm:$0xff]
    %v1714 = vld [vmem:[#allocation5 + $0xd8] sm:$0xff]
    %v1715 = vld [vmem:[#allocation5 + $0xe0] sm:$0xff]
    %v1716 = vld [vmem:[#allocation5 + $0xe8] sm:$0xff]
    %v1717 = vld [vmem:[#allocation5 + $0xf0] sm:$0xff]
    %v1718 = vld [vmem:[#allocation5 + $0xf8] sm:$0xff]
    %v1719 = vld [vmem:[#allocation5 + $0x100] sm:$0xff]
    %v1720 = vld [vmem:[#allocation5 + $0x108] sm:$0xff]
    %v1721 = vld [vmem:[#allocation5 + $0x110] sm:$0xff]
    %v1722 = vld [vmem:[#allocation5 + $0x118] sm:$0xff]
    %v1723 = vld [vmem:[#allocation5 + $0x120] sm:$0xff]
    %v1724 = vld [vmem:[#allocation5 + $0x128] sm:$0xff]
    %v1725 = vld [vmem:[#allocation5 + $0x130] sm:$0xff]
    %v1726 = vld [vmem:[#allocation5 + $0x138] sm:$0xff]
    %v1727 = vld [vmem:[#allocation5 + $0x140] sm:$0xff]
    %v1728 = vld [vmem:[#allocation5 + $0x148] sm:$0xff]
    %v1729 = vld [vmem:[#allocation5 + $0x150] sm:$0xff]
    %v1730 = vld [vmem:[#allocation5 + $0x158] sm:$0xff]
    %v1731 = vld [vmem:[#allocation5 + $0x160] sm:$0xff]
    %v1732 = vld [vmem:[#allocation5 + $0x168] sm:$0xff]
    %v1733 = vld [vmem:[#allocation5 + $0x170] sm:$0xff]
    %v1734 = vld [vmem:[#allocation5 + $0x178] sm:$0xff]
    %v1735 = vld [vmem:[#allocation5 + $0x180] sm:$0xff]
    %v1736 = vld [vmem:[#allocation5 + $0x188] sm:$0xff]
    %v1737 = vld [vmem:[#allocation5 + $0x190] sm:$0xff]
    %v1738 = vld [vmem:[#allocation5 + $0x198] sm:$0xff]
    %v1739 = vld [vmem:[#allocation5 + $0x1a0] sm:$0xff]
    %v1740 = vld [vmem:[#allocation5 + $0x1a8] sm:$0xff]
    %v1741 = vld [vmem:[#allocation5 + $0x1b0] sm:$0xff]
    %v1742 = vld [vmem:[#allocation5 + $0x1b8] sm:$0xff]
    %v1743 = vld [vmem:[#allocation5 + $0x1c0] sm:$0xff]
    %v1744 = vld [vmem:[#allocation5 + $0x1c8] sm:$0xff]
    %v1745 = vld [vmem:[#allocation5 + $0x1d0] sm:$0xff]
    %v1746 = vld [vmem:[#allocation5 + $0x1d8] sm:$0xff]
    %v1747 = vld [vmem:[#allocation5 + $0x1e0] sm:$0xff]
    %v1748 = vld [vmem:[#allocation5 + $0x1e8] sm:$0xff]
    %v1749 = vld [vmem:[#allocation5 + $0x1f0] sm:$0xff]
    %v1750 = vld [vmem:[#allocation5 + $0x1f8] sm:$0xff]
    %v1751 = vld [vmem:[#allocation5 + $0x200] sm:$0xff]
    %v1752 = vld [vmem:[#allocation5 + $0x208] sm:$0xff]
    %v1753 = vld [vmem:[#allocation5 + $0x210] sm:$0xff]
    %v1754 = vld [vmem:[#allocation5 + $0x218] sm:$0xff]
    %v1755 = vld [vmem:[#allocation5 + $0x220] sm:$0xff]
    %v1756 = vld [vmem:[#allocation5 + $0x228] sm:$0xff]
    %v1757 = vld [vmem:[#allocation5 + $0x230] sm:$0xff]
    %v1758 = vld [vmem:[#allocation5 + $0x238] sm:$0xff]
    %v1759 = vld [vmem:[#allocation5 + $0x240] sm:$0xff]
    %v1760 = vld [vmem:[#allocation5 + $0x248] sm:$0xff]
    %v1761 = vld [vmem:[#allocation5 + $0x250] sm:$0xff]
    %v1762 = vld [vmem:[#allocation5 + $0x258] sm:$0xff]
    %v1763 = vld [vmem:[#allocation5 + $0x260] sm:$0xff]
    %v1764 = vld [vmem:[#allocation5 + $0x268] sm:$0xff]
    %v1765 = vld [vmem:[#allocation5 + $0x270] sm:$0xff]
    %v1766 = vld [vmem:[#allocation5 + $0x278] sm:$0xff]
    %v1767 = vld [vmem:[#allocation5 + $0x280] sm:$0xff]
    %v1768 = vld [vmem:[#allocation5 + $0x288] sm:$0xff]
    %v1769 = vld [vmem:[#allocation5 + $0x290] sm:$0xff]
    %v1770 = vld [vmem:[#allocation5 + $0x298] sm:$0xff]
    %v1771 = vld [vmem:[#allocation5 + $0x2a0] sm:$0xff]
    %v1772 = vld [vmem:[#allocation5 + $0x2a8] sm:$0xff]
    %v1773 = vld [vmem:[#allocation5 + $0x2b0] sm:$0xff]
    %v1774 = vld [vmem:[#allocation5 + $0x2b8] sm:$0xff]
    %v1775 = vld [vmem:[#allocation5 + $0x2c0] sm:$0xff]
    %v1776 = vld [vmem:[#allocation5 + $0x2c8] sm:$0xff]
    %v1777 = vld [vmem:[#allocation5 + $0x2d0] sm:$0xff]
    %v1778 = vld [vmem:[#allocation5 + $0x2d8] sm:$0xff]
    %v1779 = vld [vmem:[#allocation5 + $0x2e0] sm:$0xff]
    %v1780 = vld [vmem:[#allocation5 + $0x2e8] sm:$0xff]
    %v1781 = vld [vmem:[#allocation5 + $0x2f0] sm:$0xff]
    %v1782 = vld [vmem:[#allocation5 + $0x2f8] sm:$0xff]
    %v1783 = vld [vmem:[#allocation5 + $0x300] sm:$0xff]
    %v1784 = vld [vmem:[#allocation5 + $0x308] sm:$0xff]
    %v1785 = vld [vmem:[#allocation5 + $0x310] sm:$0xff]
    %v1786 = vld [vmem:[#allocation5 + $0x318] sm:$0xff]
    %v1787 = vld [vmem:[#allocation5 + $0x320] sm:$0xff]
    %v1788 = vld [vmem:[#allocation5 + $0x328] sm:$0xff]
    %v1789 = vld [vmem:[#allocation5 + $0x330] sm:$0xff]
    %v1790 = vld [vmem:[#allocation5 + $0x338] sm:$0xff]
    %v1791 = vld [vmem:[#allocation5 + $0x340] sm:$0xff]
    %v1792 = vld [vmem:[#allocation5 + $0x348] sm:$0xff]
    %v1793 = vld [vmem:[#allocation5 + $0x350] sm:$0xff]
    %v1794 = vld [vmem:[#allocation5 + $0x358] sm:$0xff]
    %v1795 = vld [vmem:[#allocation5 + $0x360] sm:$0xff]
    %v1796 = vld [vmem:[#allocation5 + $0x368] sm:$0xff]
    %v1797 = vld [vmem:[#allocation5 + $0x370] sm:$0xff]
    %v1798 = vld [vmem:[#allocation5 + $0x378] sm:$0xff]
    %v1799 = vld [vmem:[#allocation5 + $0x380] sm:$0xff]
    %v1800 = vld [vmem:[#allocation5 + $0x388] sm:$0xff]
    %v1801 = vld [vmem:[#allocation5 + $0x390] sm:$0xff]
    %v1802 = vld [vmem:[#allocation5 + $0x398] sm:$0xff]
    %v1803 = vld [vmem:[#allocation5 + $0x3a0] sm:$0xff]
    %v1804 = vld [vmem:[#allocation5 + $0x3a8] sm:$0xff]
    %v1805 = vld [vmem:[#allocation5 + $0x3b0] sm:$0xff]
    %v1806 = vld [vmem:[#allocation5 + $0x3b8] sm:$0xff]
    %v1807 = vld [vmem:[#allocation5 + $0x3c0] sm:$0xff]
    %v1808 = vld [vmem:[#allocation5 + $0x3c8] sm:$0xff]
    %v1809 = vld [vmem:[#allocation5 + $0x3d0] sm:$0xff]
    %v1810 = vld [vmem:[#allocation5 + $0x3d8] sm:$0xff]
    %v1811 = vld [vmem:[#allocation5 + $0x3e0] sm:$0xff]
    %v1812 = vld [vmem:[#allocation5 + $0x3e8] sm:$0xff]
    %v1813 = vld [vmem:[#allocation5 + $0x3f0] sm:$0xff]
    %v1814 = vld [vmem:[#allocation5 + $0x3f8] sm:$0xff]
    %v1815 = vld [vmem:[%s10] sm:$0xf]
    %v1817 = vlaneseq
    %v1818 = vshrl.u32 %v1817, 7
    %v1819 = vsub.s32 0, %v1818
    %v1820 = vrot.slane %v1815, %v1819
    %v1821 = vlaneseq
    %v1822 = vshrl.u32 %v1821, 7
    %v1823 = vsub.s32 1, %v1822
    %v1824 = vrot.slane %v1815, %v1823
    %v1825 = vlaneseq
    %v1826 = vshrl.u32 %v1825, 7
    %v1827 = vsub.s32 2, %v1826
    %v1828 = vrot.slane %v1815, %v1827
    %v1829 = vlaneseq
    %v1830 = vshrl.u32 %v1829, 7
    %v1831 = vsub.s32 3, %v1830
    %v1832 = vrot.slane %v1815, %v1831
    %v1965 = vunpack.c.l.b16 %v1687
    %v1966 = vunpack.c.h.b16 %v1687
    %v1967 = vunpack.c.l.b16 %v1688
    %v1968 = vunpack.c.h.b16 %v1688
    %v1969 = vunpack.c.l.b16 %v1689
    %v1970 = vunpack.c.h.b16 %v1689
    %v1971 = vunpack.c.l.b16 %v1690
    %v1972 = vunpack.c.h.b16 %v1690
    %v1973 = vunpack.c.l.b16 %v1691
    %v1974 = vunpack.c.h.b16 %v1691
    %v1975 = vunpack.c.l.b16 %v1692
    %v1976 = vunpack.c.h.b16 %v1692
    %v1977 = vunpack.c.l.b16 %v1693
    %v1978 = vunpack.c.h.b16 %v1693
    %v1979 = vunpack.c.l.b16 %v1694
    %v1980 = vunpack.c.h.b16 %v1694
    %v1981 = vunpack.c.l.b16 %v1695
    %v1982 = vunpack.c.h.b16 %v1695
    %v1983 = vunpack.c.l.b16 %v1696
    %v1984 = vunpack.c.h.b16 %v1696
    %v1985 = vunpack.c.l.b16 %v1697
    %v1986 = vunpack.c.h.b16 %v1697
    %v1987 = vunpack.c.l.b16 %v1698
    %v1988 = vunpack.c.h.b16 %v1698
    %v1989 = vunpack.c.l.b16 %v1699
    %v1990 = vunpack.c.h.b16 %v1699
    %v1991 = vunpack.c.l.b16 %v1700
    %v1992 = vunpack.c.h.b16 %v1700
    %v1993 = vunpack.c.l.b16 %v1701
    %v1994 = vunpack.c.h.b16 %v1701
    %v1995 = vunpack.c.l.b16 %v1702
    %v1996 = vunpack.c.h.b16 %v1702
    %v1997 = vunpack.c.l.b16 %v1703
    %v1998 = vunpack.c.h.b16 %v1703
    %v1999 = vunpack.c.l.b16 %v1704
    %v2000 = vunpack.c.h.b16 %v1704
    %v2001 = vunpack.c.l.b16 %v1705
    %v2002 = vunpack.c.h.b16 %v1705
    %v2003 = vunpack.c.l.b16 %v1706
    %v2004 = vunpack.c.h.b16 %v1706
    %v2005 = vunpack.c.l.b16 %v1707
    %v2006 = vunpack.c.h.b16 %v1707
    %v2007 = vunpack.c.l.b16 %v1708
    %v2008 = vunpack.c.h.b16 %v1708
    %v2009 = vunpack.c.l.b16 %v1709
    %v2010 = vunpack.c.h.b16 %v1709
    %v2011 = vunpack.c.l.b16 %v1710
    %v2012 = vunpack.c.h.b16 %v1710
    %v2013 = vunpack.c.l.b16 %v1711
    %v2014 = vunpack.c.h.b16 %v1711
    %v2015 = vunpack.c.l.b16 %v1712
    %v2016 = vunpack.c.h.b16 %v1712
    %v2017 = vunpack.c.l.b16 %v1713
    %v2018 = vunpack.c.h.b16 %v1713
    %v2019 = vunpack.c.l.b16 %v1714
    %v2020 = vunpack.c.h.b16 %v1714
    %v2021 = vunpack.c.l.b16 %v1715
    %v2022 = vunpack.c.h.b16 %v1715
    %v2023 = vunpack.c.l.b16 %v1716
    %v2024 = vunpack.c.h.b16 %v1716
    %v2025 = vunpack.c.l.b16 %v1717
    %v2026 = vunpack.c.h.b16 %v1717
    %v2027 = vunpack.c.l.b16 %v1718
    %v2028 = vunpack.c.h.b16 %v1718
    %v2029 = vunpack.c.l.b16 %v1719
    %v2030 = vunpack.c.h.b16 %v1719
    %v2031 = vunpack.c.l.b16 %v1720
    %v2032 = vunpack.c.h.b16 %v1720
    %v2033 = vunpack.c.l.b16 %v1721
    %v2034 = vunpack.c.h.b16 %v1721
    %v2035 = vunpack.c.l.b16 %v1722
    %v2036 = vunpack.c.h.b16 %v1722
    %v2037 = vunpack.c.l.b16 %v1723
    %v2038 = vunpack.c.h.b16 %v1723
    %v2039 = vunpack.c.l.b16 %v1724
    %v2040 = vunpack.c.h.b16 %v1724
    %v2041 = vunpack.c.l.b16 %v1725
    %v2042 = vunpack.c.h.b16 %v1725
    %v2043 = vunpack.c.l.b16 %v1726
    %v2044 = vunpack.c.h.b16 %v1726
    %v2045 = vunpack.c.l.b16 %v1727
    %v2046 = vunpack.c.h.b16 %v1727
    %v2047 = vunpack.c.l.b16 %v1728
    %v2048 = vunpack.c.h.b16 %v1728
    %v2049 = vunpack.c.l.b16 %v1729
    %v2050 = vunpack.c.h.b16 %v1729
    %v2051 = vunpack.c.l.b16 %v1730
    %v2052 = vunpack.c.h.b16 %v1730
    %v2053 = vunpack.c.l.b16 %v1731
    %v2054 = vunpack.c.h.b16 %v1731
    %v2055 = vunpack.c.l.b16 %v1732
    %v2056 = vunpack.c.h.b16 %v1732
    %v2057 = vunpack.c.l.b16 %v1733
    %v2058 = vunpack.c.h.b16 %v1733
    %v2059 = vunpack.c.l.b16 %v1734
    %v2060 = vunpack.c.h.b16 %v1734
    %v2061 = vunpack.c.l.b16 %v1735
    %v2062 = vunpack.c.h.b16 %v1735
    %v2063 = vunpack.c.l.b16 %v1736
    %v2064 = vunpack.c.h.b16 %v1736
    %v2065 = vunpack.c.l.b16 %v1737
    %v2066 = vunpack.c.h.b16 %v1737
    %v2067 = vunpack.c.l.b16 %v1738
    %v2068 = vunpack.c.h.b16 %v1738
    %v2069 = vunpack.c.l.b16 %v1739
    %v2070 = vunpack.c.h.b16 %v1739
    %v2071 = vunpack.c.l.b16 %v1740
    %v2072 = vunpack.c.h.b16 %v1740
    %v2073 = vunpack.c.l.b16 %v1741
    %v2074 = vunpack.c.h.b16 %v1741
    %v2075 = vunpack.c.l.b16 %v1742
    %v2076 = vunpack.c.h.b16 %v1742
    %v2077 = vunpack.c.l.b16 %v1743
    %v2078 = vunpack.c.h.b16 %v1743
    %v2079 = vunpack.c.l.b16 %v1744
    %v2080 = vunpack.c.h.b16 %v1744
    %v2081 = vunpack.c.l.b16 %v1745
    %v2082 = vunpack.c.h.b16 %v1745
    %v2083 = vunpack.c.l.b16 %v1746
    %v2084 = vunpack.c.h.b16 %v1746
    %v2085 = vunpack.c.l.b16 %v1747
    %v2086 = vunpack.c.h.b16 %v1747
    %v2087 = vunpack.c.l.b16 %v1748
    %v2088 = vunpack.c.h.b16 %v1748
    %v2089 = vunpack.c.l.b16 %v1749
    %v2090 = vunpack.c.h.b16 %v1749
    %v2091 = vunpack.c.l.b16 %v1750
    %v2092 = vunpack.c.h.b16 %v1750
    %v2093 = vunpack.c.l.b16 %v1751
    %v2094 = vunpack.c.h.b16 %v1751
    %v2095 = vunpack.c.l.b16 %v1752
    %v2096 = vunpack.c.h.b16 %v1752
    %v2097 = vunpack.c.l.b16 %v1753
    %v2098 = vunpack.c.h.b16 %v1753
    %v2099 = vunpack.c.l.b16 %v1754
    %v2100 = vunpack.c.h.b16 %v1754
    %v2101 = vunpack.c.l.b16 %v1755
    %v2102 = vunpack.c.h.b16 %v1755
    %v2103 = vunpack.c.l.b16 %v1756
    %v2104 = vunpack.c.h.b16 %v1756
    %v2105 = vunpack.c.l.b16 %v1757
    %v2106 = vunpack.c.h.b16 %v1757
    %v2107 = vunpack.c.l.b16 %v1758
    %v2108 = vunpack.c.h.b16 %v1758
    %v2109 = vunpack.c.l.b16 %v1759
    %v2110 = vunpack.c.h.b16 %v1759
    %v2111 = vunpack.c.l.b16 %v1760
    %v2112 = vunpack.c.h.b16 %v1760
    %v2113 = vunpack.c.l.b16 %v1761
    %v2114 = vunpack.c.h.b16 %v1761
    %v2115 = vunpack.c.l.b16 %v1762
    %v2116 = vunpack.c.h.b16 %v1762
    %v2117 = vunpack.c.l.b16 %v1763
    %v2118 = vunpack.c.h.b16 %v1763
    %v2119 = vunpack.c.l.b16 %v1764
    %v2120 = vunpack.c.h.b16 %v1764
    %v2121 = vunpack.c.l.b16 %v1765
    %v2122 = vunpack.c.h.b16 %v1765
    %v2123 = vunpack.c.l.b16 %v1766
    %v2124 = vunpack.c.h.b16 %v1766
    %v2125 = vunpack.c.l.b16 %v1767
    %v2126 = vunpack.c.h.b16 %v1767
    %v2127 = vunpack.c.l.b16 %v1768
    %v2128 = vunpack.c.h.b16 %v1768
    %v2129 = vunpack.c.l.b16 %v1769
    %v2130 = vunpack.c.h.b16 %v1769
    %v2131 = vunpack.c.l.b16 %v1770
    %v2132 = vunpack.c.h.b16 %v1770
    %v2133 = vunpack.c.l.b16 %v1771
    %v2134 = vunpack.c.h.b16 %v1771
    %v2135 = vunpack.c.l.b16 %v1772
    %v2136 = vunpack.c.h.b16 %v1772
    %v2137 = vunpack.c.l.b16 %v1773
    %v2138 = vunpack.c.h.b16 %v1773
    %v2139 = vunpack.c.l.b16 %v1774
    %v2140 = vunpack.c.h.b16 %v1774
    %v2141 = vunpack.c.l.b16 %v1775
    %v2142 = vunpack.c.h.b16 %v1775
    %v2143 = vunpack.c.l.b16 %v1776
    %v2144 = vunpack.c.h.b16 %v1776
    %v2145 = vunpack.c.l.b16 %v1777
    %v2146 = vunpack.c.h.b16 %v1777
    %v2147 = vunpack.c.l.b16 %v1778
    %v2148 = vunpack.c.h.b16 %v1778
    %v2149 = vunpack.c.l.b16 %v1779
    %v2150 = vunpack.c.h.b16 %v1779
    %v2151 = vunpack.c.l.b16 %v1780
    %v2152 = vunpack.c.h.b16 %v1780
    %v2153 = vunpack.c.l.b16 %v1781
    %v2154 = vunpack.c.h.b16 %v1781
    %v2155 = vunpack.c.l.b16 %v1782
    %v2156 = vunpack.c.h.b16 %v1782
    %v2157 = vunpack.c.l.b16 %v1783
    %v2158 = vunpack.c.h.b16 %v1783
    %v2159 = vunpack.c.l.b16 %v1784
    %v2160 = vunpack.c.h.b16 %v1784
    %v2161 = vunpack.c.l.b16 %v1785
    %v2162 = vunpack.c.h.b16 %v1785
    %v2163 = vunpack.c.l.b16 %v1786
    %v2164 = vunpack.c.h.b16 %v1786
    %v2165 = vunpack.c.l.b16 %v1787
    %v2166 = vunpack.c.h.b16 %v1787
    %v2167 = vunpack.c.l.b16 %v1788
    %v2168 = vunpack.c.h.b16 %v1788
    %v2169 = vunpack.c.l.b16 %v1789
    %v2170 = vunpack.c.h.b16 %v1789
    %v2171 = vunpack.c.l.b16 %v1790
    %v2172 = vunpack.c.h.b16 %v1790
    %v2173 = vunpack.c.l.b16 %v1791
    %v2174 = vunpack.c.h.b16 %v1791
    %v2175 = vunpack.c.l.b16 %v1792
    %v2176 = vunpack.c.h.b16 %v1792
    %v2177 = vunpack.c.l.b16 %v1793
    %v2178 = vunpack.c.h.b16 %v1793
    %v2179 = vunpack.c.l.b16 %v1794
    %v2180 = vunpack.c.h.b16 %v1794
    %v2181 = vunpack.c.l.b16 %v1795
    %v2182 = vunpack.c.h.b16 %v1795
    %v2183 = vunpack.c.l.b16 %v1796
    %v2184 = vunpack.c.h.b16 %v1796
    %v2185 = vunpack.c.l.b16 %v1797
    %v2186 = vunpack.c.h.b16 %v1797
    %v2187 = vunpack.c.l.b16 %v1798
    %v2188 = vunpack.c.h.b16 %v1798
    %v2189 = vunpack.c.l.b16 %v1799
    %v2190 = vunpack.c.h.b16 %v1799
    %v2191 = vunpack.c.l.b16 %v1800
    %v2192 = vunpack.c.h.b16 %v1800
    %v2193 = vunpack.c.l.b16 %v1801
    %v2194 = vunpack.c.h.b16 %v1801
    %v2195 = vunpack.c.l.b16 %v1802
    %v2196 = vunpack.c.h.b16 %v1802
    %v2197 = vunpack.c.l.b16 %v1803
    %v2198 = vunpack.c.h.b16 %v1803
    %v2199 = vunpack.c.l.b16 %v1804
    %v2200 = vunpack.c.h.b16 %v1804
    %v2201 = vunpack.c.l.b16 %v1805
    %v2202 = vunpack.c.h.b16 %v1805
    %v2203 = vunpack.c.l.b16 %v1806
    %v2204 = vunpack.c.h.b16 %v1806
    %v2205 = vunpack.c.l.b16 %v1807
    %v2206 = vunpack.c.h.b16 %v1807
    %v2207 = vunpack.c.l.b16 %v1808
    %v2208 = vunpack.c.h.b16 %v1808
    %v2209 = vunpack.c.l.b16 %v1809
    %v2210 = vunpack.c.h.b16 %v1809
    %v2211 = vunpack.c.l.b16 %v1810
    %v2212 = vunpack.c.h.b16 %v1810
    %v2213 = vunpack.c.l.b16 %v1811
    %v2214 = vunpack.c.h.b16 %v1811
    %v2215 = vunpack.c.l.b16 %v1812
    %v2216 = vunpack.c.h.b16 %v1812
    %v2217 = vunpack.c.l.b16 %v1813
    %v2218 = vunpack.c.h.b16 %v1813
    %v2219 = vunpack.c.l.b16 %v1814
    %v2220 = vunpack.c.h.b16 %v1814
    %v2221 = vpack.c.b16 %v1969, %v1965
    %v2222 = vpack.c.b16 %v1970, %v1966
    %v2223 = vpack.c.b16 %v1971, %v1967
    %v2224 = vpack.c.b16 %v1972, %v1968
    %v2225 = vpack.c.b16 %v1977, %v1973
    %v2226 = vpack.c.b16 %v1978, %v1974
    %v2227 = vpack.c.b16 %v1979, %v1975
    %v2228 = vpack.c.b16 %v1980, %v1976
    %v2229 = vpack.c.b16 %v1985, %v1981
    %v2230 = vpack.c.b16 %v1986, %v1982
    %v2231 = vpack.c.b16 %v1987, %v1983
    %v2232 = vpack.c.b16 %v1988, %v1984
    %v2233 = vpack.c.b16 %v1993, %v1989
    %v2234 = vpack.c.b16 %v1994, %v1990
    %v2235 = vpack.c.b16 %v1995, %v1991
    %v2236 = vpack.c.b16 %v1996, %v1992
    %v2237 = vpack.c.b16 %v2001, %v1997
    %v2238 = vpack.c.b16 %v2002, %v1998
    %v2239 = vpack.c.b16 %v2003, %v1999
    %v2240 = vpack.c.b16 %v2004, %v2000
    %v2241 = vpack.c.b16 %v2009, %v2005
    %v2242 = vpack.c.b16 %v2010, %v2006
    %v2243 = vpack.c.b16 %v2011, %v2007
    %v2244 = vpack.c.b16 %v2012, %v2008
    %v2245 = vpack.c.b16 %v2017, %v2013
    %v2246 = vpack.c.b16 %v2018, %v2014
    %v2247 = vpack.c.b16 %v2019, %v2015
    %v2248 = vpack.c.b16 %v2020, %v2016
    %v2249 = vpack.c.b16 %v2025, %v2021
    %v2250 = vpack.c.b16 %v2026, %v2022
    %v2251 = vpack.c.b16 %v2027, %v2023
    %v2252 = vpack.c.b16 %v2028, %v2024
    %v2253 = vpack.c.b16 %v2033, %v2029
    %v2254 = vpack.c.b16 %v2034, %v2030
    %v2255 = vpack.c.b16 %v2035, %v2031
    %v2256 = vpack.c.b16 %v2036, %v2032
    %v2257 = vpack.c.b16 %v2041, %v2037
    %v2258 = vpack.c.b16 %v2042, %v2038
    %v2259 = vpack.c.b16 %v2043, %v2039
    %v2260 = vpack.c.b16 %v2044, %v2040
    %v2261 = vpack.c.b16 %v2049, %v2045
    %v2262 = vpack.c.b16 %v2050, %v2046
    %v2263 = vpack.c.b16 %v2051, %v2047
    %v2264 = vpack.c.b16 %v2052, %v2048
    %v2265 = vpack.c.b16 %v2057, %v2053
    %v2266 = vpack.c.b16 %v2058, %v2054
    %v2267 = vpack.c.b16 %v2059, %v2055
    %v2268 = vpack.c.b16 %v2060, %v2056
    %v2269 = vpack.c.b16 %v2065, %v2061
    %v2270 = vpack.c.b16 %v2066, %v2062
    %v2271 = vpack.c.b16 %v2067, %v2063
    %v2272 = vpack.c.b16 %v2068, %v2064
    %v2273 = vpack.c.b16 %v2073, %v2069
    %v2274 = vpack.c.b16 %v2074, %v2070
    %v2275 = vpack.c.b16 %v2075, %v2071
    %v2276 = vpack.c.b16 %v2076, %v2072
    %v2277 = vpack.c.b16 %v2081, %v2077
    %v2278 = vpack.c.b16 %v2082, %v2078
    %v2279 = vpack.c.b16 %v2083, %v2079
    %v2280 = vpack.c.b16 %v2084, %v2080
    %v2281 = vpack.c.b16 %v2089, %v2085
    %v2282 = vpack.c.b16 %v2090, %v2086
    %v2283 = vpack.c.b16 %v2091, %v2087
    %v2284 = vpack.c.b16 %v2092, %v2088
    %v2285 = vpack.c.b16 %v2097, %v2093
    %v2286 = vpack.c.b16 %v2098, %v2094
    %v2287 = vpack.c.b16 %v2099, %v2095
    %v2288 = vpack.c.b16 %v2100, %v2096
    %v2289 = vpack.c.b16 %v2105, %v2101
    %v2290 = vpack.c.b16 %v2106, %v2102
    %v2291 = vpack.c.b16 %v2107, %v2103
    %v2292 = vpack.c.b16 %v2108, %v2104
    %v2293 = vpack.c.b16 %v2113, %v2109
    %v2294 = vpack.c.b16 %v2114, %v2110
    %v2295 = vpack.c.b16 %v2115, %v2111
    %v2296 = vpack.c.b16 %v2116, %v2112
    %v2297 = vpack.c.b16 %v2121, %v2117
    %v2298 = vpack.c.b16 %v2122, %v2118
    %v2299 = vpack.c.b16 %v2123, %v2119
    %v2300 = vpack.c.b16 %v2124, %v2120
    %v2301 = vpack.c.b16 %v2129, %v2125
    %v2302 = vpack.c.b16 %v2130, %v2126
    %v2303 = vpack.c.b16 %v2131, %v2127
    %v2304 = vpack.c.b16 %v2132, %v2128
    %v2305 = vpack.c.b16 %v2137, %v2133
    %v2306 = vpack.c.b16 %v2138, %v2134
    %v2307 = vpack.c.b16 %v2139, %v2135
    %v2308 = vpack.c.b16 %v2140, %v2136
    %v2309 = vpack.c.b16 %v2145, %v2141
    %v2310 = vpack.c.b16 %v2146, %v2142
    %v2311 = vpack.c.b16 %v2147, %v2143
    %v2312 = vpack.c.b16 %v2148, %v2144
    %v2313 = vpack.c.b16 %v2153, %v2149
    %v2314 = vpack.c.b16 %v2154, %v2150
    %v2315 = vpack.c.b16 %v2155, %v2151
    %v2316 = vpack.c.b16 %v2156, %v2152
    %v2317 = vpack.c.b16 %v2161, %v2157
    %v2318 = vpack.c.b16 %v2162, %v2158
    %v2319 = vpack.c.b16 %v2163, %v2159
    %v2320 = vpack.c.b16 %v2164, %v2160
    %v2321 = vpack.c.b16 %v2169, %v2165
    %v2322 = vpack.c.b16 %v2170, %v2166
    %v2323 = vpack.c.b16 %v2171, %v2167
    %v2324 = vpack.c.b16 %v2172, %v2168
    %v2325 = vpack.c.b16 %v2177, %v2173
    %v2326 = vpack.c.b16 %v2178, %v2174
    %v2327 = vpack.c.b16 %v2179, %v2175
    %v2328 = vpack.c.b16 %v2180, %v2176
    %v2329 = vpack.c.b16 %v2185, %v2181
    %v2330 = vpack.c.b16 %v2186, %v2182
    %v2331 = vpack.c.b16 %v2187, %v2183
    %v2332 = vpack.c.b16 %v2188, %v2184
    %v2333 = vpack.c.b16 %v2193, %v2189
    %v2334 = vpack.c.b16 %v2194, %v2190
    %v2335 = vpack.c.b16 %v2195, %v2191
    %v2336 = vpack.c.b16 %v2196, %v2192
    %v2337 = vpack.c.b16 %v2201, %v2197
    %v2338 = vpack.c.b16 %v2202, %v2198
    %v2339 = vpack.c.b16 %v2203, %v2199
    %v2340 = vpack.c.b16 %v2204, %v2200
    %v2341 = vpack.c.b16 %v2209, %v2205
    %v2342 = vpack.c.b16 %v2210, %v2206
    %v2343 = vpack.c.b16 %v2211, %v2207
    %v2344 = vpack.c.b16 %v2212, %v2208
    %v2345 = vpack.c.b16 %v2217, %v2213
    %v2346 = vpack.c.b16 %v2218, %v2214
    %v2347 = vpack.c.b16 %v2219, %v2215
    %v2348 = vpack.c.b16 %v2220, %v2216
    %2477 = vmatprep.subr.bf16.mxu0 %v2222
    %2478 = vmatpush1.bf16.msra.mxu0 %v2221
    %2479 = vmatprep.subr.bf16.mxu0 %v2226
    %2480 = vmatpush1.bf16.msra.mxu0 %v2225
    %2481 = vmatprep.subr.bf16.mxu0 %v2230
    %2482 = vmatpush1.bf16.msra.mxu0 %v2229
    %2483 = vmatprep.subr.bf16.mxu0 %v2234
    %2484 = vmatpush1.bf16.msra.mxu0 %v2233
    %2485 = vmatprep.subr.bf16.mxu0 %v2238
    %2486 = vmatpush1.bf16.msra.mxu0 %v2237
    %2487 = vmatprep.subr.bf16.mxu0 %v2242
    %2488 = vmatpush1.bf16.msra.mxu0 %v2241
    %2489 = vmatprep.subr.bf16.mxu0 %v2246
    %2490 = vmatpush1.bf16.msra.mxu0 %v2245
    %2491 = vmatprep.subr.bf16.mxu0 %v2250
    %2492 = vmatpush1.bf16.msra.mxu0 %v2249
    %2493 = vmatprep.subr.bf16.mxu0 %v2254
    %2494 = vmatpush1.bf16.msra.mxu0 %v2253
    %2495 = vmatprep.subr.bf16.mxu0 %v2258
    %2496 = vmatpush1.bf16.msra.mxu0 %v2257
    %2497 = vmatprep.subr.bf16.mxu0 %v2262
    %2498 = vmatpush1.bf16.msra.mxu0 %v2261
    %2499 = vmatprep.subr.bf16.mxu0 %v2266
    %2500 = vmatpush1.bf16.msra.mxu0 %v2265
    %2501 = vmatprep.subr.bf16.mxu0 %v2270
    %2502 = vmatpush1.bf16.msra.mxu0 %v2269
    %2503 = vmatprep.subr.bf16.mxu0 %v2274
    %2504 = vmatpush1.bf16.msra.mxu0 %v2273
    %2505 = vmatprep.subr.bf16.mxu0 %v2278
    %2506 = vmatpush1.bf16.msra.mxu0 %v2277
    %2507 = vmatprep.subr.bf16.mxu0 %v2282
    %2508 = vmatpush1.bf16.msra.mxu0 %v2281
    %2509 = vmatprep.mubr.bf16.mxu0 %v1684
    %2510 = vmatmul.mubr.bf16.gmra.mrb[0].mxu0 %v1683
    %v2511 = vpop.f32.mrb[0].mxu0
    %v2512 = vadd.f32 %v1820, %v2511
    %v2513 = vpop.f32.mrb[0].mxu0
    %v2514 = vadd.f32 %v1824, %v2513
    %v2515 = vpop.f32.mrb[0].mxu0
    %v2516 = vpop.f32.mrb[0].mxu0
    %2517 = vdwg.mxu0
    %2518 = vmatprep.subr.bf16.mxu0 %v2286
    %2519 = vmatpush1.bf16.msra.mxu0 %v2285
    %2520 = vmatprep.subr.bf16.mxu0 %v2290
    %2521 = vmatpush1.bf16.msra.mxu0 %v2289
    %2522 = vmatprep.subr.bf16.mxu0 %v2294
    %2523 = vmatpush1.bf16.msra.mxu0 %v2293
    %2524 = vmatprep.subr.bf16.mxu0 %v2298
    %2525 = vmatpush1.bf16.msra.mxu0 %v2297
    %2526 = vmatprep.subr.bf16.mxu0 %v2302
    %2527 = vmatpush1.bf16.msra.mxu0 %v2301
    %2528 = vmatprep.subr.bf16.mxu0 %v2306
    %2529 = vmatpush1.bf16.msra.mxu0 %v2305
    %2530 = vmatprep.subr.bf16.mxu0 %v2310
    %2531 = vmatpush1.bf16.msra.mxu0 %v2309
    %2532 = vmatprep.subr.bf16.mxu0 %v2314
    %2533 = vmatpush1.bf16.msra.mxu0 %v2313
    %2534 = vmatprep.subr.bf16.mxu0 %v2318
    %2535 = vmatpush1.bf16.msra.mxu0 %v2317
    %2536 = vmatprep.subr.bf16.mxu0 %v2322
    %2537 = vmatpush1.bf16.msra.mxu0 %v2321
    %2538 = vmatprep.subr.bf16.mxu0 %v2326
    %2539 = vmatpush1.bf16.msra.mxu0 %v2325
    %2540 = vmatprep.subr.bf16.mxu0 %v2330
    %2541 = vmatpush1.bf16.msra.mxu0 %v2329
    %2542 = vmatprep.subr.bf16.mxu0 %v2334
    %2543 = vmatpush1.bf16.msra.mxu0 %v2333
    %2544 = vmatprep.subr.bf16.mxu0 %v2338
    %2545 = vmatpush1.bf16.msra.mxu0 %v2337
    %2546 = vmatprep.subr.bf16.mxu0 %v2342
    %2547 = vmatpush1.bf16.msra.mxu0 %v2341
    %2548 = vmatprep.subr.bf16.mxu0 %v2346
    %2549 = vmatpush1.bf16.msra.mxu0 %v2345
    %2550 = vmatprep.mubr.bf16.mxu0 %v1686
    %2551 = vmatmul.mubr.bf16.gmra.mrb[0].mxu0 %v1685
    %v2552 = vpop.f32.mrb[0].mxu0
    %v2553 = vadd.f32 %v2512, %v2552
    %v2554 = vpop.f32.mrb[0].mxu0
    %v2555 = vadd.f32 %v2514, %v2554
    %v2556 = vpop.f32.mrb[0].mxu0
    %v2557 = vpop.f32.mrb[0].mxu0
    %2558 = vdwg.mxu0
    %2559 = vmatprep.subr.bf16.mxu0 %v2224
    %2560 = vmatpush1.bf16.msra.mxu0 %v2223
    %2561 = vmatprep.subr.bf16.mxu0 %v2228
    %2562 = vmatpush1.bf16.msra.mxu0 %v2227
    %2563 = vmatprep.subr.bf16.mxu0 %v2232
    %2564 = vmatpush1.bf16.msra.mxu0 %v2231
    %2565 = vmatprep.subr.bf16.mxu0 %v2236
    %2566 = vmatpush1.bf16.msra.mxu0 %v2235
    %2567 = vmatprep.subr.bf16.mxu0 %v2240
    %2568 = vmatpush1.bf16.msra.mxu0 %v2239
    %2569 = vmatprep.subr.bf16.mxu0 %v2244
    %2570 = vmatpush1.bf16.msra.mxu0 %v2243
    %2571 = vmatprep.subr.bf16.mxu0 %v2248
    %2572 = vmatpush1.bf16.msra.mxu0 %v2247
    %2573 = vmatprep.subr.bf16.mxu0 %v2252
    %2574 = vmatpush1.bf16.msra.mxu0 %v2251
    %2575 = vmatprep.subr.bf16.mxu0 %v2256
    %2576 = vmatpush1.bf16.msra.mxu0 %v2255
    %2577 = vmatprep.subr.bf16.mxu0 %v2260
    %2578 = vmatpush1.bf16.msra.mxu0 %v2259
    %2579 = vmatprep.subr.bf16.mxu0 %v2264
    %2580 = vmatpush1.bf16.msra.mxu0 %v2263
    %2581 = vmatprep.subr.bf16.mxu0 %v2268
    %2582 = vmatpush1.bf16.msra.mxu0 %v2267
    %2583 = vmatprep.subr.bf16.mxu0 %v2272
    %2584 = vmatpush1.bf16.msra.mxu0 %v2271
    %2585 = vmatprep.subr.bf16.mxu0 %v2276
    %2586 = vmatpush1.bf16.msra.mxu0 %v2275
    %2587 = vmatprep.subr.bf16.mxu0 %v2280
    %2588 = vmatpush1.bf16.msra.mxu0 %v2279
    %2589 = vmatprep.subr.bf16.mxu0 %v2284
    %2590 = vmatpush1.bf16.msra.mxu0 %v2283
    %2591 = vmatprep.mubr.bf16.mxu0 %v1684
    %2592 = vmatmul.mubr.bf16.gmra.mrb[0].mxu0 %v1683
    %v2593 = vpop.f32.mrb[0].mxu0
    %v2594 = vadd.f32 %v1828, %v2593
    %v2595 = vpop.f32.mrb[0].mxu0
    %v2596 = vadd.f32 %v1832, %v2595
    %v2597 = vpop.f32.mrb[0].mxu0
    %v2598 = vpop.f32.mrb[0].mxu0
    %2599 = vdwg.mxu0
    %2600 = vmatprep.subr.bf16.mxu0 %v2288
    %2601 = vmatpush1.bf16.msra.mxu0 %v2287
    %2602 = vmatprep.subr.bf16.mxu0 %v2292
    %2603 = vmatpush1.bf16.msra.mxu0 %v2291
    %2604 = vmatprep.subr.bf16.mxu0 %v2296
    %2605 = vmatpush1.bf16.msra.mxu0 %v2295
    %2606 = vmatprep.subr.bf16.mxu0 %v2300
    %2607 = vmatpush1.bf16.msra.mxu0 %v2299
    %2608 = vmatprep.subr.bf16.mxu0 %v2304
    %2609 = vmatpush1.bf16.msra.mxu0 %v2303
    %2610 = vmatprep.subr.bf16.mxu0 %v2308
    %2611 = vmatpush1.bf16.msra.mxu0 %v2307
    %2612 = vmatprep.subr.bf16.mxu0 %v2312
    %2613 = vmatpush1.bf16.msra.mxu0 %v2311
    %2614 = vmatprep.subr.bf16.mxu0 %v2316
    %2615 = vmatpush1.bf16.msra.mxu0 %v2315
    %2616 = vmatprep.subr.bf16.mxu0 %v2320
    %2617 = vmatpush1.bf16.msra.mxu0 %v2319
    %2618 = vmatprep.subr.bf16.mxu0 %v2324
    %2619 = vmatpush1.bf16.msra.mxu0 %v2323
    %2620 = vmatprep.subr.bf16.mxu0 %v2328
    %2621 = vmatpush1.bf16.msra.mxu0 %v2327
    %2622 = vmatprep.subr.bf16.mxu0 %v2332
    %2623 = vmatpush1.bf16.msra.mxu0 %v2331
    %2624 = vmatprep.subr.bf16.mxu0 %v2336
    %2625 = vmatpush1.bf16.msra.mxu0 %v2335
    %2626 = vmatprep.subr.bf16.mxu0 %v2340
    %2627 = vmatpush1.bf16.msra.mxu0 %v2339
    %2628 = vmatprep.subr.bf16.mxu0 %v2344
    %2629 = vmatpush1.bf16.msra.mxu0 %v2343
    %2630 = vmatprep.subr.bf16.mxu0 %v2348
    %2631 = vmatpush1.bf16.msra.mxu0 %v2347
    %2632 = vmatprep.mubr.bf16.mxu0 %v1686
    %2633 = vmatmul.mubr.bf16.gmra.mrb[0].mxu0 %v1685
    %v2634 = vpop.f32.mrb[0].mxu0
    %v2635 = vadd.f32 %v2594, %v2634
    %v2636 = vpop.f32.mrb[0].mxu0
    %v2637 = vadd.f32 %v2596, %v2636
    %v2638 = vpop.f32.mrb[0].mxu0
    %v2639 = vpop.f32.mrb[0].mxu0
    %2640 = vdwg.mxu0
    %vm2641 = vcmp.gt.f32.partialorder %v2553, 0.0
    %vm2642 = vcmp.gt.f32.partialorder %v2555, 0.0
    %vm2643 = vcmp.gt.f32.partialorder %v2635, 0.0
    %vm2644 = vcmp.gt.f32.partialorder %v2637, 0.0
    %v2645 = vmin.f32 %v2553, 0.0
    %v2646 = vmin.f32 %v2555, 0.0
    %v2647 = vmin.f32 %v2635, 0.0
    %v2648 = vmin.f32 %v2637, 0.0
    %v2649 = vmul.f32 %v2645, 1.442695
    %v2650 = vpow.pop %v2649
    %v2651 = vmul.f32 %v2646, 1.442695
    %v2652 = vpow.pop %v2651
    %v2653 = vmul.f32 %v2647, 1.442695
    %v2654 = vpow.pop %v2653
    %v2655 = vmul.f32 %v2648, 1.442695
    %v2656 = vpow.pop %v2655
    %v2657 = vsub.f32 %v2650, 1.0
    %v2658 = vsub.f32 %v2652, 1.0
    %v2659 = vsub.f32 %v2654, 1.0
    %v2660 = vsub.f32 %v2656, 1.0
    %v2661 = vmul.f32 %v2657, 1.6732632
    %v2662 = vmul.f32 %v2658, 1.6732632
    %v2663 = vmul.f32 %v2659, 1.6732632
    %v2664 = vmul.f32 %v2660, 1.6732632
    %v2665 = vsel %vm2641, %v2553, %v2661
    %v2666 = vsel %vm2642, %v2555, %v2662
    %v2667 = vsel %vm2643, %v2635, %v2663
    %v2668 = vsel %vm2644, %v2637, %v2664
    %v2669 = vmul.f32 %v2665, 1.050701
    %v2670 = vmul.f32 %v2666, 1.050701
    %v2671 = vmul.f32 %v2667, 1.050701
    %v2672 = vmul.f32 %v2668, 1.050701
    %v2673 = vpack.c.bf16 %v2669, %v2669
    %v2674 = vpack.c.bf16 %v2670, %v2670
    %v2675 = vpack.c.bf16 %v2671, %v2671
    %v2676 = vpack.c.bf16 %v2672, %v2672
    %v2677 = vld [vmem:[#allocation7] sm:$0xff]
    %v2678 = vld [vmem:[#allocation7 + $0x8] sm:$0xff]
    %v2679 = vld [vmem:[#allocation7 + $0x10] sm:$0xff]
    %v2680 = vld [vmem:[#allocation7 + $0x18] sm:$0xff]
    %v2681 = vld [vmem:[#allocation7 + $0x20] sm:$0xff]
    %v2682 = vld [vmem:[#allocation7 + $0x28] sm:$0xff]
    %v2683 = vld [vmem:[#allocation7 + $0x30] sm:$0xff]
    %v2684 = vld [vmem:[#allocation7 + $0x38] sm:$0xff]
    %v2685 = vld [vmem:[#allocation7 + $0x40] sm:$0xff]
    %v2686 = vld [vmem:[#allocation7 + $0x48] sm:$0xff]
    %v2687 = vld [vmem:[#allocation7 + $0x50] sm:$0xff]
    %v2688 = vld [vmem:[#allocation7 + $0x58] sm:$0xff]
    %v2689 = vld [vmem:[#allocation7 + $0x60] sm:$0xff]
    %v2690 = vld [vmem:[#allocation7 + $0x68] sm:$0xff]
    %v2691 = vld [vmem:[#allocation7 + $0x70] sm:$0xff]
    %v2692 = vld [vmem:[#allocation7 + $0x78] sm:$0xff]
    %v2693 = vld [vmem:[#allocation7 + $0x80] sm:$0xff]
    %v2694 = vld [vmem:[#allocation7 + $0x88] sm:$0xff]
    %v2695 = vld [vmem:[#allocation7 + $0x90] sm:$0xff]
    %v2696 = vld [vmem:[#allocation7 + $0x98] sm:$0xff]
    %v2697 = vld [vmem:[#allocation7 + $0xa0] sm:$0xff]
    %v2698 = vld [vmem:[#allocation7 + $0xa8] sm:$0xff]
    %v2699 = vld [vmem:[#allocation7 + $0xb0] sm:$0xff]
    %v2700 = vld [vmem:[#allocation7 + $0xb8] sm:$0xff]
    %v2701 = vld [vmem:[#allocation7 + $0xc0] sm:$0xff]
    %v2702 = vld [vmem:[#allocation7 + $0xc8] sm:$0xff]
    %v2703 = vld [vmem:[#allocation7 + $0xd0] sm:$0xff]
    %v2704 = vld [vmem:[#allocation7 + $0xd8] sm:$0xff]
    %v2705 = vld [vmem:[#allocation7 + $0xe0] sm:$0xff]
    %v2706 = vld [vmem:[#allocation7 + $0xe8] sm:$0xff]
    %v2707 = vld [vmem:[#allocation7 + $0xf0] sm:$0xff]
    %v2708 = vld [vmem:[#allocation7 + $0xf8] sm:$0xff]
    %v2709 = vld [vmem:[#allocation7 + $0x100] sm:$0xff]
    %v2710 = vld [vmem:[#allocation7 + $0x108] sm:$0xff]
    %v2711 = vld [vmem:[#allocation7 + $0x110] sm:$0xff]
    %v2712 = vld [vmem:[#allocation7 + $0x118] sm:$0xff]
    %v2713 = vld [vmem:[#allocation7 + $0x120] sm:$0xff]
    %v2714 = vld [vmem:[#allocation7 + $0x128] sm:$0xff]
    %v2715 = vld [vmem:[#allocation7 + $0x130] sm:$0xff]
    %v2716 = vld [vmem:[#allocation7 + $0x138] sm:$0xff]
    %v2717 = vld [vmem:[#allocation7 + $0x140] sm:$0xff]
    %v2718 = vld [vmem:[#allocation7 + $0x148] sm:$0xff]
    %v2719 = vld [vmem:[#allocation7 + $0x150] sm:$0xff]
    %v2720 = vld [vmem:[#allocation7 + $0x158] sm:$0xff]
    %v2721 = vld [vmem:[#allocation7 + $0x160] sm:$0xff]
    %v2722 = vld [vmem:[#allocation7 + $0x168] sm:$0xff]
    %v2723 = vld [vmem:[#allocation7 + $0x170] sm:$0xff]
    %v2724 = vld [vmem:[#allocation7 + $0x178] sm:$0xff]
    %v2725 = vld [vmem:[#allocation7 + $0x180] sm:$0xff]
    %v2726 = vld [vmem:[#allocation7 + $0x188] sm:$0xff]
    %v2727 = vld [vmem:[#allocation7 + $0x190] sm:$0xff]
    %v2728 = vld [vmem:[#allocation7 + $0x198] sm:$0xff]
    %v2729 = vld [vmem:[#allocation7 + $0x1a0] sm:$0xff]
    %v2730 = vld [vmem:[#allocation7 + $0x1a8] sm:$0xff]
    %v2731 = vld [vmem:[#allocation7 + $0x1b0] sm:$0xff]
    %v2732 = vld [vmem:[#allocation7 + $0x1b8] sm:$0xff]
    %v2733 = vld [vmem:[#allocation7 + $0x1c0] sm:$0xff]
    %v2734 = vld [vmem:[#allocation7 + $0x1c8] sm:$0xff]
    %v2735 = vld [vmem:[#allocation7 + $0x1d0] sm:$0xff]
    %v2736 = vld [vmem:[#allocation7 + $0x1d8] sm:$0xff]
    %v2737 = vld [vmem:[#allocation7 + $0x1e0] sm:$0xff]
    %v2738 = vld [vmem:[#allocation7 + $0x1e8] sm:$0xff]
    %v2739 = vld [vmem:[#allocation7 + $0x1f0] sm:$0xff]
    %v2740 = vld [vmem:[#allocation7 + $0x1f8] sm:$0xff]
    %v2741 = vld [vmem:[#allocation7 + $0x200] sm:$0xff]
    %v2742 = vld [vmem:[#allocation7 + $0x208] sm:$0xff]
    %v2743 = vld [vmem:[#allocation7 + $0x210] sm:$0xff]
    %v2744 = vld [vmem:[#allocation7 + $0x218] sm:$0xff]
    %v2745 = vld [vmem:[#allocation7 + $0x220] sm:$0xff]
    %v2746 = vld [vmem:[#allocation7 + $0x228] sm:$0xff]
    %v2747 = vld [vmem:[#allocation7 + $0x230] sm:$0xff]
    %v2748 = vld [vmem:[#allocation7 + $0x238] sm:$0xff]
    %v2749 = vld [vmem:[#allocation7 + $0x240] sm:$0xff]
    %v2750 = vld [vmem:[#allocation7 + $0x248] sm:$0xff]
    %v2751 = vld [vmem:[#allocation7 + $0x250] sm:$0xff]
    %v2752 = vld [vmem:[#allocation7 + $0x258] sm:$0xff]
    %v2753 = vld [vmem:[#allocation7 + $0x260] sm:$0xff]
    %v2754 = vld [vmem:[#allocation7 + $0x268] sm:$0xff]
    %v2755 = vld [vmem:[#allocation7 + $0x270] sm:$0xff]
    %v2756 = vld [vmem:[#allocation7 + $0x278] sm:$0xff]
    %v2757 = vld [vmem:[#allocation7 + $0x280] sm:$0xff]
    %v2758 = vld [vmem:[#allocation7 + $0x288] sm:$0xff]
    %v2759 = vld [vmem:[#allocation7 + $0x290] sm:$0xff]
    %v2760 = vld [vmem:[#allocation7 + $0x298] sm:$0xff]
    %v2761 = vld [vmem:[#allocation7 + $0x2a0] sm:$0xff]
    %v2762 = vld [vmem:[#allocation7 + $0x2a8] sm:$0xff]
    %v2763 = vld [vmem:[#allocation7 + $0x2b0] sm:$0xff]
    %v2764 = vld [vmem:[#allocation7 + $0x2b8] sm:$0xff]
    %v2765 = vld [vmem:[#allocation7 + $0x2c0] sm:$0xff]
    %v2766 = vld [vmem:[#allocation7 + $0x2c8] sm:$0xff]
    %v2767 = vld [vmem:[#allocation7 + $0x2d0] sm:$0xff]
    %v2768 = vld [vmem:[#allocation7 + $0x2d8] sm:$0xff]
    %v2769 = vld [vmem:[#allocation7 + $0x2e0] sm:$0xff]
    %v2770 = vld [vmem:[#allocation7 + $0x2e8] sm:$0xff]
    %v2771 = vld [vmem:[#allocation7 + $0x2f0] sm:$0xff]
    %v2772 = vld [vmem:[#allocation7 + $0x2f8] sm:$0xff]
    %v2773 = vld [vmem:[#allocation7 + $0x300] sm:$0xff]
    %v2774 = vld [vmem:[#allocation7 + $0x308] sm:$0xff]
    %v2775 = vld [vmem:[#allocation7 + $0x310] sm:$0xff]
    %v2776 = vld [vmem:[#allocation7 + $0x318] sm:$0xff]
    %v2777 = vld [vmem:[#allocation7 + $0x320] sm:$0xff]
    %v2778 = vld [vmem:[#allocation7 + $0x328] sm:$0xff]
    %v2779 = vld [vmem:[#allocation7 + $0x330] sm:$0xff]
    %v2780 = vld [vmem:[#allocation7 + $0x338] sm:$0xff]
    %v2781 = vld [vmem:[#allocation7 + $0x340] sm:$0xff]
    %v2782 = vld [vmem:[#allocation7 + $0x348] sm:$0xff]
    %v2783 = vld [vmem:[#allocation7 + $0x350] sm:$0xff]
    %v2784 = vld [vmem:[#allocation7 + $0x358] sm:$0xff]
    %v2785 = vld [vmem:[#allocation7 + $0x360] sm:$0xff]
    %v2786 = vld [vmem:[#allocation7 + $0x368] sm:$0xff]
    %v2787 = vld [vmem:[#allocation7 + $0x370] sm:$0xff]
    %v2788 = vld [vmem:[#allocation7 + $0x378] sm:$0xff]
    %v2789 = vld [vmem:[#allocation7 + $0x380] sm:$0xff]
    %v2790 = vld [vmem:[#allocation7 + $0x388] sm:$0xff]
    %v2791 = vld [vmem:[#allocation7 + $0x390] sm:$0xff]
    %v2792 = vld [vmem:[#allocation7 + $0x398] sm:$0xff]
    %v2793 = vld [vmem:[#allocation7 + $0x3a0] sm:$0xff]
    %v2794 = vld [vmem:[#allocation7 + $0x3a8] sm:$0xff]
    %v2795 = vld [vmem:[#allocation7 + $0x3b0] sm:$0xff]
    %v2796 = vld [vmem:[#allocation7 + $0x3b8] sm:$0xff]
    %v2797 = vld [vmem:[#allocation7 + $0x3c0] sm:$0xff]
    %v2798 = vld [vmem:[#allocation7 + $0x3c8] sm:$0xff]
    %v2799 = vld [vmem:[#allocation7 + $0x3d0] sm:$0xff]
    %v2800 = vld [vmem:[#allocation7 + $0x3d8] sm:$0xff]
    %v2801 = vld [vmem:[#allocation7 + $0x3e0] sm:$0xff]
    %v2802 = vld [vmem:[#allocation7 + $0x3e8] sm:$0xff]
    %v2803 = vld [vmem:[#allocation7 + $0x3f0] sm:$0xff]
    %v2804 = vld [vmem:[#allocation7 + $0x3f8] sm:$0xff]
    %v2805 = vld [vmem:[%s12] sm:$0xf]
    %v2807 = vlaneseq
    %v2808 = vshrl.u32 %v2807, 7
    %v2809 = vsub.s32 0, %v2808
    %v2810 = vrot.slane %v2805, %v2809
    %v2811 = vlaneseq
    %v2812 = vshrl.u32 %v2811, 7
    %v2813 = vsub.s32 1, %v2812
    %v2814 = vrot.slane %v2805, %v2813
    %v2815 = vlaneseq
    %v2816 = vshrl.u32 %v2815, 7
    %v2817 = vsub.s32 2, %v2816
    %v2818 = vrot.slane %v2805, %v2817
    %v2819 = vlaneseq
    %v2820 = vshrl.u32 %v2819, 7
    %v2821 = vsub.s32 3, %v2820
    %v2822 = vrot.slane %v2805, %v2821
    %v2955 = vunpack.c.l.b16 %v2677
    %v2956 = vunpack.c.h.b16 %v2677
    %v2957 = vunpack.c.l.b16 %v2678
    %v2958 = vunpack.c.h.b16 %v2678
    %v2959 = vunpack.c.l.b16 %v2679
    %v2960 = vunpack.c.h.b16 %v2679
    %v2961 = vunpack.c.l.b16 %v2680
    %v2962 = vunpack.c.h.b16 %v2680
    %v2963 = vunpack.c.l.b16 %v2681
    %v2964 = vunpack.c.h.b16 %v2681
    %v2965 = vunpack.c.l.b16 %v2682
    %v2966 = vunpack.c.h.b16 %v2682
    %v2967 = vunpack.c.l.b16 %v2683
    %v2968 = vunpack.c.h.b16 %v2683
    %v2969 = vunpack.c.l.b16 %v2684
    %v2970 = vunpack.c.h.b16 %v2684
    %v2971 = vunpack.c.l.b16 %v2685
    %v2972 = vunpack.c.h.b16 %v2685
    %v2973 = vunpack.c.l.b16 %v2686
    %v2974 = vunpack.c.h.b16 %v2686
    %v2975 = vunpack.c.l.b16 %v2687
    %v2976 = vunpack.c.h.b16 %v2687
    %v2977 = vunpack.c.l.b16 %v2688
    %v2978 = vunpack.c.h.b16 %v2688
    %v2979 = vunpack.c.l.b16 %v2689
    %v2980 = vunpack.c.h.b16 %v2689
    %v2981 = vunpack.c.l.b16 %v2690
    %v2982 = vunpack.c.h.b16 %v2690
    %v2983 = vunpack.c.l.b16 %v2691
    %v2984 = vunpack.c.h.b16 %v2691
    %v2985 = vunpack.c.l.b16 %v2692
    %v2986 = vunpack.c.h.b16 %v2692
    %v2987 = vunpack.c.l.b16 %v2693
    %v2988 = vunpack.c.h.b16 %v2693
    %v2989 = vunpack.c.l.b16 %v2694
    %v2990 = vunpack.c.h.b16 %v2694
    %v2991 = vunpack.c.l.b16 %v2695
    %v2992 = vunpack.c.h.b16 %v2695
    %v2993 = vunpack.c.l.b16 %v2696
    %v2994 = vunpack.c.h.b16 %v2696
    %v2995 = vunpack.c.l.b16 %v2697
    %v2996 = vunpack.c.h.b16 %v2697
    %v2997 = vunpack.c.l.b16 %v2698
    %v2998 = vunpack.c.h.b16 %v2698
    %v2999 = vunpack.c.l.b16 %v2699
    %v3000 = vunpack.c.h.b16 %v2699
    %v3001 = vunpack.c.l.b16 %v2700
    %v3002 = vunpack.c.h.b16 %v2700
    %v3003 = vunpack.c.l.b16 %v2701
    %v3004 = vunpack.c.h.b16 %v2701
    %v3005 = vunpack.c.l.b16 %v2702
    %v3006 = vunpack.c.h.b16 %v2702
    %v3007 = vunpack.c.l.b16 %v2703
    %v3008 = vunpack.c.h.b16 %v2703
    %v3009 = vunpack.c.l.b16 %v2704
    %v3010 = vunpack.c.h.b16 %v2704
    %v3011 = vunpack.c.l.b16 %v2705
    %v3012 = vunpack.c.h.b16 %v2705
    %v3013 = vunpack.c.l.b16 %v2706
    %v3014 = vunpack.c.h.b16 %v2706
    %v3015 = vunpack.c.l.b16 %v2707
    %v3016 = vunpack.c.h.b16 %v2707
    %v3017 = vunpack.c.l.b16 %v2708
    %v3018 = vunpack.c.h.b16 %v2708
    %v3019 = vunpack.c.l.b16 %v2709
    %v3020 = vunpack.c.h.b16 %v2709
    %v3021 = vunpack.c.l.b16 %v2710
    %v3022 = vunpack.c.h.b16 %v2710
    %v3023 = vunpack.c.l.b16 %v2711
    %v3024 = vunpack.c.h.b16 %v2711
    %v3025 = vunpack.c.l.b16 %v2712
    %v3026 = vunpack.c.h.b16 %v2712
    %v3027 = vunpack.c.l.b16 %v2713
    %v3028 = vunpack.c.h.b16 %v2713
    %v3029 = vunpack.c.l.b16 %v2714
    %v3030 = vunpack.c.h.b16 %v2714
    %v3031 = vunpack.c.l.b16 %v2715
    %v3032 = vunpack.c.h.b16 %v2715
    %v3033 = vunpack.c.l.b16 %v2716
    %v3034 = vunpack.c.h.b16 %v2716
    %v3035 = vunpack.c.l.b16 %v2717
    %v3036 = vunpack.c.h.b16 %v2717
    %v3037 = vunpack.c.l.b16 %v2718
    %v3038 = vunpack.c.h.b16 %v2718
    %v3039 = vunpack.c.l.b16 %v2719
    %v3040 = vunpack.c.h.b16 %v2719
    %v3041 = vunpack.c.l.b16 %v2720
    %v3042 = vunpack.c.h.b16 %v2720
    %v3043 = vunpack.c.l.b16 %v2721
    %v3044 = vunpack.c.h.b16 %v2721
    %v3045 = vunpack.c.l.b16 %v2722
    %v3046 = vunpack.c.h.b16 %v2722
    %v3047 = vunpack.c.l.b16 %v2723
    %v3048 = vunpack.c.h.b16 %v2723
    %v3049 = vunpack.c.l.b16 %v2724
    %v3050 = vunpack.c.h.b16 %v2724
    %v3051 = vunpack.c.l.b16 %v2725
    %v3052 = vunpack.c.h.b16 %v2725
    %v3053 = vunpack.c.l.b16 %v2726
    %v3054 = vunpack.c.h.b16 %v2726
    %v3055 = vunpack.c.l.b16 %v2727
    %v3056 = vunpack.c.h.b16 %v2727
    %v3057 = vunpack.c.l.b16 %v2728
    %v3058 = vunpack.c.h.b16 %v2728
    %v3059 = vunpack.c.l.b16 %v2729
    %v3060 = vunpack.c.h.b16 %v2729
    %v3061 = vunpack.c.l.b16 %v2730
    %v3062 = vunpack.c.h.b16 %v2730
    %v3063 = vunpack.c.l.b16 %v2731
    %v3064 = vunpack.c.h.b16 %v2731
    %v3065 = vunpack.c.l.b16 %v2732
    %v3066 = vunpack.c.h.b16 %v2732
    %v3067 = vunpack.c.l.b16 %v2733
    %v3068 = vunpack.c.h.b16 %v2733
    %v3069 = vunpack.c.l.b16 %v2734
    %v3070 = vunpack.c.h.b16 %v2734
    %v3071 = vunpack.c.l.b16 %v2735
    %v3072 = vunpack.c.h.b16 %v2735
    %v3073 = vunpack.c.l.b16 %v2736
    %v3074 = vunpack.c.h.b16 %v2736
    %v3075 = vunpack.c.l.b16 %v2737
    %v3076 = vunpack.c.h.b16 %v2737
    %v3077 = vunpack.c.l.b16 %v2738
    %v3078 = vunpack.c.h.b16 %v2738
    %v3079 = vunpack.c.l.b16 %v2739
    %v3080 = vunpack.c.h.b16 %v2739
    %v3081 = vunpack.c.l.b16 %v2740
    %v3082 = vunpack.c.h.b16 %v2740
    %v3083 = vunpack.c.l.b16 %v2741
    %v3084 = vunpack.c.h.b16 %v2741
    %v3085 = vunpack.c.l.b16 %v2742
    %v3086 = vunpack.c.h.b16 %v2742
    %v3087 = vunpack.c.l.b16 %v2743
    %v3088 = vunpack.c.h.b16 %v2743
    %v3089 = vunpack.c.l.b16 %v2744
    %v3090 = vunpack.c.h.b16 %v2744
    %v3091 = vunpack.c.l.b16 %v2745
    %v3092 = vunpack.c.h.b16 %v2745
    %v3093 = vunpack.c.l.b16 %v2746
    %v3094 = vunpack.c.h.b16 %v2746
    %v3095 = vunpack.c.l.b16 %v2747
    %v3096 = vunpack.c.h.b16 %v2747
    %v3097 = vunpack.c.l.b16 %v2748
    %v3098 = vunpack.c.h.b16 %v2748
    %v3099 = vunpack.c.l.b16 %v2749
    %v3100 = vunpack.c.h.b16 %v2749
    %v3101 = vunpack.c.l.b16 %v2750
    %v3102 = vunpack.c.h.b16 %v2750
    %v3103 = vunpack.c.l.b16 %v2751
    %v3104 = vunpack.c.h.b16 %v2751
    %v3105 = vunpack.c.l.b16 %v2752
    %v3106 = vunpack.c.h.b16 %v2752
    %v3107 = vunpack.c.l.b16 %v2753
    %v3108 = vunpack.c.h.b16 %v2753
    %v3109 = vunpack.c.l.b16 %v2754
    %v3110 = vunpack.c.h.b16 %v2754
    %v3111 = vunpack.c.l.b16 %v2755
    %v3112 = vunpack.c.h.b16 %v2755
    %v3113 = vunpack.c.l.b16 %v2756
    %v3114 = vunpack.c.h.b16 %v2756
    %v3115 = vunpack.c.l.b16 %v2757
    %v3116 = vunpack.c.h.b16 %v2757
    %v3117 = vunpack.c.l.b16 %v2758
    %v3118 = vunpack.c.h.b16 %v2758
    %v3119 = vunpack.c.l.b16 %v2759
    %v3120 = vunpack.c.h.b16 %v2759
    %v3121 = vunpack.c.l.b16 %v2760
    %v3122 = vunpack.c.h.b16 %v2760
    %v3123 = vunpack.c.l.b16 %v2761
    %v3124 = vunpack.c.h.b16 %v2761
    %v3125 = vunpack.c.l.b16 %v2762
    %v3126 = vunpack.c.h.b16 %v2762
    %v3127 = vunpack.c.l.b16 %v2763
    %v3128 = vunpack.c.h.b16 %v2763
    %v3129 = vunpack.c.l.b16 %v2764
    %v3130 = vunpack.c.h.b16 %v2764
    %v3131 = vunpack.c.l.b16 %v2765
    %v3132 = vunpack.c.h.b16 %v2765
    %v3133 = vunpack.c.l.b16 %v2766
    %v3134 = vunpack.c.h.b16 %v2766
    %v3135 = vunpack.c.l.b16 %v2767
    %v3136 = vunpack.c.h.b16 %v2767
    %v3137 = vunpack.c.l.b16 %v2768
    %v3138 = vunpack.c.h.b16 %v2768
    %v3139 = vunpack.c.l.b16 %v2769
    %v3140 = vunpack.c.h.b16 %v2769
    %v3141 = vunpack.c.l.b16 %v2770
    %v3142 = vunpack.c.h.b16 %v2770
    %v3143 = vunpack.c.l.b16 %v2771
    %v3144 = vunpack.c.h.b16 %v2771
    %v3145 = vunpack.c.l.b16 %v2772
    %v3146 = vunpack.c.h.b16 %v2772
    %v3147 = vunpack.c.l.b16 %v2773
    %v3148 = vunpack.c.h.b16 %v2773
    %v3149 = vunpack.c.l.b16 %v2774
    %v3150 = vunpack.c.h.b16 %v2774
    %v3151 = vunpack.c.l.b16 %v2775
    %v3152 = vunpack.c.h.b16 %v2775
    %v3153 = vunpack.c.l.b16 %v2776
    %v3154 = vunpack.c.h.b16 %v2776
    %v3155 = vunpack.c.l.b16 %v2777
    %v3156 = vunpack.c.h.b16 %v2777
    %v3157 = vunpack.c.l.b16 %v2778
    %v3158 = vunpack.c.h.b16 %v2778
    %v3159 = vunpack.c.l.b16 %v2779
    %v3160 = vunpack.c.h.b16 %v2779
    %v3161 = vunpack.c.l.b16 %v2780
    %v3162 = vunpack.c.h.b16 %v2780
    %v3163 = vunpack.c.l.b16 %v2781
    %v3164 = vunpack.c.h.b16 %v2781
    %v3165 = vunpack.c.l.b16 %v2782
    %v3166 = vunpack.c.h.b16 %v2782
    %v3167 = vunpack.c.l.b16 %v2783
    %v3168 = vunpack.c.h.b16 %v2783
    %v3169 = vunpack.c.l.b16 %v2784
    %v3170 = vunpack.c.h.b16 %v2784
    %v3171 = vunpack.c.l.b16 %v2785
    %v3172 = vunpack.c.h.b16 %v2785
    %v3173 = vunpack.c.l.b16 %v2786
    %v3174 = vunpack.c.h.b16 %v2786
    %v3175 = vunpack.c.l.b16 %v2787
    %v3176 = vunpack.c.h.b16 %v2787
    %v3177 = vunpack.c.l.b16 %v2788
    %v3178 = vunpack.c.h.b16 %v2788
    %v3179 = vunpack.c.l.b16 %v2789
    %v3180 = vunpack.c.h.b16 %v2789
    %v3181 = vunpack.c.l.b16 %v2790
    %v3182 = vunpack.c.h.b16 %v2790
    %v3183 = vunpack.c.l.b16 %v2791
    %v3184 = vunpack.c.h.b16 %v2791
    %v3185 = vunpack.c.l.b16 %v2792
    %v3186 = vunpack.c.h.b16 %v2792
    %v3187 = vunpack.c.l.b16 %v2793
    %v3188 = vunpack.c.h.b16 %v2793
    %v3189 = vunpack.c.l.b16 %v2794
    %v3190 = vunpack.c.h.b16 %v2794
    %v3191 = vunpack.c.l.b16 %v2795
    %v3192 = vunpack.c.h.b16 %v2795
    %v3193 = vunpack.c.l.b16 %v2796
    %v3194 = vunpack.c.h.b16 %v2796
    %v3195 = vunpack.c.l.b16 %v2797
    %v3196 = vunpack.c.h.b16 %v2797
    %v3197 = vunpack.c.l.b16 %v2798
    %v3198 = vunpack.c.h.b16 %v2798
    %v3199 = vunpack.c.l.b16 %v2799
    %v3200 = vunpack.c.h.b16 %v2799
    %v3201 = vunpack.c.l.b16 %v2800
    %v3202 = vunpack.c.h.b16 %v2800
    %v3203 = vunpack.c.l.b16 %v2801
    %v3204 = vunpack.c.h.b16 %v2801
    %v3205 = vunpack.c.l.b16 %v2802
    %v3206 = vunpack.c.h.b16 %v2802
    %v3207 = vunpack.c.l.b16 %v2803
    %v3208 = vunpack.c.h.b16 %v2803
    %v3209 = vunpack.c.l.b16 %v2804
    %v3210 = vunpack.c.h.b16 %v2804
    %v3211 = vpack.c.b16 %v2959, %v2955
    %v3212 = vpack.c.b16 %v2960, %v2956
    %v3213 = vpack.c.b16 %v2961, %v2957
    %v3214 = vpack.c.b16 %v2962, %v2958
    %v3215 = vpack.c.b16 %v2967, %v2963
    %v3216 = vpack.c.b16 %v2968, %v2964
    %v3217 = vpack.c.b16 %v2969, %v2965
    %v3218 = vpack.c.b16 %v2970, %v2966
    %v3219 = vpack.c.b16 %v2975, %v2971
    %v3220 = vpack.c.b16 %v2976, %v2972
    %v3221 = vpack.c.b16 %v2977, %v2973
    %v3222 = vpack.c.b16 %v2978, %v2974
    %v3223 = vpack.c.b16 %v2983, %v2979
    %v3224 = vpack.c.b16 %v2984, %v2980
    %v3225 = vpack.c.b16 %v2985, %v2981
    %v3226 = vpack.c.b16 %v2986, %v2982
    %v3227 = vpack.c.b16 %v2991, %v2987
    %v3228 = vpack.c.b16 %v2992, %v2988
    %v3229 = vpack.c.b16 %v2993, %v2989
    %v3230 = vpack.c.b16 %v2994, %v2990
    %v3231 = vpack.c.b16 %v2999, %v2995
    %v3232 = vpack.c.b16 %v3000, %v2996
    %v3233 = vpack.c.b16 %v3001, %v2997
    %v3234 = vpack.c.b16 %v3002, %v2998
    %v3235 = vpack.c.b16 %v3007, %v3003
    %v3236 = vpack.c.b16 %v3008, %v3004
    %v3237 = vpack.c.b16 %v3009, %v3005
    %v3238 = vpack.c.b16 %v3010, %v3006
    %v3239 = vpack.c.b16 %v3015, %v3011
    %v3240 = vpack.c.b16 %v3016, %v3012
    %v3241 = vpack.c.b16 %v3017, %v3013
    %v3242 = vpack.c.b16 %v3018, %v3014
    %v3243 = vpack.c.b16 %v3023, %v3019
    %v3244 = vpack.c.b16 %v3024, %v3020
    %v3245 = vpack.c.b16 %v3025, %v3021
    %v3246 = vpack.c.b16 %v3026, %v3022
    %v3247 = vpack.c.b16 %v3031, %v3027
    %v3248 = vpack.c.b16 %v3032, %v3028
    %v3249 = vpack.c.b16 %v3033, %v3029
    %v3250 = vpack.c.b16 %v3034, %v3030
    %v3251 = vpack.c.b16 %v3039, %v3035
    %v3252 = vpack.c.b16 %v3040, %v3036
    %v3253 = vpack.c.b16 %v3041, %v3037
    %v3254 = vpack.c.b16 %v3042, %v3038
    %v3255 = vpack.c.b16 %v3047, %v3043
    %v3256 = vpack.c.b16 %v3048, %v3044
    %v3257 = vpack.c.b16 %v3049, %v3045
    %v3258 = vpack.c.b16 %v3050, %v3046
    %v3259 = vpack.c.b16 %v3055, %v3051
    %v3260 = vpack.c.b16 %v3056, %v3052
    %v3261 = vpack.c.b16 %v3057, %v3053
    %v3262 = vpack.c.b16 %v3058, %v3054
    %v3263 = vpack.c.b16 %v3063, %v3059
    %v3264 = vpack.c.b16 %v3064, %v3060
    %v3265 = vpack.c.b16 %v3065, %v3061
    %v3266 = vpack.c.b16 %v3066, %v3062
    %v3267 = vpack.c.b16 %v3071, %v3067
    %v3268 = vpack.c.b16 %v3072, %v3068
    %v3269 = vpack.c.b16 %v3073, %v3069
    %v3270 = vpack.c.b16 %v3074, %v3070
    %v3271 = vpack.c.b16 %v3079, %v3075
    %v3272 = vpack.c.b16 %v3080, %v3076
    %v3273 = vpack.c.b16 %v3081, %v3077
    %v3274 = vpack.c.b16 %v3082, %v3078
    %v3275 = vpack.c.b16 %v3087, %v3083
    %v3276 = vpack.c.b16 %v3088, %v3084
    %v3277 = vpack.c.b16 %v3089, %v3085
    %v3278 = vpack.c.b16 %v3090, %v3086
    %v3279 = vpack.c.b16 %v3095, %v3091
    %v3280 = vpack.c.b16 %v3096, %v3092
    %v3281 = vpack.c.b16 %v3097, %v3093
    %v3282 = vpack.c.b16 %v3098, %v3094
    %v3283 = vpack.c.b16 %v3103, %v3099
    %v3284 = vpack.c.b16 %v3104, %v3100
    %v3285 = vpack.c.b16 %v3105, %v3101
    %v3286 = vpack.c.b16 %v3106, %v3102
    %v3287 = vpack.c.b16 %v3111, %v3107
    %v3288 = vpack.c.b16 %v3112, %v3108
    %v3289 = vpack.c.b16 %v3113, %v3109
    %v3290 = vpack.c.b16 %v3114, %v3110
    %v3291 = vpack.c.b16 %v3119, %v3115
    %v3292 = vpack.c.b16 %v3120, %v3116
    %v3293 = vpack.c.b16 %v3121, %v3117
    %v3294 = vpack.c.b16 %v3122, %v3118
    %v3295 = vpack.c.b16 %v3127, %v3123
    %v3296 = vpack.c.b16 %v3128, %v3124
    %v3297 = vpack.c.b16 %v3129, %v3125
    %v3298 = vpack.c.b16 %v3130, %v3126
    %v3299 = vpack.c.b16 %v3135, %v3131
    %v3300 = vpack.c.b16 %v3136, %v3132
    %v3301 = vpack.c.b16 %v3137, %v3133
    %v3302 = vpack.c.b16 %v3138, %v3134
    %v3303 = vpack.c.b16 %v3143, %v3139
    %v3304 = vpack.c.b16 %v3144, %v3140
    %v3305 = vpack.c.b16 %v3145, %v3141
    %v3306 = vpack.c.b16 %v3146, %v3142
    %v3307 = vpack.c.b16 %v3151, %v3147
    %v3308 = vpack.c.b16 %v3152, %v3148
    %v3309 = vpack.c.b16 %v3153, %v3149
    %v3310 = vpack.c.b16 %v3154, %v3150
    %v3311 = vpack.c.b16 %v3159, %v3155
    %v3312 = vpack.c.b16 %v3160, %v3156
    %v3313 = vpack.c.b16 %v3161, %v3157
    %v3314 = vpack.c.b16 %v3162, %v3158
    %v3315 = vpack.c.b16 %v3167, %v3163
    %v3316 = vpack.c.b16 %v3168, %v3164
    %v3317 = vpack.c.b16 %v3169, %v3165
    %v3318 = vpack.c.b16 %v3170, %v3166
    %v3319 = vpack.c.b16 %v3175, %v3171
    %v3320 = vpack.c.b16 %v3176, %v3172
    %v3321 = vpack.c.b16 %v3177, %v3173
    %v3322 = vpack.c.b16 %v3178, %v3174
    %v3323 = vpack.c.b16 %v3183, %v3179
    %v3324 = vpack.c.b16 %v3184, %v3180
    %v3325 = vpack.c.b16 %v3185, %v3181
    %v3326 = vpack.c.b16 %v3186, %v3182
    %v3327 = vpack.c.b16 %v3191, %v3187
    %v3328 = vpack.c.b16 %v3192, %v3188
    %v3329 = vpack.c.b16 %v3193, %v3189
    %v3330 = vpack.c.b16 %v3194, %v3190
    %v3331 = vpack.c.b16 %v3199, %v3195
    %v3332 = vpack.c.b16 %v3200, %v3196
    %v3333 = vpack.c.b16 %v3201, %v3197
    %v3334 = vpack.c.b16 %v3202, %v3198
    %v3335 = vpack.c.b16 %v3207, %v3203
    %v3336 = vpack.c.b16 %v3208, %v3204
    %v3337 = vpack.c.b16 %v3209, %v3205
    %v3338 = vpack.c.b16 %v3210, %v3206
    %3467 = vmatprep.subr.bf16.mxu0 %v3212
    %3468 = vmatpush1.bf16.msra.mxu0 %v3211
    %3469 = vmatprep.subr.bf16.mxu0 %v3216
    %3470 = vmatpush1.bf16.msra.mxu0 %v3215
    %3471 = vmatprep.subr.bf16.mxu0 %v3220
    %3472 = vmatpush1.bf16.msra.mxu0 %v3219
    %3473 = vmatprep.subr.bf16.mxu0 %v3224
    %3474 = vmatpush1.bf16.msra.mxu0 %v3223
    %3475 = vmatprep.subr.bf16.mxu0 %v3228
    %3476 = vmatpush1.bf16.msra.mxu0 %v3227
    %3477 = vmatprep.subr.bf16.mxu0 %v3232
    %3478 = vmatpush1.bf16.msra.mxu0 %v3231
    %3479 = vmatprep.subr.bf16.mxu0 %v3236
    %3480 = vmatpush1.bf16.msra.mxu0 %v3235
    %3481 = vmatprep.subr.bf16.mxu0 %v3240
    %3482 = vmatpush1.bf16.msra.mxu0 %v3239
    %3483 = vmatprep.subr.bf16.mxu0 %v3244
    %3484 = vmatpush1.bf16.msra.mxu0 %v3243
    %3485 = vmatprep.subr.bf16.mxu0 %v3248
    %3486 = vmatpush1.bf16.msra.mxu0 %v3247
    %3487 = vmatprep.subr.bf16.mxu0 %v3252
    %3488 = vmatpush1.bf16.msra.mxu0 %v3251
    %3489 = vmatprep.subr.bf16.mxu0 %v3256
    %3490 = vmatpush1.bf16.msra.mxu0 %v3255
    %3491 = vmatprep.subr.bf16.mxu0 %v3260
    %3492 = vmatpush1.bf16.msra.mxu0 %v3259
    %3493 = vmatprep.subr.bf16.mxu0 %v3264
    %3494 = vmatpush1.bf16.msra.mxu0 %v3263
    %3495 = vmatprep.subr.bf16.mxu0 %v3268
    %3496 = vmatpush1.bf16.msra.mxu0 %v3267
    %3497 = vmatprep.subr.bf16.mxu0 %v3272
    %3498 = vmatpush1.bf16.msra.mxu0 %v3271
    %3499 = vmatprep.mubr.bf16.mxu0 %v2674
    %3500 = vmatmul.mubr.bf16.gmra.mrb[0].mxu0 %v2673
    %v3501 = vpop.f32.mrb[0].mxu0
    %v3502 = vadd.f32 %v2810, %v3501
    %v3503 = vpop.f32.mrb[0].mxu0
    %v3504 = vadd.f32 %v2814, %v3503
    %v3505 = vpop.f32.mrb[0].mxu0
    %v3506 = vpop.f32.mrb[0].mxu0
    %3507 = vdwg.mxu0
    %3508 = vmatprep.subr.bf16.mxu0 %v3276
    %3509 = vmatpush1.bf16.msra.mxu0 %v3275
    %3510 = vmatprep.subr.bf16.mxu0 %v3280
    %3511 = vmatpush1.bf16.msra.mxu0 %v3279
    %3512 = vmatprep.subr.bf16.mxu0 %v3284
    %3513 = vmatpush1.bf16.msra.mxu0 %v3283
    %3514 = vmatprep.subr.bf16.mxu0 %v3288
    %3515 = vmatpush1.bf16.msra.mxu0 %v3287
    %3516 = vmatprep.subr.bf16.mxu0 %v3292
    %3517 = vmatpush1.bf16.msra.mxu0 %v3291
    %3518 = vmatprep.subr.bf16.mxu0 %v3296
    %3519 = vmatpush1.bf16.msra.mxu0 %v3295
    %3520 = vmatprep.subr.bf16.mxu0 %v3300
    %3521 = vmatpush1.bf16.msra.mxu0 %v3299
    %3522 = vmatprep.subr.bf16.mxu0 %v3304
    %3523 = vmatpush1.bf16.msra.mxu0 %v3303
    %3524 = vmatprep.subr.bf16.mxu0 %v3308
    %3525 = vmatpush1.bf16.msra.mxu0 %v3307
    %3526 = vmatprep.subr.bf16.mxu0 %v3312
    %3527 = vmatpush1.bf16.msra.mxu0 %v3311
    %3528 = vmatprep.subr.bf16.mxu0 %v3316
    %3529 = vmatpush1.bf16.msra.mxu0 %v3315
    %3530 = vmatprep.subr.bf16.mxu0 %v3320
    %3531 = vmatpush1.bf16.msra.mxu0 %v3319
    %3532 = vmatprep.subr.bf16.mxu0 %v3324
    %3533 = vmatpush1.bf16.msra.mxu0 %v3323
    %3534 = vmatprep.subr.bf16.mxu0 %v3328
    %3535 = vmatpush1.bf16.msra.mxu0 %v3327
    %3536 = vmatprep.subr.bf16.mxu0 %v3332
    %3537 = vmatpush1.bf16.msra.mxu0 %v3331
    %3538 = vmatprep.subr.bf16.mxu0 %v3336
    %3539 = vmatpush1.bf16.msra.mxu0 %v3335
    %3540 = vmatprep.mubr.bf16.mxu0 %v2676
    %3541 = vmatmul.mubr.bf16.gmra.mrb[0].mxu0 %v2675
    %v3542 = vpop.f32.mrb[0].mxu0
    %v3543 = vadd.f32 %v3502, %v3542
    %v3544 = vpop.f32.mrb[0].mxu0
    %v3545 = vadd.f32 %v3504, %v3544
    %v3546 = vpop.f32.mrb[0].mxu0
    %v3547 = vpop.f32.mrb[0].mxu0
    %3548 = vdwg.mxu0
    %3549 = vmatprep.subr.bf16.mxu0 %v3214
    %3550 = vmatpush1.bf16.msra.mxu0 %v3213
    %3551 = vmatprep.subr.bf16.mxu0 %v3218
    %3552 = vmatpush1.bf16.msra.mxu0 %v3217
    %3553 = vmatprep.subr.bf16.mxu0 %v3222
    %3554 = vmatpush1.bf16.msra.mxu0 %v3221
    %3555 = vmatprep.subr.bf16.mxu0 %v3226
    %3556 = vmatpush1.bf16.msra.mxu0 %v3225
    %3557 = vmatprep.subr.bf16.mxu0 %v3230
    %3558 = vmatpush1.bf16.msra.mxu0 %v3229
    %3559 = vmatprep.subr.bf16.mxu0 %v3234
    %3560 = vmatpush1.bf16.msra.mxu0 %v3233
    %3561 = vmatprep.subr.bf16.mxu0 %v3238
    %3562 = vmatpush1.bf16.msra.mxu0 %v3237
    %3563 = vmatprep.subr.bf16.mxu0 %v3242
    %3564 = vmatpush1.bf16.msra.mxu0 %v3241
    %3565 = vmatprep.subr.bf16.mxu0 %v3246
    %3566 = vmatpush1.bf16.msra.mxu0 %v3245
    %3567 = vmatprep.subr.bf16.mxu0 %v3250
    %3568 = vmatpush1.bf16.msra.mxu0 %v3249
    %3569 = vmatprep.subr.bf16.mxu0 %v3254
    %3570 = vmatpush1.bf16.msra.mxu0 %v3253
    %3571 = vmatprep.subr.bf16.mxu0 %v3258
    %3572 = vmatpush1.bf16.msra.mxu0 %v3257
    %3573 = vmatprep.subr.bf16.mxu0 %v3262
    %3574 = vmatpush1.bf16.msra.mxu0 %v3261
    %3575 = vmatprep.subr.bf16.mxu0 %v3266
    %3576 = vmatpush1.bf16.msra.mxu0 %v3265
    %3577 = vmatprep.subr.bf16.mxu0 %v3270
    %3578 = vmatpush1.bf16.msra.mxu0 %v3269
    %3579 = vmatprep.subr.bf16.mxu0 %v3274
    %3580 = vmatpush1.bf16.msra.mxu0 %v3273
    %3581 = vmatprep.mubr.bf16.mxu0 %v2674
    %3582 = vmatmul.mubr.bf16.gmra.mrb[0].mxu0 %v2673
    %v3583 = vpop.f32.mrb[0].mxu0
    %v3584 = vadd.f32 %v2818, %v3583
    %v3585 = vpop.f32.mrb[0].mxu0
    %v3586 = vadd.f32 %v2822, %v3585
    %v3587 = vpop.f32.mrb[0].mxu0
    %v3588 = vpop.f32.mrb[0].mxu0
    %3589 = vdwg.mxu0
    %3590 = vmatprep.subr.bf16.mxu0 %v3278
    %3591 = vmatpush1.bf16.msra.mxu0 %v3277
    %3592 = vmatprep.subr.bf16.mxu0 %v3282
    %3593 = vmatpush1.bf16.msra.mxu0 %v3281
    %3594 = vmatprep.subr.bf16.mxu0 %v3286
    %3595 = vmatpush1.bf16.msra.mxu0 %v3285
    %3596 = vmatprep.subr.bf16.mxu0 %v3290
    %3597 = vmatpush1.bf16.msra.mxu0 %v3289
    %3598 = vmatprep.subr.bf16.mxu0 %v3294
    %3599 = vmatpush1.bf16.msra.mxu0 %v3293
    %3600 = vmatprep.subr.bf16.mxu0 %v3298
    %3601 = vmatpush1.bf16.msra.mxu0 %v3297
    %3602 = vmatprep.subr.bf16.mxu0 %v3302
    %3603 = vmatpush1.bf16.msra.mxu0 %v3301
    %3604 = vmatprep.subr.bf16.mxu0 %v3306
    %3605 = vmatpush1.bf16.msra.mxu0 %v3305
    %3606 = vmatprep.subr.bf16.mxu0 %v3310
    %3607 = vmatpush1.bf16.msra.mxu0 %v3309
    %3608 = vmatprep.subr.bf16.mxu0 %v3314
    %3609 = vmatpush1.bf16.msra.mxu0 %v3313
    %3610 = vmatprep.subr.bf16.mxu0 %v3318
    %3611 = vmatpush1.bf16.msra.mxu0 %v3317
    %3612 = vmatprep.subr.bf16.mxu0 %v3322
    %3613 = vmatpush1.bf16.msra.mxu0 %v3321
    %3614 = vmatprep.subr.bf16.mxu0 %v3326
    %3615 = vmatpush1.bf16.msra.mxu0 %v3325
    %3616 = vmatprep.subr.bf16.mxu0 %v3330
    %3617 = vmatpush1.bf16.msra.mxu0 %v3329
    %3618 = vmatprep.subr.bf16.mxu0 %v3334
    %3619 = vmatpush1.bf16.msra.mxu0 %v3333
    %3620 = vmatprep.subr.bf16.mxu0 %v3338
    %3621 = vmatpush1.bf16.msra.mxu0 %v3337
    %3622 = vmatprep.mubr.bf16.mxu0 %v2676
    %3623 = vmatmul.mubr.bf16.gmra.mrb[0].mxu0 %v2675
    %v3624 = vpop.f32.mrb[0].mxu0
    %v3625 = vadd.f32 %v3584, %v3624
    %v3626 = vpop.f32.mrb[0].mxu0
    %v3627 = vadd.f32 %v3586, %v3626
    %v3628 = vpop.f32.mrb[0].mxu0
    %v3629 = vpop.f32.mrb[0].mxu0
    %3630 = vdwg.mxu0
    %vm3631 = vcmp.gt.f32.partialorder %v3543, 0.0
    %vm3632 = vcmp.gt.f32.partialorder %v3545, 0.0
    %vm3633 = vcmp.gt.f32.partialorder %v3625, 0.0
    %vm3634 = vcmp.gt.f32.partialorder %v3627, 0.0
    %v3635 = vmin.f32 %v3543, 0.0
    %v3636 = vmin.f32 %v3545, 0.0
    %v3637 = vmin.f32 %v3625, 0.0
    %v3638 = vmin.f32 %v3627, 0.0
    %v3639 = vmul.f32 %v3635, 1.442695
    %v3640 = vpow.pop %v3639
    %v3641 = vmul.f32 %v3636, 1.442695
    %v3642 = vpow.pop %v3641
    %v3643 = vmul.f32 %v3637, 1.442695
    %v3644 = vpow.pop %v3643
    %v3645 = vmul.f32 %v3638, 1.442695
    %v3646 = vpow.pop %v3645
    %v3647 = vsub.f32 %v3640, 1.0
    %v3648 = vsub.f32 %v3642, 1.0
    %v3649 = vsub.f32 %v3644, 1.0
    %v3650 = vsub.f32 %v3646, 1.0
    %v3651 = vmul.f32 %v3647, 1.6732632
    %v3652 = vmul.f32 %v3648, 1.6732632
    %v3653 = vmul.f32 %v3649, 1.6732632
    %v3654 = vmul.f32 %v3650, 1.6732632
    %v3655 = vsel %vm3631, %v3543, %v3651
    %v3656 = vsel %vm3632, %v3545, %v3652
    %v3657 = vsel %vm3633, %v3625, %v3653
    %v3658 = vsel %vm3634, %v3627, %v3654
    %v3659 = vmul.f32 %v3655, 1.050701
    %v3660 = vmul.f32 %v3656, 1.050701
    %v3661 = vmul.f32 %v3657, 1.050701
    %v3662 = vmul.f32 %v3658, 1.050701
    %v3663 = vpack.c.bf16 %v3659, %v3659
    %v3664 = vpack.c.bf16 %v3660, %v3660
    %v3665 = vpack.c.bf16 %v3661, %v3661
    %v3666 = vpack.c.bf16 %v3662, %v3662
    %v3667 = vld [vmem:[%s13] sm:$0xf]
    %v3668 = vld [vmem:[%s13 + $0x4] sm:$0xf]
    %v3669 = vld [vmem:[%s13 + $0x8] sm:$0xf]
    %v3670 = vld [vmem:[%s13 + $0xc] sm:$0xf]
    %v3671 = vld [vmem:[%s13 + $0x10] sm:$0xf]
    %v3672 = vld [vmem:[%s13 + $0x14] sm:$0xf]
    %v3673 = vld [vmem:[%s13 + $0x18] sm:$0xf]
    %v3674 = vld [vmem:[%s13 + $0x1c] sm:$0xf]
    %v3675 = vld [vmem:[%s13 + $0x20] sm:$0xf]
    %v3676 = vld [vmem:[%s13 + $0x24] sm:$0xf]
    %v3677 = vld [vmem:[%s13 + $0x28] sm:$0xf]
    %v3678 = vld [vmem:[%s13 + $0x2c] sm:$0xf]
    %v3679 = vld [vmem:[%s13 + $0x30] sm:$0xf]
    %v3680 = vld [vmem:[%s13 + $0x34] sm:$0xf]
    %v3681 = vld [vmem:[%s13 + $0x38] sm:$0xf]
    %v3682 = vld [vmem:[%s13 + $0x3c] sm:$0xf]
    %v3683 = vld [vmem:[%s13 + $0x40] sm:$0xf]
    %v3684 = vld [vmem:[%s13 + $0x44] sm:$0xf]
    %v3685 = vld [vmem:[%s13 + $0x48] sm:$0xf]
    %v3686 = vld [vmem:[%s13 + $0x4c] sm:$0xf]
    %v3687 = vld [vmem:[%s13 + $0x50] sm:$0xf]
    %v3688 = vld [vmem:[%s13 + $0x54] sm:$0xf]
    %v3689 = vld [vmem:[%s13 + $0x58] sm:$0xf]
    %v3690 = vld [vmem:[%s13 + $0x5c] sm:$0xf]
    %v3691 = vld [vmem:[%s13 + $0x60] sm:$0xf]
    %v3692 = vld [vmem:[%s13 + $0x64] sm:$0xf]
    %v3693 = vld [vmem:[%s13 + $0x68] sm:$0xf]
    %v3694 = vld [vmem:[%s13 + $0x6c] sm:$0xf]
    %v3695 = vld [vmem:[%s13 + $0x70] sm:$0xf]
    %v3696 = vld [vmem:[%s13 + $0x74] sm:$0xf]
    %v3697 = vld [vmem:[%s13 + $0x78] sm:$0xf]
    %v3698 = vld [vmem:[%s13 + $0x7c] sm:$0xf]
    %v3699 = vld [vmem:[%s13 + $0x80] sm:$0xf]
    %v3700 = vld [vmem:[%s13 + $0x84] sm:$0xf]
    %v3701 = vld [vmem:[%s13 + $0x88] sm:$0xf]
    %v3702 = vld [vmem:[%s13 + $0x8c] sm:$0xf]
    %v3703 = vld [vmem:[%s13 + $0x90] sm:$0xf]
    %v3704 = vld [vmem:[%s13 + $0x94] sm:$0xf]
    %v3705 = vld [vmem:[%s13 + $0x98] sm:$0xf]
    %v3706 = vld [vmem:[%s13 + $0x9c] sm:$0xf]
    %v3707 = vld [vmem:[%s13 + $0xa0] sm:$0xf]
    %v3708 = vld [vmem:[%s13 + $0xa4] sm:$0xf]
    %v3709 = vld [vmem:[%s13 + $0xa8] sm:$0xf]
    %v3710 = vld [vmem:[%s13 + $0xac] sm:$0xf]
    %v3711 = vld [vmem:[%s13 + $0xb0] sm:$0xf]
    %v3712 = vld [vmem:[%s13 + $0xb4] sm:$0xf]
    %v3713 = vld [vmem:[%s13 + $0xb8] sm:$0xf]
    %v3714 = vld [vmem:[%s13 + $0xbc] sm:$0xf]
    %v3715 = vld [vmem:[%s13 + $0xc0] sm:$0xf]
    %v3716 = vld [vmem:[%s13 + $0xc4] sm:$0xf]
    %v3717 = vld [vmem:[%s13 + $0xc8] sm:$0xf]
    %v3718 = vld [vmem:[%s13 + $0xcc] sm:$0xf]
    %v3719 = vld [vmem:[%s13 + $0xd0] sm:$0xf]
    %v3720 = vld [vmem:[%s13 + $0xd4] sm:$0xf]
    %v3721 = vld [vmem:[%s13 + $0xd8] sm:$0xf]
    %v3722 = vld [vmem:[%s13 + $0xdc] sm:$0xf]
    %v3723 = vld [vmem:[%s13 + $0xe0] sm:$0xf]
    %v3724 = vld [vmem:[%s13 + $0xe4] sm:$0xf]
    %v3725 = vld [vmem:[%s13 + $0xe8] sm:$0xf]
    %v3726 = vld [vmem:[%s13 + $0xec] sm:$0xf]
    %v3727 = vld [vmem:[%s13 + $0xf0] sm:$0xf]
    %v3728 = vld [vmem:[%s13 + $0xf4] sm:$0xf]
    %v3729 = vld [vmem:[%s13 + $0xf8] sm:$0xf]
    %v3730 = vld [vmem:[%s13 + $0xfc] sm:$0xf]
    %v3731 = vld [vmem:[%s14] sm:$0x1]
    %v3733 = vlaneseq
    %v3734 = vshrl.u32 %v3733, 7
    %v3735 = vsub.s32 0, %v3734
    %v3736 = vrot.slane %v3731, %v3735
    %v3802 = vunpack.c.l.b16 %v3667
    %v3803 = vunpack.c.l.b16 %v3668
    %v3804 = vunpack.c.l.b16 %v3669
    %v3805 = vunpack.c.l.b16 %v3670
    %v3806 = vunpack.c.l.b16 %v3671
    %v3807 = vunpack.c.l.b16 %v3672
    %v3808 = vunpack.c.l.b16 %v3673
    %v3809 = vunpack.c.l.b16 %v3674
    %v3810 = vunpack.c.l.b16 %v3675
    %v3811 = vunpack.c.l.b16 %v3676
    %v3812 = vunpack.c.l.b16 %v3677
    %v3813 = vunpack.c.l.b16 %v3678
    %v3814 = vunpack.c.l.b16 %v3679
    %v3815 = vunpack.c.l.b16 %v3680
    %v3816 = vunpack.c.l.b16 %v3681
    %v3817 = vunpack.c.l.b16 %v3682
    %v3818 = vunpack.c.l.b16 %v3683
    %v3819 = vunpack.c.l.b16 %v3684
    %v3820 = vunpack.c.l.b16 %v3685
    %v3821 = vunpack.c.l.b16 %v3686
    %v3822 = vunpack.c.l.b16 %v3687
    %v3823 = vunpack.c.l.b16 %v3688
    %v3824 = vunpack.c.l.b16 %v3689
    %v3825 = vunpack.c.l.b16 %v3690
    %v3826 = vunpack.c.l.b16 %v3691
    %v3827 = vunpack.c.l.b16 %v3692
    %v3828 = vunpack.c.l.b16 %v3693
    %v3829 = vunpack.c.l.b16 %v3694
    %v3830 = vunpack.c.l.b16 %v3695
    %v3831 = vunpack.c.l.b16 %v3696
    %v3832 = vunpack.c.l.b16 %v3697
    %v3833 = vunpack.c.l.b16 %v3698
    %v3834 = vunpack.c.l.b16 %v3699
    %v3835 = vunpack.c.l.b16 %v3700
    %v3836 = vunpack.c.l.b16 %v3701
    %v3837 = vunpack.c.l.b16 %v3702
    %v3838 = vunpack.c.l.b16 %v3703
    %v3839 = vunpack.c.l.b16 %v3704
    %v3840 = vunpack.c.l.b16 %v3705
    %v3841 = vunpack.c.l.b16 %v3706
    %v3842 = vunpack.c.l.b16 %v3707
    %v3843 = vunpack.c.l.b16 %v3708
    %v3844 = vunpack.c.l.b16 %v3709
    %v3845 = vunpack.c.l.b16 %v3710
    %v3846 = vunpack.c.l.b16 %v3711
    %v3847 = vunpack.c.l.b16 %v3712
    %v3848 = vunpack.c.l.b16 %v3713
    %v3849 = vunpack.c.l.b16 %v3714
    %v3850 = vunpack.c.l.b16 %v3715
    %v3851 = vunpack.c.l.b16 %v3716
    %v3852 = vunpack.c.l.b16 %v3717
    %v3853 = vunpack.c.l.b16 %v3718
    %v3854 = vunpack.c.l.b16 %v3719
    %v3855 = vunpack.c.l.b16 %v3720
    %v3856 = vunpack.c.l.b16 %v3721
    %v3857 = vunpack.c.l.b16 %v3722
    %v3858 = vunpack.c.l.b16 %v3723
    %v3859 = vunpack.c.l.b16 %v3724
    %v3860 = vunpack.c.l.b16 %v3725
    %v3861 = vunpack.c.l.b16 %v3726
    %v3862 = vunpack.c.l.b16 %v3727
    %v3863 = vunpack.c.l.b16 %v3728
    %v3864 = vunpack.c.l.b16 %v3729
    %v3865 = vunpack.c.l.b16 %v3730
    %v3866 = vpack.c.b16 %v3803, %v3802
    %v3867 = vpack.c.b16 %v3805, %v3804
    %v3868 = vpack.c.b16 %v3807, %v3806
    %v3869 = vpack.c.b16 %v3809, %v3808
    %v3870 = vpack.c.b16 %v3811, %v3810
    %v3871 = vpack.c.b16 %v3813, %v3812
    %v3872 = vpack.c.b16 %v3815, %v3814
    %v3873 = vpack.c.b16 %v3817, %v3816
    %v3874 = vpack.c.b16 %v3819, %v3818
    %v3875 = vpack.c.b16 %v3821, %v3820
    %v3876 = vpack.c.b16 %v3823, %v3822
    %v3877 = vpack.c.b16 %v3825, %v3824
    %v3878 = vpack.c.b16 %v3827, %v3826
    %v3879 = vpack.c.b16 %v3829, %v3828
    %v3880 = vpack.c.b16 %v3831, %v3830
    %v3881 = vpack.c.b16 %v3833, %v3832
    %v3882 = vpack.c.b16 %v3835, %v3834
    %v3883 = vpack.c.b16 %v3837, %v3836
    %v3884 = vpack.c.b16 %v3839, %v3838
    %v3885 = vpack.c.b16 %v3841, %v3840
    %v3886 = vpack.c.b16 %v3843, %v3842
    %v3887 = vpack.c.b16 %v3845, %v3844
    %v3888 = vpack.c.b16 %v3847, %v3846
    %v3889 = vpack.c.b16 %v3849, %v3848
    %v3890 = vpack.c.b16 %v3851, %v3850
    %v3891 = vpack.c.b16 %v3853, %v3852
    %v3892 = vpack.c.b16 %v3855, %v3854
    %v3893 = vpack.c.b16 %v3857, %v3856
    %v3894 = vpack.c.b16 %v3859, %v3858
    %v3895 = vpack.c.b16 %v3861, %v3860
    %v3896 = vpack.c.b16 %v3863, %v3862
    %v3897 = vpack.c.b16 %v3865, %v3864
    %3930 = vmatprep.subr.bf16.mxu0 0
    %3931 = vmatpush1.bf16.msra.mxu0 %v3866
    %3932 = vmatprep.subr.bf16.mxu0 0
    %3933 = vmatpush1.bf16.msra.mxu0 %v3867
    %3934 = vmatprep.subr.bf16.mxu0 0
    %3935 = vmatpush1.bf16.msra.mxu0 %v3868
    %3936 = vmatprep.subr.bf16.mxu0 0
    %3937 = vmatpush1.bf16.msra.mxu0 %v3869
    %3938 = vmatprep.subr.bf16.mxu0 0
    %3939 = vmatpush1.bf16.msra.mxu0 %v3870
    %3940 = vmatprep.subr.bf16.mxu0 0
    %3941 = vmatpush1.bf16.msra.mxu0 %v3871
    %3942 = vmatprep.subr.bf16.mxu0 0
    %3943 = vmatpush1.bf16.msra.mxu0 %v3872
    %3944 = vmatprep.subr.bf16.mxu0 0
    %3945 = vmatpush1.bf16.msra.mxu0 %v3873
    %3946 = vmatprep.subr.bf16.mxu0 0
    %3947 = vmatpush1.bf16.msra.mxu0 %v3874
    %3948 = vmatprep.subr.bf16.mxu0 0
    %3949 = vmatpush1.bf16.msra.mxu0 %v3875
    %3950 = vmatprep.subr.bf16.mxu0 0
    %3951 = vmatpush1.bf16.msra.mxu0 %v3876
    %3952 = vmatprep.subr.bf16.mxu0 0
    %3953 = vmatpush1.bf16.msra.mxu0 %v3877
    %3954 = vmatprep.subr.bf16.mxu0 0
    %3955 = vmatpush1.bf16.msra.mxu0 %v3878
    %3956 = vmatprep.subr.bf16.mxu0 0
    %3957 = vmatpush1.bf16.msra.mxu0 %v3879
    %3958 = vmatprep.subr.bf16.mxu0 0
    %3959 = vmatpush1.bf16.msra.mxu0 %v3880
    %3960 = vmatprep.subr.bf16.mxu0 0
    %3961 = vmatpush1.bf16.msra.mxu0 %v3881
    %3962 = vmatprep.mubr.bf16.mxu0 %v3664
    %3963 = vmatmul.mubr.bf16.gmra.mrb[0].mxu0 %v3663
    %v3964 = vpop.f32.mrb[0].mxu0
    %v3965 = vadd.f32 %v3736, %v3964
    %v3966 = vpop.f32.mrb[0].mxu0
    %v3967 = vpop.f32.mrb[0].mxu0
    %v3968 = vpop.f32.mrb[0].mxu0
    %3969 = vdwg.mxu0
    %3970 = vmatprep.subr.bf16.mxu0 0
    %3971 = vmatpush1.bf16.msra.mxu0 %v3882
    %3972 = vmatprep.subr.bf16.mxu0 0
    %3973 = vmatpush1.bf16.msra.mxu0 %v3883
    %3974 = vmatprep.subr.bf16.mxu0 0
    %3975 = vmatpush1.bf16.msra.mxu0 %v3884
    %3976 = vmatprep.subr.bf16.mxu0 0
    %3977 = vmatpush1.bf16.msra.mxu0 %v3885
    %3978 = vmatprep.subr.bf16.mxu0 0
    %3979 = vmatpush1.bf16.msra.mxu0 %v3886
    %3980 = vmatprep.subr.bf16.mxu0 0
    %3981 = vmatpush1.bf16.msra.mxu0 %v3887
    %3982 = vmatprep.subr.bf16.mxu0 0
    %3983 = vmatpush1.bf16.msra.mxu0 %v3888
    %3984 = vmatprep.subr.bf16.mxu0 0
    %3985 = vmatpush1.bf16.msra.mxu0 %v3889
    %3986 = vmatprep.subr.bf16.mxu0 0
    %3987 = vmatpush1.bf16.msra.mxu0 %v3890
    %3988 = vmatprep.subr.bf16.mxu0 0
    %3989 = vmatpush1.bf16.msra.mxu0 %v3891
    %3990 = vmatprep.subr.bf16.mxu0 0
    %3991 = vmatpush1.bf16.msra.mxu0 %v3892
    %3992 = vmatprep.subr.bf16.mxu0 0
    %3993 = vmatpush1.bf16.msra.mxu0 %v3893
    %3994 = vmatprep.subr.bf16.mxu0 0
    %3995 = vmatpush1.bf16.msra.mxu0 %v3894
    %3996 = vmatprep.subr.bf16.mxu0 0
    %3997 = vmatpush1.bf16.msra.mxu0 %v3895
    %3998 = vmatprep.subr.bf16.mxu0 0
    %3999 = vmatpush1.bf16.msra.mxu0 %v3896
    %4000 = vmatprep.subr.bf16.mxu0 0
    %4001 = vmatpush1.bf16.msra.mxu0 %v3897
    %4002 = vmatprep.mubr.bf16.mxu0 %v3666
    %4003 = vmatmul.mubr.bf16.gmra.mrb[0].mxu0 %v3665
    %v4004 = vpop.f32.mrb[0].mxu0
    %v4005 = vadd.f32 %v3965, %v4004
    %v4006 = vpop.f32.mrb[0].mxu0
    %v4007 = vpop.f32.mrb[0].mxu0
    %v4008 = vpop.f32.mrb[0].mxu0
    %4009 = vdwg.mxu0
    %v4010 = vtanh.pop %v4005
    %4011 = vst.msk [vmem:[#allocation8] sm:$0xff] %vm448, %v4010
    // Predicated region
    $region74: #{modifier_forward.1} parent=1 // pred_check
      _
    $region75: #{modifier_forward.1} parent=1 // pred_check_branch
      %4013 = sbr.rel (0) target = $region77
    $region76: #{modifier_forward.1} parent=1 // pred_region
      %s4015 = ssub.s32 128, 128
      %4016 = vsyncadd [#allocation4], %s4015
      %s4018 = sshll.u32 [#allocation8], 4
      %s4019 = int_to_ptr.vmem [resolvable:$true] %s4018
      %4021 = dma.vmem_to_hbm [thread:$0]  %s4019, 128, %s15, [#allocation4]
    $region77: #{modifier_forward.1} parent=1 // pred_fallthru
      _
    // Predicated region
    $region78: #{modifier_forward.1} parent=1 // pred_check
      _
    $region79: #{modifier_forward.1} parent=1 // pred_check_branch
      %4023 = sbr.rel (0) target = $region81
    $region80: #{modifier_forward.1} parent=1 // pred_region
      %4024 = dma.done [#allocation4], 128
    $region81: #{modifier_forward.1} parent=1 // pred_fallthru
      _
    %4025 = vsyncpa [#allocation3], 1
    %4026 = vsyncpa [#allocation6], 1
    %4027 = vsyncpa [#allocation4], 1

</llo_original>
